<compile_context>
chip_gen: v6e
topology: v6e:2x2x1
jax: 0.10.0
libtpu: 0.0.40
codegen_flags: <defaults>
</compile_context>

<pallas_src>
from functools import partial

import jax
import jax.numpy as jnp
from jax import lax
from jax.experimental import pallas as pl
from jax.experimental.pallas import tpu as pltpu

EPS = 1e-5                      # nn.BatchNorm2d default eps
LEFT = 8                        # left spatial pad -> sublane-aligned interior
VMEM_LIMIT = 16 * 1024 * 1024   # per-step footprint is <0.5 MiB; ample margin


def _round_up(x, m):
    return (x + m - 1) // m * m


def _compiler_params():
    return pltpu.CompilerParams(
        dimension_semantics=("parallel",),       # shard batch across TCs (v7x)
        vmem_limit_bytes=VMEM_LIMIT)


# ---------------------------------------------------------------------------
# kernel A: (optional fused BN+ReLU of input) -> 3x3 conv (K-packed im2col
#           matmul) -> per-image centered BN partial statistics
# ---------------------------------------------------------------------------
def conv_block_kernel(x_ref, w_ref, scale_ref, shift_ref,
                      y_ref, sum_ref, m2_ref,
                      *, H, W, Wp, Cin, Cout, apply_input_bn, interior_output):
    # x_ref   : (1, H+2, Wp, Cin)  spatially pre-padded (zero halo), C unpadded
    # w_ref   : (9*Cin, Cout)      taps flattened (ky, kx, ci) row-major
    # scale/shift : (1, Cin)       folded BN affine of the previous block
    # y_ref   : (1, H+2, Wp, Cout) padded layout (interior_output=False) or
    #           (1, H, W, Cout)    interior-only layout (interior_output=True)
    # sum/m2  : (1, 1, Cout)       per-image sum / centered sum-of-squares
    Hp2 = H + 2
    x = x_ref[0]                                        # (H+2, Wp, Cin)

    if apply_input_bn:
        # Fuse the previous block's BN + ReLU into this conv's prologue.
        # The halo must stay exactly zero (conv "same" padding), so mask it.
        scale = scale_ref[...].reshape(1, 1, Cin)
        shift = shift_ref[...].reshape(1, 1, Cin)
        row = lax.broadcasted_iota(jnp.int32, (Hp2, Wp, 1), 0)
        col = lax.broadcasted_iota(jnp.int32, (Hp2, Wp, 1), 1)
        interior = (row >= 1) & (row <= H) & (col >= LEFT) & (col < LEFT + W)
        x = jnp.where(interior, jnp.maximum(x * scale + shift, 0.0), 0.0)

    # im2col with the taps packed into the contraction axis (K = 9*Cin):
    # the three width-shifted views are built once (only dx=0,2 are
    # sublane-misaligned copies); the per-dy slices are untiled-dim slices.
    xw = [x[:, LEFT - 1 + dx:LEFT - 1 + dx + W, :] for dx in range(3)]
    taps = [xw[dx][dy:dy + H] for dy in range(3) for dx in range(3)]
    lhs = jnp.concatenate(taps, axis=-1).reshape(H * W, 9 * Cin)

    acc = jnp.dot(lhs, w_ref[...],
                  preferred_element_type=jnp.float32,
                  precision=lax.Precision.HIGHEST)       # (H*W, Cout) f32

    # per-image BN partials while the conv output is still in registers:
    # sum and *centered* sum-of-squares (robust Welford combine in XLA).
    s = jnp.sum(acc, axis=0, keepdims=True)              # (1, Cout)
    sum_ref[0] = s
    mean_i = s * (1.0 / (H * W))
    m2_ref[0] = jnp.sum((acc - mean_i) ** 2, axis=0, keepdims=True)

    if interior_output:
        y_ref[0] = acc.reshape(H, W, Cout)
    else:
        # sublane-aligned interior store; only the halo strips are zeroed.
        y_ref[0, 1:H + 1, LEFT:LEFT + W, :] = acc.reshape(H, W, Cout)
        zero_row = jnp.zeros((Wp, Cout), jnp.float32)
        y_ref[0, 0, :, :] = zero_row
        y_ref[0, H + 1, :, :] = zero_row
        y_ref[0, 1:H + 1, 0:LEFT, :] = jnp.zeros((H, LEFT, Cout), jnp.float32)
        if Wp > LEFT + W:
            y_ref[0, 1:H + 1, LEFT + W:Wp, :] = jnp.zeros(
                (H, Wp - LEFT - W, Cout), jnp.float32)


# ---------------------------------------------------------------------------
# kernel B: BN (precomputed scale/shift) + ReLU on the interior-layout tensor
# ---------------------------------------------------------------------------
def bn_relu_kernel(y_ref, scale_ref, shift_ref, out_ref, *, Cout):
    y = y_ref[0]                                         # (H, W, Cout)
    scale = scale_ref[...].reshape(1, 1, Cout)
    shift = shift_ref[...].reshape(1, 1, Cout)
    out_ref[0] = jnp.maximum(y * scale + shift, 0.0)


# ---------------------------------------------------------------------------
# pallas_call wrappers
# ---------------------------------------------------------------------------
def _conv_block_call(x_pad, w_mat, scale, shift, H, W, *,
                     apply_input_bn, interior_output):
    N, Hp2, Wp, Cin = x_pad.shape
    K, Cout = w_mat.shape
    kernel = partial(conv_block_kernel, H=H, W=W, Wp=Wp, Cin=Cin, Cout=Cout,
                     apply_input_bn=apply_input_bn,
                     interior_output=interior_output)
    if interior_output:
        y_shape = (N, H, W, Cout)
        y_spec = pl.BlockSpec((1, H, W, Cout), lambda n: (n, 0, 0, 0))
    else:
        y_shape = (N, Hp2, Wp, Cout)
        y_spec = pl.BlockSpec((1, Hp2, Wp, Cout), lambda n: (n, 0, 0, 0))
    return pl.pallas_call(
        kernel,
        grid=(N,),
        in_specs=[
            pl.BlockSpec((1, Hp2, Wp, Cin), lambda n: (n, 0, 0, 0)),
            pl.BlockSpec((K, Cout), lambda n: (0, 0)),
            pl.BlockSpec((1, Cin), lambda n: (0, 0)),
            pl.BlockSpec((1, Cin), lambda n: (0, 0)),
        ],
        out_specs=(
            y_spec,
            pl.BlockSpec((1, 1, Cout), lambda n: (n, 0, 0)),
            pl.BlockSpec((1, 1, Cout), lambda n: (n, 0, 0)),
        ),
        out_shape=(
            jax.ShapeDtypeStruct(y_shape, jnp.float32),
            jax.ShapeDtypeStruct((N, 1, Cout), jnp.float32),
            jax.ShapeDtypeStruct((N, 1, Cout), jnp.float32),
        ),
        compiler_params=_compiler_params(),
    )(x_pad, w_mat, scale, shift)


def _bn_relu_call(y2, scale, shift):
    N, H, W, Cout = y2.shape
    return pl.pallas_call(
        partial(bn_relu_kernel, Cout=Cout),
        grid=(N,),
        in_specs=[
            pl.BlockSpec((1, H, W, Cout), lambda n: (n, 0, 0, 0)),
            pl.BlockSpec((1, Cout), lambda n: (0, 0)),
            pl.BlockSpec((1, Cout), lambda n: (0, 0)),
        ],
        out_specs=pl.BlockSpec((1, H, W, Cout), lambda n: (n, 0, 0, 0)),
        out_shape=jax.ShapeDtypeStruct((N, H, W, Cout), jnp.float32),
        compiler_params=_compiler_params(),
    )(y2, scale, shift)


def _fold_bn(s, m2, gamma, beta, npix):
    """Per-image (sum, centered sumsq) -> folded BN (scale, shift).

    Welford-style chunk combine: total M2 = sum_i M2_i + n*(m_i - mean)^2.
    """
    N = s.shape[0]
    count = N * npix
    s = s[:, 0, :]                                       # (N, C)
    m2 = m2[:, 0, :]
    mean_i = s / npix
    mean = jnp.sum(s, axis=0) / count                    # (C,)
    m2_tot = jnp.sum(m2, axis=0) + npix * jnp.sum(
        (mean_i - mean[None, :]) ** 2, axis=0)
    var = jnp.maximum(m2_tot / count, 0.0)               # biased (train mode)
    inv = lax.rsqrt(var + EPS)
    scale = gamma * inv
    shift = beta - mean * scale
    C = scale.shape[0]
    return scale.reshape(1, C), shift.reshape(1, C)


def double_conv(x_nchw, w1, g1, b1, w2, g2, b2):
    """x_nchw: (N, Cin, H, W) float32.  Returns (N, Cout, H, W)."""
    N, Cin, H, W = x_nchw.shape
    Cout = w1.shape[-1]
    Wp = _round_up(LEFT + W + 1, 8)          # padded width, multiple of 8

    # NCHW -> NHWC + spatial halo (channels stay unpadded; for Cin/Cout << 128
    # padding them to 128 would multiply HBM traffic and MXU K-work by ~16-32x)
    x = jnp.transpose(x_nchw, (0, 2, 3, 1)).astype(jnp.float32)
    x_pad = jnp.pad(x, ((0, 0), (1, 1), (LEFT, Wp - LEFT - W), (0, 0)))

    # HWIO weights flattened to the im2col contraction layout (9*Cin, Cout).
    w1_mat = w1.astype(jnp.float32).reshape(9 * Cin, Cout)
    w2_mat = w2.astype(jnp.float32).reshape(9 * Cout, Cout)
    g1 = g1.astype(jnp.float32); b1 = b1.astype(jnp.float32)
    g2 = g2.astype(jnp.float32); b2 = b2.astype(jnp.float32)

    npix = float(H * W)
    ones = jnp.ones((1, Cin), jnp.float32)       # dummies for call 1
    zeros = jnp.zeros((1, Cin), jnp.float32)

    # block 1: conv1 + batch statistics (padded output layout so conv2 can
    # consume the zero halo directly)
    y1, s1, m21 = _conv_block_call(x_pad, w1_mat, ones, zeros, H, W,
                                   apply_input_bn=False, interior_output=False)
    scale1, shift1 = _fold_bn(s1, m21, g1, b1, npix)

    # block 2: bn1 + relu fused into conv2's prologue, conv2 + statistics
    # (interior-only output layout: only bn_relu consumes it)
    y2, s2, m22 = _conv_block_call(y1, w2_mat, scale1, shift1, H, W,
                                   apply_input_bn=True, interior_output=True)
    scale2, shift2 = _fold_bn(s2, m22, g2, b2, npix)

    # block 2 epilogue: bn2 + relu (writes only the real Cout lanes)
    out_nhwc = _bn_relu_call(y2, scale2, shift2)

    # back to the module's NCHW interface
    return jnp.transpose(out_nhwc, (0, 3, 1, 2))


# ---------------------------------------------------------------------------
# pure-JAX reference (PyTorch training-mode forward)
# ---------------------------------------------------------------------------
def ref_double_conv(x_nchw, w1, g1, b1, w2, g2, b2):
    def conv(x, w):
        return lax.conv_general_dilated(
            x, w, window_strides=(1, 1), padding=((1, 1), (1, 1)),
            dimension_numbers=('NCHW', 'HWIO', 'NCHW'),
            precision=lax.Precision.HIGHEST)

    def bn_relu(y, g, b):
        mean = jnp.mean(y, axis=(0, 2, 3), keepdims=True)
        var = jnp.mean((y - mean) ** 2, axis=(0, 2, 3), keepdims=True)
        yn = (y - mean) * lax.rsqrt(var + EPS)
        return jnp.maximum(yn * g.reshape(1, -1, 1, 1) + b.reshape(1, -1, 1, 1),
                           0.0)

    y = bn_relu(conv(x_nchw, w1), g1, b1)
    y = bn_relu(conv(y, w2), g2, b2)
    return y


if __name__ == "__main__":
    N, Cin, Cout, H, W = 2, 4, 8, 16, 16

    key = jax.random.PRNGKey(0)
    kx, kw1, kw2, kg1, kg2, kb1, kb2 = jax.random.split(key, 7)

    x = jax.random.normal(kx, (N, Cin, H, W), jnp.float32)

    # Conv weights (HWIO), no bias — deterministic synthetic init.
    w1 = jax.random.normal(kw1, (3, 3, Cin, Cout), jnp.float32) * 0.1
    w2 = jax.random.normal(kw2, (3, 3, Cout, Cout), jnp.float32) * 0.1
    # BatchNorm affine params (perturbed so they actually matter).
    g1 = 1.0 + 0.1 * jax.random.normal(kg1, (Cout,), jnp.float32)
    g2 = 1.0 + 0.1 * jax.random.normal(kg2, (Cout,), jnp.float32)
    b1 = 0.1 * jax.random.normal(kb1, (Cout,), jnp.float32)
    b2 = 0.1 * jax.random.normal(kb2, (Cout,), jnp.float32)

    out = jax.block_until_ready(double_conv(x, w1, g1, b1, w2, g2, b2))
    ref = jax.block_until_ready(ref_double_conv(x, w1, g1, b1, w2, g2, b2))

    assert out.shape == (N, Cout, H, W), out.shape
    assert jnp.allclose(out, ref, atol=1e-4, rtol=1e-4), \
        f"max abs err = {jnp.max(jnp.abs(out - ref))}"

    print("KERNEL_OK")
</pallas_src>

<mosaic_0001>
module attributes {stable_mosaic.version = 11 : i64} {
  func.func @conv_block_kernel(%arg0: i32, %arg1: memref<1x18x32x4xf32, #tpu.memory_space<vmem>>, %arg2: memref<36x8xf32, #tpu.memory_space<vmem>>, %arg3: memref<1x4xf32, #tpu.memory_space<vmem>>, %arg4: memref<1x4xf32, #tpu.memory_space<vmem>>, %arg5: memref<1x18x32x8xf32, #tpu.memory_space<vmem>>, %arg6: memref<1x1x8xf32, #tpu.memory_space<vmem>>, %arg7: memref<1x1x8xf32, #tpu.memory_space<vmem>>) attributes {dimension_semantics = [#tpu.dimension_semantics<parallel>], iteration_bounds = array<i64: 2>, scalar_prefetch = 0 : i64, scratch_operands = 0 : i64, tpu.core_type = #tpu.core_type<tc>, window_params = [{transform_indices = @transform_0, window_bounds = array<i64: 1, 18, 32, 4>}, {pipeline_mode = #tpu.pipeline_mode<synchronous>, transform_indices = @transform_1, window_bounds = array<i64: 36, 8>}, {pipeline_mode = #tpu.pipeline_mode<synchronous>, transform_indices = @transform_2, window_bounds = array<i64: 1, 4>}, {pipeline_mode = #tpu.pipeline_mode<synchronous>, transform_indices = @transform_3, window_bounds = array<i64: 1, 4>}, {transform_indices = @transform_4, window_bounds = array<i64: 1, 18, 32, 8>}, {transform_indices = @transform_5, window_bounds = array<i64: 1, 1, 8>}, {transform_indices = @transform_6, window_bounds = array<i64: 1, 1, 8>}]} {
    %c0 = arith.constant 0 : index
    %c0_0 = arith.constant 0 : index
    %c0_1 = arith.constant 0 : index
    %c0_2 = arith.constant 0 : index
    %0 = vector.load %arg1[%c0, %c0_0, %c0_1, %c0_2] : memref<1x18x32x4xf32, #tpu.memory_space<vmem>>, vector<1x18x32x4xf32>
    %1 = vector.shape_cast %0 : vector<1x18x32x4xf32> to vector<18x32x4xf32>
    %2 = vector.extract_strided_slice %1 {offsets = [0, 7, 0], sizes = [18, 16, 4], strides = [1, 1, 1]} : vector<18x32x4xf32> to vector<18x16x4xf32>
    %3 = vector.extract_strided_slice %1 {offsets = [0, 8, 0], sizes = [18, 16, 4], strides = [1, 1, 1]} : vector<18x32x4xf32> to vector<18x16x4xf32>
    %4 = vector.extract_strided_slice %1 {offsets = [0, 9, 0], sizes = [18, 16, 4], strides = [1, 1, 1]} : vector<18x32x4xf32> to vector<18x16x4xf32>
    %5 = vector.extract_strided_slice %2 {offsets = [0, 0, 0], sizes = [16, 16, 4], strides = [1, 1, 1]} : vector<18x16x4xf32> to vector<16x16x4xf32>
    %6 = vector.extract_strided_slice %3 {offsets = [0, 0, 0], sizes = [16, 16, 4], strides = [1, 1, 1]} : vector<18x16x4xf32> to vector<16x16x4xf32>
    %7 = vector.extract_strided_slice %4 {offsets = [0, 0, 0], sizes = [16, 16, 4], strides = [1, 1, 1]} : vector<18x16x4xf32> to vector<16x16x4xf32>
    %8 = vector.extract_strided_slice %2 {offsets = [1, 0, 0], sizes = [16, 16, 4], strides = [1, 1, 1]} : vector<18x16x4xf32> to vector<16x16x4xf32>
    %9 = vector.extract_strided_slice %3 {offsets = [1, 0, 0], sizes = [16, 16, 4], strides = [1, 1, 1]} : vector<18x16x4xf32> to vector<16x16x4xf32>
    %10 = vector.extract_strided_slice %4 {offsets = [1, 0, 0], sizes = [16, 16, 4], strides = [1, 1, 1]} : vector<18x16x4xf32> to vector<16x16x4xf32>
    %11 = vector.extract_strided_slice %2 {offsets = [2, 0, 0], sizes = [16, 16, 4], strides = [1, 1, 1]} : vector<18x16x4xf32> to vector<16x16x4xf32>
    %12 = vector.extract_strided_slice %3 {offsets = [2, 0, 0], sizes = [16, 16, 4], strides = [1, 1, 1]} : vector<18x16x4xf32> to vector<16x16x4xf32>
    %13 = vector.extract_strided_slice %4 {offsets = [2, 0, 0], sizes = [16, 16, 4], strides = [1, 1, 1]} : vector<18x16x4xf32> to vector<16x16x4xf32>
    %14 = tpu.concatenate %5, %6, %7, %8, %9, %10, %11, %12, %13 in 2 : vector<16x16x4xf32>, vector<16x16x4xf32>, vector<16x16x4xf32>, vector<16x16x4xf32>, vector<16x16x4xf32>, vector<16x16x4xf32>, vector<16x16x4xf32>, vector<16x16x4xf32>, vector<16x16x4xf32> -> vector<16x16x36xf32>
    %15 = vector.shape_cast %14 : vector<16x16x36xf32> to vector<256x36xf32>
    %c0_3 = arith.constant 0 : index
    %c0_4 = arith.constant 0 : index
    %16 = vector.load %arg2[%c0_3, %c0_4] : memref<36x8xf32, #tpu.memory_space<vmem>>, vector<36x8xf32>
    %cst = arith.constant dense<0.000000e+00> : vector<256x8xf32>
    %17 = tpu.matmul %15, %16, %cst {dimension_numbers = #tpu.dot_dimension_numbers<[1], [0], [0], [1], [0, 0, 1, 1], [], []>, precision = #tpu.contract_precision<fp32>} : vector<256x36xf32>, vector<36x8xf32>, vector<256x8xf32> -> vector<256x8xf32>
    %cst_5 = arith.constant dense<0.000000e+00> : vector<8xf32>
    %18 = vector.multi_reduction <add>, %17, %cst_5 [0] : vector<256x8xf32> to vector<8xf32>
    %19 = vector.shape_cast %18 : vector<8xf32> to vector<1x8xf32>
    %c0_6 = arith.constant 0 : index
    %c0_7 = arith.constant 0 : index
    %c0_8 = arith.constant 0 : index
    %20 = vector.load %arg6[%c0_6, %c0_7, %c0_8] : memref<1x1x8xf32, #tpu.memory_space<vmem>>, vector<1x1x8xf32>
    %21 = vector.shape_cast %20 : vector<1x1x8xf32> to vector<1x8xf32>
    %22 = vector.shape_cast %19 : vector<1x8xf32> to vector<1x1x8xf32>
    tpu.vector_store %arg6[%c0_6, %c0_7, %c0_8], %22 {strides = array<i32>} : memref<1x1x8xf32, #tpu.memory_space<vmem>>, vector<1x1x8xf32>,
    %cst_9 = arith.constant 3.906250e-03 : f32
    %23 = vector.broadcast %cst_9 : f32 to vector<1x8xf32>
    %24 = arith.mulf %19, %23 : vector<1x8xf32>
    %25 = vector.broadcast %24 : vector<1x8xf32> to vector<256x8xf32>
    %26 = arith.subf %17, %25 : vector<256x8xf32>
    %27 = arith.mulf %26, %26 : vector<256x8xf32>
    %cst_10 = arith.constant dense<0.000000e+00> : vector<8xf32>
    %28 = vector.multi_reduction <add>, %27, %cst_10 [0] : vector<256x8xf32> to vector<8xf32>
    %29 = vector.shape_cast %28 : vector<8xf32> to vector<1x8xf32>
    %c0_11 = arith.constant 0 : index
    %c0_12 = arith.constant 0 : index
    %c0_13 = arith.constant 0 : index
    %30 = vector.load %arg7[%c0_11, %c0_12, %c0_13] : memref<1x1x8xf32, #tpu.memory_space<vmem>>, vector<1x1x8xf32>
    %31 = vector.shape_cast %30 : vector<1x1x8xf32> to vector<1x8xf32>
    %32 = vector.shape_cast %29 : vector<1x8xf32> to vector<1x1x8xf32>
    tpu.vector_store %arg7[%c0_11, %c0_12, %c0_13], %32 {strides = array<i32>} : memref<1x1x8xf32, #tpu.memory_space<vmem>>, vector<1x1x8xf32>,
    %33 = vector.shape_cast %17 : vector<256x8xf32> to vector<16x16x8xf32>
    %c0_14 = arith.constant 0 : index
    %c1 = arith.constant 1 : index
    %c8 = arith.constant 8 : index
    %c0_15 = arith.constant 0 : index
    %34 = vector.load %arg5[%c0_14, %c1, %c8, %c0_15] : memref<1x18x32x8xf32, #tpu.memory_space<vmem>>, vector<1x16x16x8xf32>
    %35 = vector.shape_cast %34 : vector<1x16x16x8xf32> to vector<16x16x8xf32>
    %36 = vector.shape_cast %33 : vector<16x16x8xf32> to vector<1x16x16x8xf32>
    tpu.vector_store %arg5[%c0_14, %c1, %c8, %c0_15], %36 {strides = array<i32>} : memref<1x18x32x8xf32, #tpu.memory_space<vmem>>, vector<1x16x16x8xf32>,
    %cst_16 = arith.constant 0.000000e+00 : f32
    %37 = vector.broadcast %cst_16 : f32 to vector<32x8xf32>
    %c0_17 = arith.constant 0 : index
    %c0_18 = arith.constant 0 : index
    %c0_19 = arith.constant 0 : index
    %c0_20 = arith.constant 0 : index
    %38 = vector.load %arg5[%c0_17, %c0_18, %c0_19, %c0_20] : memref<1x18x32x8xf32, #tpu.memory_space<vmem>>, vector<1x1x32x8xf32>
    %39 = vector.shape_cast %38 : vector<1x1x32x8xf32> to vector<32x8xf32>
    %40 = vector.shape_cast %37 : vector<32x8xf32> to vector<1x1x32x8xf32>
    tpu.vector_store %arg5[%c0_17, %c0_18, %c0_19, %c0_20], %40 {strides = array<i32>} : memref<1x18x32x8xf32, #tpu.memory_space<vmem>>, vector<1x1x32x8xf32>,
    %c0_21 = arith.constant 0 : index
    %c17 = arith.constant 17 : index
    %c0_22 = arith.constant 0 : index
    %c0_23 = arith.constant 0 : index
    %41 = vector.load %arg5[%c0_21, %c17, %c0_22, %c0_23] : memref<1x18x32x8xf32, #tpu.memory_space<vmem>>, vector<1x1x32x8xf32>
    %42 = vector.shape_cast %41 : vector<1x1x32x8xf32> to vector<32x8xf32>
    %43 = vector.shape_cast %37 : vector<32x8xf32> to vector<1x1x32x8xf32>
    tpu.vector_store %arg5[%c0_21, %c17, %c0_22, %c0_23], %43 {strides = array<i32>} : memref<1x18x32x8xf32, #tpu.memory_space<vmem>>, vector<1x1x32x8xf32>,
    %cst_24 = arith.constant 0.000000e+00 : f32
    %44 = vector.broadcast %cst_24 : f32 to vector<16x8x8xf32>
    %c0_25 = arith.constant 0 : index
    %c1_26 = arith.constant 1 : index
    %c0_27 = arith.constant 0 : index
    %c0_28 = arith.constant 0 : index
    %45 = vector.load %arg5[%c0_25, %c1_26, %c0_27, %c0_28] : memref<1x18x32x8xf32, #tpu.memory_space<vmem>>, vector<1x16x8x8xf32>
    %46 = vector.shape_cast %45 : vector<1x16x8x8xf32> to vector<16x8x8xf32>
    %47 = vector.shape_cast %44 : vector<16x8x8xf32> to vector<1x16x8x8xf32>
    tpu.vector_store %arg5[%c0_25, %c1_26, %c0_27, %c0_28], %47 {strides = array<i32>} : memref<1x18x32x8xf32, #tpu.memory_space<vmem>>, vector<1x16x8x8xf32>,
    %cst_29 = arith.constant 0.000000e+00 : f32
    %48 = vector.broadcast %cst_29 : f32 to vector<16x8x8xf32>
    %c0_30 = arith.constant 0 : index
    %c1_31 = arith.constant 1 : index
    %c24 = arith.constant 24 : index
    %c0_32 = arith.constant 0 : index
    %49 = vector.load %arg5[%c0_30, %c1_31, %c24, %c0_32] : memref<1x18x32x8xf32, #tpu.memory_space<vmem>>, vector<1x16x8x8xf32>
    %50 = vector.shape_cast %49 : vector<1x16x8x8xf32> to vector<16x8x8xf32>
    %51 = vector.shape_cast %48 : vector<16x8x8xf32> to vector<1x16x8x8xf32>
    tpu.vector_store %arg5[%c0_30, %c1_31, %c24, %c0_32], %51 {strides = array<i32>} : memref<1x18x32x8xf32, #tpu.memory_space<vmem>>, vector<1x16x8x8xf32>,
    return
  }
  func.func @transform_0(%arg0: i32) -> (i32, i32, i32, i32) {
    %c0_i32 = arith.constant 0 : i32
    %c0_i32_0 = arith.constant 0 : i32
    %c0_i32_1 = arith.constant 0 : i32
    %c0_i32_2 = arith.constant 0 : i32
    return %arg0, %c0_i32, %c0_i32_0, %c0_i32_1 : i32, i32, i32, i32
  }
  func.func @transform_1(%arg0: i32) -> (i32, i32) {
    %c0_i32 = arith.constant 0 : i32
    %c0_i32_0 = arith.constant 0 : i32
    %c0_i32_1 = arith.constant 0 : i32
    return %c0_i32, %c0_i32_0 : i32, i32
  }
  func.func @transform_2(%arg0: i32) -> (i32, i32) {
    %c0_i32 = arith.constant 0 : i32
    %c0_i32_0 = arith.constant 0 : i32
    %c0_i32_1 = arith.constant 0 : i32
    return %c0_i32, %c0_i32_0 : i32, i32
  }
  func.func @transform_3(%arg0: i32) -> (i32, i32) {
    %c0_i32 = arith.constant 0 : i32
    %c0_i32_0 = arith.constant 0 : i32
    %c0_i32_1 = arith.constant 0 : i32
    return %c0_i32, %c0_i32_0 : i32, i32
  }
  func.func @transform_4(%arg0: i32) -> (i32, i32, i32, i32) {
    %c0_i32 = arith.constant 0 : i32
    %c0_i32_0 = arith.constant 0 : i32
    %c0_i32_1 = arith.constant 0 : i32
    %c0_i32_2 = arith.constant 0 : i32
    return %arg0, %c0_i32, %c0_i32_0, %c0_i32_1 : i32, i32, i32, i32
  }
  func.func @transform_5(%arg0: i32) -> (i32, i32, i32) {
    %c0_i32 = arith.constant 0 : i32
    %c0_i32_0 = arith.constant 0 : i32
    %c0_i32_1 = arith.constant 0 : i32
    return %arg0, %c0_i32, %c0_i32_0 : i32, i32, i32
  }
  func.func @transform_6(%arg0: i32) -> (i32, i32, i32) {
    %c0_i32 = arith.constant 0 : i32
    %c0_i32_0 = arith.constant 0 : i32
    %c0_i32_1 = arith.constant 0 : i32
    return %arg0, %c0_i32, %c0_i32_0 : i32, i32, i32
  }
}

</mosaic_0001>

<llo_original>
// kernel: tpu_custom_call.1
$region0: #{tpu_custom_call.1}
  #allocation0 [shape = 'u32[]', space=smem, size = 0x4, offset = 0x4, fixed_abs, tag = 'smem constant byte address 0x4 - core index']
  #allocation1 [shape = 'u32[144,128]{1,0:T(1,128)}', space=vmem, size = 0x12000, scoped, tag = 'internal scratch']
  %s0 = inlined_call_operand.vmem [shape: f32[2,18,32,4], index: 0, kind: input, shape index: {}]
  %s1 = inlined_call_operand.vmem [shape: f32[36,8], index: 1, kind: input, shape index: {}]
  %s2 = inlined_call_operand.vmem [shape: f32[1,4], index: 2, kind: input, shape index: {}]
  %s3 = inlined_call_operand.vmem [shape: f32[1,4], index: 3, kind: input, shape index: {}]
  %s4 = inlined_call_operand.vmem [shape: f32[2,18,32,8], index: 4, kind: output, shape index: {0}]
  %s5 = inlined_call_operand.hbm [shape: f32[2,1,8], index: 5, kind: output, shape index: {1}]
  %s6 = inlined_call_operand.hbm [shape: f32[2,1,8], index: 6, kind: output, shape index: {2}]
  %7 = xla_tuple %s4, %s5, %s6
  %s8 = sld [smem:[#allocation0]]
  $region65: #{tpu_custom_call.1} parent=0
    _
  %s10 = ssub.s32 1, %s8
  %s11 = scalar_select 0, %s10, %s8
  $region1: #{tpu_custom_call.1} parent=0
    #allocation2 [shape = 'u8[1024]{0}', space=vmem, size = 0x400, scoped, tag = 'output window, operand 1']
    #allocation3 [shape = 's32[2]{0}', space=sflag, size = 0x8, scoped, tag = 'scoped memory for tpu_custom_call.1']
    #allocation4 [shape = 'u8[1024]{0}', space=vmem, size = 0x400, scoped, tag = 'output window, operand 2']
    #allocation5 [shape = 's32[2]{0}', space=sflag, size = 0x8, scoped, tag = 'scoped memory for tpu_custom_call.1']
    %12 = vsyncpa [#allocation3], 0
    %s13 = scalar_lea.sflag [#allocation3], 1
    %14 = vsyncpa %s13, 0
    %15 = vsyncpa [#allocation5], 0
    %s16 = scalar_lea.sflag [#allocation5], 1
    %17 = vsyncpa %s16, 0
    loop: start=0, step=1, limit=4
    $region2: #{tpu_custom_call.1} parent=1 // loop_pre_header
      _
    $region3: #{tpu_custom_call.1} parent=1 // loop_header
      %s19 = sphi 0, %s23
      %p20 = scmp.ge.s32.totalorder %s19, 4
      %s29 = sphi 0, %s31
      %s32 = sphi 0, %s29
      %s33 = sphi 0, %s32
      %s49 = sphi 0, %s33
      %s53 = sphi 0, %s53
      %s55 = sphi 0, %s53
      %s56 = sphi 0, %s55
      %s70 = sphi 0, %s56
      %s74 = sphi 0, %s74
      %s76 = sphi 0, %s74
      %s77 = sphi 0, %s76
      %s91 = sphi 0, %s77
      %s95 = sphi 0, %s95
      %s97 = sphi 0, %s95
      %s98 = sphi 0, %s97
      %s112 = sphi 0, %s98
      %s118 = sphi 0, %s120
      %s121 = sphi 0, %s118
      %s122 = sphi 0, %s121
      %s138 = sphi 0, %s122
      %s144 = sphi 0, %s146
      %s147 = sphi 0, %s144
      %s148 = sphi 0, %s147
      %s164 = sphi 0, %s148
      %s170 = sphi 0, %s172
      %s173 = sphi 0, %s170
      %s174 = sphi 0, %s173
      %s190 = sphi 0, %s174
    $region4: #{tpu_custom_call.1} parent=1 // loop_header_branch
      %22 = sbr.rel (%p20) target = $region8
    $region5: #{tpu_custom_call.1} parent=1 // loop_body
      %s24 = ssub.s32 %s19, 1
      %s25 = ssub.s32 %s19, 2
      %s26 = sadd.s32 %s19, 1
      %s27 = ssub.s32 %s19, %s26
      %p28 = scmp.eq.s32.totalorder %s27, 0
      %s30 = sadd.s32 %s29, 1
      %s31 = scalar_select %p28, %s29, %s30
      %p34 = pneg %p28
      %p35 = scmp.eq.s32.totalorder %s19, 1
      %p36 = por %p34, %p35
      %p37 = scmp.ne.s32.totalorder %s29, %s32
      %p38 = scmp.eq.s32.totalorder %s19, 0
      %p39 = por %p37, %p38
      %p40 = scmp.ne.s32.totalorder %s29, %s32
      %p41 = scmp.eq.s32.totalorder %s24, 1
      %p42 = por %p40, %p41
      %p43 = scmp.ne.s32.totalorder %s32, %s33
      %p44 = scmp.eq.s32.totalorder %s24, 0
      %p45 = por %p43, %p44
      %p46 = scmp.ne.s32.totalorder %s32, %s33
      %p47 = scmp.eq.s32.totalorder %s25, 1
      %p48 = por %p46, %p47
      %p50 = scmp.ne.s32.totalorder %s33, %s49
      %p51 = scmp.eq.s32.totalorder %s25, 0
      %p52 = por %p50, %p51
      %s54 = sadd.s32 %s53, 1
      %p57 = scmp.eq.s32.totalorder %s19, 1
      %p58 = scmp.ne.s32.totalorder %s53, %s55
      %p59 = scmp.eq.s32.totalorder %s19, 0
      %p60 = por %p58, %p59
      %p61 = scmp.ne.s32.totalorder %s53, %s55
      %p62 = scmp.eq.s32.totalorder %s24, 1
      %p63 = por %p61, %p62
      %p64 = scmp.ne.s32.totalorder %s55, %s56
      %p65 = scmp.eq.s32.totalorder %s24, 0
      %p66 = por %p64, %p65
      %p67 = scmp.ne.s32.totalorder %s55, %s56
      %p68 = scmp.eq.s32.totalorder %s25, 1
      %p69 = por %p67, %p68
      %p71 = scmp.ne.s32.totalorder %s56, %s70
      %p72 = scmp.eq.s32.totalorder %s25, 0
      %p73 = por %p71, %p72
      %s75 = sadd.s32 %s74, 1
      %p78 = scmp.eq.s32.totalorder %s19, 1
      %p79 = scmp.ne.s32.totalorder %s74, %s76
      %p80 = scmp.eq.s32.totalorder %s19, 0
      %p81 = por %p79, %p80
      %p82 = scmp.ne.s32.totalorder %s74, %s76
      %p83 = scmp.eq.s32.totalorder %s24, 1
      %p84 = por %p82, %p83
      %p85 = scmp.ne.s32.totalorder %s76, %s77
      %p86 = scmp.eq.s32.totalorder %s24, 0
      %p87 = por %p85, %p86
      %p88 = scmp.ne.s32.totalorder %s76, %s77
      %p89 = scmp.eq.s32.totalorder %s25, 1
      %p90 = por %p88, %p89
      %p92 = scmp.ne.s32.totalorder %s77, %s91
      %p93 = scmp.eq.s32.totalorder %s25, 0
      %p94 = por %p92, %p93
      %s96 = sadd.s32 %s95, 1
      %p99 = scmp.eq.s32.totalorder %s19, 1
      %p100 = scmp.ne.s32.totalorder %s95, %s97
      %p101 = scmp.eq.s32.totalorder %s19, 0
      %p102 = por %p100, %p101
      %p103 = scmp.ne.s32.totalorder %s95, %s97
      %p104 = scmp.eq.s32.totalorder %s24, 1
      %p105 = por %p103, %p104
      %p106 = scmp.ne.s32.totalorder %s97, %s98
      %p107 = scmp.eq.s32.totalorder %s24, 0
      %p108 = por %p106, %p107
      %p109 = scmp.ne.s32.totalorder %s97, %s98
      %p110 = scmp.eq.s32.totalorder %s25, 1
      %p111 = por %p109, %p110
      %p113 = scmp.ne.s32.totalorder %s98, %s112
      %p114 = scmp.eq.s32.totalorder %s25, 0
      %p115 = por %p113, %p114
      %s116 = ssub.s32 %s19, %s26
      %p117 = scmp.eq.s32.totalorder %s116, 0
      %s119 = sadd.s32 %s118, 1
      %s120 = scalar_select %p117, %s118, %s119
      %p123 = pneg %p117
      %p124 = scmp.eq.s32.totalorder %s19, 1
      %p125 = por %p123, %p124
      %p126 = scmp.ne.s32.totalorder %s118, %s121
      %p127 = scmp.eq.s32.totalorder %s19, 0
      %p128 = por %p126, %p127
      %p129 = scmp.ne.s32.totalorder %s118, %s121
      %p130 = scmp.eq.s32.totalorder %s24, 1
      %p131 = por %p129, %p130
      %p132 = scmp.ne.s32.totalorder %s121, %s122
      %p133 = scmp.eq.s32.totalorder %s24, 0
      %p134 = por %p132, %p133
      %p135 = scmp.ne.s32.totalorder %s121, %s122
      %p136 = scmp.eq.s32.totalorder %s25, 1
      %p137 = por %p135, %p136
      %p139 = scmp.ne.s32.totalorder %s122, %s138
      %p140 = scmp.eq.s32.totalorder %s25, 0
      %p141 = por %p139, %p140
      %s142 = ssub.s32 %s19, %s26
      %p143 = scmp.eq.s32.totalorder %s142, 0
      %s145 = sadd.s32 %s144, 1
      %s146 = scalar_select %p143, %s144, %s145
      %p149 = pneg %p143
      %p150 = scmp.eq.s32.totalorder %s19, 1
      %p151 = por %p149, %p150
      %p152 = scmp.ne.s32.totalorder %s144, %s147
      %p153 = scmp.eq.s32.totalorder %s19, 0
      %p154 = por %p152, %p153
      %p155 = scmp.ne.s32.totalorder %s144, %s147
      %p156 = scmp.eq.s32.totalorder %s24, 1
      %p157 = por %p155, %p156
      %p158 = scmp.ne.s32.totalorder %s147, %s148
      %p159 = scmp.eq.s32.totalorder %s24, 0
      %p160 = por %p158, %p159
      %p161 = scmp.ne.s32.totalorder %s147, %s148
      %p162 = scmp.eq.s32.totalorder %s25, 1
      %p163 = por %p161, %p162
      %p165 = scmp.ne.s32.totalorder %s148, %s164
      %p166 = scmp.eq.s32.totalorder %s25, 0
      %p167 = por %p165, %p166
      %s168 = ssub.s32 %s19, %s26
      %p169 = scmp.eq.s32.totalorder %s168, 0
      %s171 = sadd.s32 %s170, 1
      %s172 = scalar_select %p169, %s170, %s171
      %p175 = pneg %p169
      %p176 = scmp.eq.s32.totalorder %s19, 1
      %p177 = por %p175, %p176
      %p178 = scmp.ne.s32.totalorder %s170, %s173
      %p179 = scmp.eq.s32.totalorder %s19, 0
      %p180 = por %p178, %p179
      %p181 = scmp.ne.s32.totalorder %s170, %s173
      %p182 = scmp.eq.s32.totalorder %s24, 1
      %p183 = por %p181, %p182
      %p184 = scmp.ne.s32.totalorder %s173, %s174
      %p185 = scmp.eq.s32.totalorder %s24, 0
      %p186 = por %p184, %p185
      %p187 = scmp.ne.s32.totalorder %s173, %s174
      %p188 = scmp.eq.s32.totalorder %s25, 1
      %p189 = por %p187, %p188
      %p191 = scmp.ne.s32.totalorder %s174, %s190
      %p192 = scmp.eq.s32.totalorder %s25, 0
      %p193 = por %p191, %p192
      %p194 = scmp.le.s32.totalorder 1, %s19
      %p195 = scmp.lt.s32.totalorder %s19, 3
      %p196 = pnand %p194, %p195
      %p197 = pneg %p196
      // Predicated region
      $region9: #{tpu_custom_call.1} parent=5 // pred_check
        _
      $region10: #{tpu_custom_call.1} parent=5 // pred_check_branch
        %199 = sbr.rel (%p196) target = $region12
      $region11: #{tpu_custom_call.1} parent=5 // pred_region
        %s200 = ssub.s32 %s19, 1
        // Predicated region
        $region13: #{tpu_custom_call.1} parent=11 // pred_check
          %p201 = pneg %p66
        $region14: #{tpu_custom_call.1} parent=11 // pred_check_branch
          %203 = sbr.rel (%p201) target = $region16
        $region15: #{tpu_custom_call.1} parent=11 // pred_region
          _
        $region16: #{tpu_custom_call.1} parent=11 // pred_fallthru
          _
        // Predicated region
        $region17: #{tpu_custom_call.1} parent=11 // pred_check
          %p204 = pneg %p87
        $region18: #{tpu_custom_call.1} parent=11 // pred_check_branch
          %206 = sbr.rel (%p204) target = $region20
        $region19: #{tpu_custom_call.1} parent=11 // pred_region
          _
        $region20: #{tpu_custom_call.1} parent=11 // pred_fallthru
          _
        // Predicated region
        $region21: #{tpu_custom_call.1} parent=11 // pred_check
          %p207 = pneg %p108
        $region22: #{tpu_custom_call.1} parent=11 // pred_check_branch
          %209 = sbr.rel (%p207) target = $region24
        $region23: #{tpu_custom_call.1} parent=11 // pred_region
          _
        $region24: #{tpu_custom_call.1} parent=11 // pred_fallthru
          _
      $region12: #{tpu_custom_call.1} parent=5 // pred_fallthru
        _
      %p210 = scmp.lt.s32.totalorder %s19, 2
      // Predicated region
      $region25: #{tpu_custom_call.1} parent=5 // pred_check
        %p211 = pneg %p210
      $region26: #{tpu_custom_call.1} parent=5 // pred_check_branch
        %213 = sbr.rel (%p211) target = $region28
      $region27: #{tpu_custom_call.1} parent=5 // pred_region
        // Predicated region
        $region29: #{tpu_custom_call.1} parent=27 // pred_check
          %p214 = pneg %p39
        $region30: #{tpu_custom_call.1} parent=27 // pred_check_branch
          %216 = sbr.rel (%p214) target = $region32
        $region31: #{tpu_custom_call.1} parent=27 // pred_region
          %p217 = scmp.lt.s32.totalorder %s19, 1
          %s218 = scalar_select %p217, %s19, 1
          %s219 = smul.addr %s218, 72
          %s220 = smul.addr %s219, 8
          %s221 = scalar_lea.vmem %s0, %s220
        $region32: #{tpu_custom_call.1} parent=27 // pred_fallthru
          _
      $region28: #{tpu_custom_call.1} parent=5 // pred_fallthru
        _
      %p222 = scmp.le.s32.totalorder 1, %s19
      %p223 = scmp.lt.s32.totalorder %s19, 3
      %p224 = pnand %p222, %p223
      %p225 = pneg %p224
      // Predicated region
      $region33: #{tpu_custom_call.1} parent=5 // pred_check
        _
      $region34: #{tpu_custom_call.1} parent=5 // pred_check_branch
        %227 = sbr.rel (%p224) target = $region36
      $region35: #{tpu_custom_call.1} parent=5 // pred_region
        %s228 = ssub.s32 %s19, 1
        %p229 = scmp.lt.s32.totalorder %s24, 1
        %s230 = scalar_select %p229, %s24, 1
        %s231 = smul.addr %s230, 72
        %s232 = smul.addr %s231, 8
        %s233 = scalar_lea.vmem %s0, %s232
        %p234 = pneg %p45
        %p235 = pneg %p42
        %p236 = pneg %p66
        %p237 = pneg %p63
        %p238 = pneg %p87
        %p239 = pneg %p84
        %p240 = pneg %p108
        %p241 = pneg %p105
        %p242 = pneg %p134
        %p243 = pneg %p131
        %p244 = scmp.lt.s32.totalorder %s24, 1
        %s245 = scalar_select %p244, %s24, 1
        %s246 = smul.addr %s245, 72
        %s247 = smul.addr %s246, 8
        %s248 = scalar_lea.vmem %s4, %s247
        %p249 = pneg %p160
        %p250 = pneg %p157
        %s251 = sand.u32 %s147, 1
        %s252 = scalar_lea.sflag [#allocation3], %s251
        %s253 = sand.u32 %s147, 1
        %s254 = scalar_lea.vmem [#allocation2], %s253
        %p255 = pneg %p186
        %p256 = pneg %p183
        %s257 = sand.u32 %s173, 1
        %s258 = scalar_lea.sflag [#allocation5], %s257
        %s259 = sand.u32 %s173, 1
        %s260 = scalar_lea.vmem [#allocation4], %s259
        %p261 = scmp.lt.s32.totalorder %s24, 1
        %s262 = scalar_select %p261, %s24, 1
        %s263 = smul.addr %s262, 72
        %s264 = smul.addr %s263, 8
        %s265 = scalar_lea.vmem %s0, %s264
        %p266 = scmp.lt.s32.totalorder %s24, 1
        %s267 = scalar_select %p266, %s24, 1
        %s268 = smul.addr %s267, 72
        %s269 = smul.addr %s268, 8
        %s270 = scalar_lea.vmem %s4, %s269
        %v271 = vld [vmem:[%s265] sm:$0xff]
        %v272 = vld [vmem:[%s265 + $0x8] sm:$0xff]
        %v273 = vld [vmem:[%s265 + $0x10] sm:$0xff]
        %v274 = vld [vmem:[%s265 + $0x18] sm:$0xff]
        %v275 = vld [vmem:[%s265 + $0x20] sm:$0xff]
        %v276 = vld [vmem:[%s265 + $0x28] sm:$0xff]
        %v277 = vld [vmem:[%s265 + $0x30] sm:$0xff]
        %v278 = vld [vmem:[%s265 + $0x38] sm:$0xff]
        %v279 = vld [vmem:[%s265 + $0x40] sm:$0xff]
        %v280 = vld [vmem:[%s265 + $0x48] sm:$0xff]
        %v281 = vld [vmem:[%s265 + $0x50] sm:$0xff]
        %v282 = vld [vmem:[%s265 + $0x58] sm:$0xff]
        %v283 = vld [vmem:[%s265 + $0x60] sm:$0xff]
        %v284 = vld [vmem:[%s265 + $0x68] sm:$0xff]
        %v285 = vld [vmem:[%s265 + $0x70] sm:$0xff]
        %v286 = vld [vmem:[%s265 + $0x78] sm:$0xff]
        %v287 = vld [vmem:[%s265 + $0x80] sm:$0xff]
        %v288 = vld [vmem:[%s265 + $0x88] sm:$0xff]
        %v289 = vld [vmem:[%s265 + $0x90] sm:$0xff]
        %v290 = vld [vmem:[%s265 + $0x98] sm:$0xff]
        %v291 = vld [vmem:[%s265 + $0xa0] sm:$0xff]
        %v292 = vld [vmem:[%s265 + $0xa8] sm:$0xff]
        %v293 = vld [vmem:[%s265 + $0xb0] sm:$0xff]
        %v294 = vld [vmem:[%s265 + $0xb8] sm:$0xff]
        %v295 = vld [vmem:[%s265 + $0xc0] sm:$0xff]
        %v296 = vld [vmem:[%s265 + $0xc8] sm:$0xff]
        %v297 = vld [vmem:[%s265 + $0xd0] sm:$0xff]
        %v298 = vld [vmem:[%s265 + $0xd8] sm:$0xff]
        %v299 = vld [vmem:[%s265 + $0xe0] sm:$0xff]
        %v300 = vld [vmem:[%s265 + $0xe8] sm:$0xff]
        %v301 = vld [vmem:[%s265 + $0xf0] sm:$0xff]
        %v302 = vld [vmem:[%s265 + $0xf8] sm:$0xff]
        %v303 = vld [vmem:[%s265 + $0x100] sm:$0xff]
        %v304 = vld [vmem:[%s265 + $0x108] sm:$0xff]
        %v305 = vld [vmem:[%s265 + $0x110] sm:$0xff]
        %v306 = vld [vmem:[%s265 + $0x118] sm:$0xff]
        %v307 = vld [vmem:[%s265 + $0x120] sm:$0xff]
        %v308 = vld [vmem:[%s265 + $0x128] sm:$0xff]
        %v309 = vld [vmem:[%s265 + $0x130] sm:$0xff]
        %v310 = vld [vmem:[%s265 + $0x138] sm:$0xff]
        %v311 = vld [vmem:[%s265 + $0x140] sm:$0xff]
        %v312 = vld [vmem:[%s265 + $0x148] sm:$0xff]
        %v313 = vld [vmem:[%s265 + $0x150] sm:$0xff]
        %v314 = vld [vmem:[%s265 + $0x158] sm:$0xff]
        %v315 = vld [vmem:[%s265 + $0x160] sm:$0xff]
        %v316 = vld [vmem:[%s265 + $0x168] sm:$0xff]
        %v317 = vld [vmem:[%s265 + $0x170] sm:$0xff]
        %v318 = vld [vmem:[%s265 + $0x178] sm:$0xff]
        %v319 = vld [vmem:[%s265 + $0x180] sm:$0xff]
        %v320 = vld [vmem:[%s265 + $0x188] sm:$0xff]
        %v321 = vld [vmem:[%s265 + $0x190] sm:$0xff]
        %v322 = vld [vmem:[%s265 + $0x198] sm:$0xff]
        %v323 = vld [vmem:[%s265 + $0x1a0] sm:$0xff]
        %v324 = vld [vmem:[%s265 + $0x1a8] sm:$0xff]
        %v325 = vld [vmem:[%s265 + $0x1b0] sm:$0xff]
        %v326 = vld [vmem:[%s265 + $0x1b8] sm:$0xff]
        %v327 = vld [vmem:[%s265 + $0x1c0] sm:$0xff]
        %v328 = vld [vmem:[%s265 + $0x1c8] sm:$0xff]
        %v329 = vld [vmem:[%s265 + $0x1d0] sm:$0xff]
        %v330 = vld [vmem:[%s265 + $0x1d8] sm:$0xff]
        %v331 = vld [vmem:[%s265 + $0x1e0] sm:$0xff]
        %v332 = vld [vmem:[%s265 + $0x1e8] sm:$0xff]
        %v333 = vld [vmem:[%s265 + $0x1f0] sm:$0xff]
        %v334 = vld [vmem:[%s265 + $0x1f8] sm:$0xff]
        %v335 = vld [vmem:[%s265 + $0x200] sm:$0xff]
        %v336 = vld [vmem:[%s265 + $0x208] sm:$0xff]
        %v337 = vld [vmem:[%s265 + $0x210] sm:$0xff]
        %v338 = vld [vmem:[%s265 + $0x218] sm:$0xff]
        %v339 = vld [vmem:[%s265 + $0x220] sm:$0xff]
        %v340 = vld [vmem:[%s265 + $0x228] sm:$0xff]
        %v341 = vld [vmem:[%s265 + $0x230] sm:$0xff]
        %v342 = vld [vmem:[%s265 + $0x238] sm:$0xff]
        %vm375 = vcmask 1046528
        %v376 = vrot.slane %v272, 1
        %v377 = vrot.slane %v273, 1
        %v378 = vsel %vm375, %v376, %v377
        %v379 = vrot.slane %v276, 1
        %v380 = vrot.slane %v277, 1
        %v381 = vsel %vm375, %v379, %v380
        %v382 = vrot.slane %v280, 1
        %v383 = vrot.slane %v281, 1
        %v384 = vsel %vm375, %v382, %v383
        %v385 = vrot.slane %v284, 1
        %v386 = vrot.slane %v285, 1
        %v387 = vsel %vm375, %v385, %v386
        %v388 = vrot.slane %v288, 1
        %v389 = vrot.slane %v289, 1
        %v390 = vsel %vm375, %v388, %v389
        %v391 = vrot.slane %v292, 1
        %v392 = vrot.slane %v293, 1
        %v393 = vsel %vm375, %v391, %v392
        %v394 = vrot.slane %v296, 1
        %v395 = vrot.slane %v297, 1
        %v396 = vsel %vm375, %v394, %v395
        %v397 = vrot.slane %v300, 1
        %v398 = vrot.slane %v301, 1
        %v399 = vsel %vm375, %v397, %v398
        %v400 = vrot.slane %v304, 1
        %v401 = vrot.slane %v305, 1
        %v402 = vsel %vm375, %v400, %v401
        %v403 = vrot.slane %v308, 1
        %v404 = vrot.slane %v309, 1
        %v405 = vsel %vm375, %v403, %v404
        %v406 = vrot.slane %v312, 1
        %v407 = vrot.slane %v313, 1
        %v408 = vsel %vm375, %v406, %v407
        %v409 = vrot.slane %v316, 1
        %v410 = vrot.slane %v317, 1
        %v411 = vsel %vm375, %v409, %v410
        %v412 = vrot.slane %v320, 1
        %v413 = vrot.slane %v321, 1
        %v414 = vsel %vm375, %v412, %v413
        %v415 = vrot.slane %v324, 1
        %v416 = vrot.slane %v325, 1
        %v417 = vsel %vm375, %v415, %v416
        %v418 = vrot.slane %v328, 1
        %v419 = vrot.slane %v329, 1
        %v420 = vsel %vm375, %v418, %v419
        %v421 = vrot.slane %v332, 1
        %v422 = vrot.slane %v333, 1
        %v423 = vsel %vm375, %v421, %v422
        %424 = vrot.lane.b32.xlu0 %v376, 4
        %v425 = vpop.permute.xlu0 %424
        %426 = vrot.lane.b32.xlu0 %v378, 4
        %v427 = vpop.permute.xlu0 %426
        %428 = vrot.lane.b32.xlu0 %v377, 4
        %v429 = vpop.permute.xlu0 %428
        %430 = vrot.lane.b32.xlu0 %v379, 4
        %v431 = vpop.permute.xlu0 %430
        %432 = vrot.lane.b32.xlu0 %v381, 4
        %v433 = vpop.permute.xlu0 %432
        %434 = vrot.lane.b32.xlu0 %v380, 4
        %v435 = vpop.permute.xlu0 %434
        %436 = vrot.lane.b32.xlu0 %v382, 4
        %v437 = vpop.permute.xlu0 %436
        %438 = vrot.lane.b32.xlu0 %v384, 4
        %v439 = vpop.permute.xlu0 %438
        %440 = vrot.lane.b32.xlu0 %v383, 4
        %v441 = vpop.permute.xlu0 %440
        %442 = vrot.lane.b32.xlu0 %v385, 4
        %v443 = vpop.permute.xlu0 %442
        %444 = vrot.lane.b32.xlu0 %v387, 4
        %v445 = vpop.permute.xlu0 %444
        %446 = vrot.lane.b32.xlu0 %v386, 4
        %v447 = vpop.permute.xlu0 %446
        %448 = vrot.lane.b32.xlu0 %v388, 4
        %v449 = vpop.permute.xlu0 %448
        %450 = vrot.lane.b32.xlu0 %v390, 4
        %v451 = vpop.permute.xlu0 %450
        %452 = vrot.lane.b32.xlu0 %v389, 4
        %v453 = vpop.permute.xlu0 %452
        %454 = vrot.lane.b32.xlu0 %v391, 4
        %v455 = vpop.permute.xlu0 %454
        %456 = vrot.lane.b32.xlu0 %v393, 4
        %v457 = vpop.permute.xlu0 %456
        %458 = vrot.lane.b32.xlu0 %v392, 4
        %v459 = vpop.permute.xlu0 %458
        %460 = vrot.lane.b32.xlu0 %v394, 4
        %v461 = vpop.permute.xlu0 %460
        %462 = vrot.lane.b32.xlu0 %v396, 4
        %v463 = vpop.permute.xlu0 %462
        %464 = vrot.lane.b32.xlu0 %v395, 4
        %v465 = vpop.permute.xlu0 %464
        %466 = vrot.lane.b32.xlu0 %v397, 4
        %v467 = vpop.permute.xlu0 %466
        %468 = vrot.lane.b32.xlu0 %v399, 4
        %v469 = vpop.permute.xlu0 %468
        %470 = vrot.lane.b32.xlu0 %v398, 4
        %v471 = vpop.permute.xlu0 %470
        %472 = vrot.lane.b32.xlu0 %v400, 4
        %v473 = vpop.permute.xlu0 %472
        %474 = vrot.lane.b32.xlu0 %v402, 4
        %v475 = vpop.permute.xlu0 %474
        %476 = vrot.lane.b32.xlu0 %v401, 4
        %v477 = vpop.permute.xlu0 %476
        %478 = vrot.lane.b32.xlu0 %v403, 4
        %v479 = vpop.permute.xlu0 %478
        %480 = vrot.lane.b32.xlu0 %v405, 4
        %v481 = vpop.permute.xlu0 %480
        %482 = vrot.lane.b32.xlu0 %v404, 4
        %v483 = vpop.permute.xlu0 %482
        %484 = vrot.lane.b32.xlu0 %v406, 4
        %v485 = vpop.permute.xlu0 %484
        %486 = vrot.lane.b32.xlu0 %v408, 4
        %v487 = vpop.permute.xlu0 %486
        %488 = vrot.lane.b32.xlu0 %v407, 4
        %v489 = vpop.permute.xlu0 %488
        %490 = vrot.lane.b32.xlu0 %v409, 4
        %v491 = vpop.permute.xlu0 %490
        %492 = vrot.lane.b32.xlu0 %v411, 4
        %v493 = vpop.permute.xlu0 %492
        %494 = vrot.lane.b32.xlu0 %v410, 4
        %v495 = vpop.permute.xlu0 %494
        %496 = vrot.lane.b32.xlu0 %v412, 4
        %v497 = vpop.permute.xlu0 %496
        %498 = vrot.lane.b32.xlu0 %v414, 4
        %v499 = vpop.permute.xlu0 %498
        %500 = vrot.lane.b32.xlu0 %v413, 4
        %v501 = vpop.permute.xlu0 %500
        %502 = vrot.lane.b32.xlu0 %v415, 4
        %v503 = vpop.permute.xlu0 %502
        %504 = vrot.lane.b32.xlu0 %v417, 4
        %v505 = vpop.permute.xlu0 %504
        %506 = vrot.lane.b32.xlu0 %v416, 4
        %v507 = vpop.permute.xlu0 %506
        %508 = vrot.lane.b32.xlu0 %v418, 4
        %v509 = vpop.permute.xlu0 %508
        %510 = vrot.lane.b32.xlu0 %v420, 4
        %v511 = vpop.permute.xlu0 %510
        %512 = vrot.lane.b32.xlu0 %v419, 4
        %v513 = vpop.permute.xlu0 %512
        %514 = vrot.lane.b32.xlu0 %v421, 4
        %v515 = vpop.permute.xlu0 %514
        %516 = vrot.lane.b32.xlu0 %v423, 4
        %v517 = vpop.permute.xlu0 %516
        %518 = vrot.lane.b32.xlu0 %v422, 4
        %v519 = vpop.permute.xlu0 %518
        %vm584 = vcmask 1045504
        %v585 = vrot.slane %v272, 2
        %v586 = vrot.slane %v273, 2
        %v587 = vsel %vm584, %v585, %v586
        %v588 = vrot.slane %v274, 2
        %v589 = vsel %vm584, %v586, %v588
        %v590 = vrot.slane %v276, 2
        %v591 = vrot.slane %v277, 2
        %v592 = vsel %vm584, %v590, %v591
        %v593 = vrot.slane %v278, 2
        %v594 = vsel %vm584, %v591, %v593
        %v595 = vrot.slane %v280, 2
        %v596 = vrot.slane %v281, 2
        %v597 = vsel %vm584, %v595, %v596
        %v598 = vrot.slane %v282, 2
        %v599 = vsel %vm584, %v596, %v598
        %v600 = vrot.slane %v284, 2
        %v601 = vrot.slane %v285, 2
        %v602 = vsel %vm584, %v600, %v601
        %v603 = vrot.slane %v286, 2
        %v604 = vsel %vm584, %v601, %v603
        %v605 = vrot.slane %v288, 2
        %v606 = vrot.slane %v289, 2
        %v607 = vsel %vm584, %v605, %v606
        %v608 = vrot.slane %v290, 2
        %v609 = vsel %vm584, %v606, %v608
        %v610 = vrot.slane %v292, 2
        %v611 = vrot.slane %v293, 2
        %v612 = vsel %vm584, %v610, %v611
        %v613 = vrot.slane %v294, 2
        %v614 = vsel %vm584, %v611, %v613
        %v615 = vrot.slane %v296, 2
        %v616 = vrot.slane %v297, 2
        %v617 = vsel %vm584, %v615, %v616
        %v618 = vrot.slane %v298, 2
        %v619 = vsel %vm584, %v616, %v618
        %v620 = vrot.slane %v300, 2
        %v621 = vrot.slane %v301, 2
        %v622 = vsel %vm584, %v620, %v621
        %v623 = vrot.slane %v302, 2
        %v624 = vsel %vm584, %v621, %v623
        %v625 = vrot.slane %v304, 2
        %v626 = vrot.slane %v305, 2
        %v627 = vsel %vm584, %v625, %v626
        %v628 = vrot.slane %v306, 2
        %v629 = vsel %vm584, %v626, %v628
        %v630 = vrot.slane %v308, 2
        %v631 = vrot.slane %v309, 2
        %v632 = vsel %vm584, %v630, %v631
        %v633 = vrot.slane %v310, 2
        %v634 = vsel %vm584, %v631, %v633
        %v635 = vrot.slane %v312, 2
        %v636 = vrot.slane %v313, 2
        %v637 = vsel %vm584, %v635, %v636
        %v638 = vrot.slane %v314, 2
        %v639 = vsel %vm584, %v636, %v638
        %v640 = vrot.slane %v316, 2
        %v641 = vrot.slane %v317, 2
        %v642 = vsel %vm584, %v640, %v641
        %v643 = vrot.slane %v318, 2
        %v644 = vsel %vm584, %v641, %v643
        %v645 = vrot.slane %v320, 2
        %v646 = vrot.slane %v321, 2
        %v647 = vsel %vm584, %v645, %v646
        %v648 = vrot.slane %v322, 2
        %v649 = vsel %vm584, %v646, %v648
        %v650 = vrot.slane %v324, 2
        %v651 = vrot.slane %v325, 2
        %v652 = vsel %vm584, %v650, %v651
        %v653 = vrot.slane %v326, 2
        %v654 = vsel %vm584, %v651, %v653
        %v655 = vrot.slane %v328, 2
        %v656 = vrot.slane %v329, 2
        %v657 = vsel %vm584, %v655, %v656
        %v658 = vrot.slane %v330, 2
        %v659 = vsel %vm584, %v656, %v658
        %v660 = vrot.slane %v332, 2
        %v661 = vrot.slane %v333, 2
        %v662 = vsel %vm584, %v660, %v661
        %v663 = vrot.slane %v334, 2
        %v664 = vsel %vm584, %v661, %v663
        %665 = vrot.lane.b32.xlu0 %v585, 8
        %v666 = vpop.permute.xlu0 %665
        %667 = vrot.lane.b32.xlu0 %v587, 8
        %v668 = vpop.permute.xlu0 %667
        %669 = vrot.lane.b32.xlu0 %v589, 8
        %v670 = vpop.permute.xlu0 %669
        %671 = vrot.lane.b32.xlu0 %v590, 8
        %v672 = vpop.permute.xlu0 %671
        %673 = vrot.lane.b32.xlu0 %v592, 8
        %v674 = vpop.permute.xlu0 %673
        %675 = vrot.lane.b32.xlu0 %v594, 8
        %v676 = vpop.permute.xlu0 %675
        %677 = vrot.lane.b32.xlu0 %v595, 8
        %v678 = vpop.permute.xlu0 %677
        %679 = vrot.lane.b32.xlu0 %v597, 8
        %v680 = vpop.permute.xlu0 %679
        %681 = vrot.lane.b32.xlu0 %v599, 8
        %v682 = vpop.permute.xlu0 %681
        %683 = vrot.lane.b32.xlu0 %v600, 8
        %v684 = vpop.permute.xlu0 %683
        %685 = vrot.lane.b32.xlu0 %v602, 8
        %v686 = vpop.permute.xlu0 %685
        %687 = vrot.lane.b32.xlu0 %v604, 8
        %v688 = vpop.permute.xlu0 %687
        %689 = vrot.lane.b32.xlu0 %v605, 8
        %v690 = vpop.permute.xlu0 %689
        %691 = vrot.lane.b32.xlu0 %v607, 8
        %v692 = vpop.permute.xlu0 %691
        %693 = vrot.lane.b32.xlu0 %v609, 8
        %v694 = vpop.permute.xlu0 %693
        %695 = vrot.lane.b32.xlu0 %v610, 8
        %v696 = vpop.permute.xlu0 %695
        %697 = vrot.lane.b32.xlu0 %v612, 8
        %v698 = vpop.permute.xlu0 %697
        %699 = vrot.lane.b32.xlu0 %v614, 8
        %v700 = vpop.permute.xlu0 %699
        %701 = vrot.lane.b32.xlu0 %v615, 8
        %v702 = vpop.permute.xlu0 %701
        %703 = vrot.lane.b32.xlu0 %v617, 8
        %v704 = vpop.permute.xlu0 %703
        %705 = vrot.lane.b32.xlu0 %v619, 8
        %v706 = vpop.permute.xlu0 %705
        %707 = vrot.lane.b32.xlu0 %v620, 8
        %v708 = vpop.permute.xlu0 %707
        %709 = vrot.lane.b32.xlu0 %v622, 8
        %v710 = vpop.permute.xlu0 %709
        %711 = vrot.lane.b32.xlu0 %v624, 8
        %v712 = vpop.permute.xlu0 %711
        %713 = vrot.lane.b32.xlu0 %v625, 8
        %v714 = vpop.permute.xlu0 %713
        %715 = vrot.lane.b32.xlu0 %v627, 8
        %v716 = vpop.permute.xlu0 %715
        %717 = vrot.lane.b32.xlu0 %v629, 8
        %v718 = vpop.permute.xlu0 %717
        %719 = vrot.lane.b32.xlu0 %v630, 8
        %v720 = vpop.permute.xlu0 %719
        %721 = vrot.lane.b32.xlu0 %v632, 8
        %v722 = vpop.permute.xlu0 %721
        %723 = vrot.lane.b32.xlu0 %v634, 8
        %v724 = vpop.permute.xlu0 %723
        %725 = vrot.lane.b32.xlu0 %v635, 8
        %v726 = vpop.permute.xlu0 %725
        %727 = vrot.lane.b32.xlu0 %v637, 8
        %v728 = vpop.permute.xlu0 %727
        %729 = vrot.lane.b32.xlu0 %v639, 8
        %v730 = vpop.permute.xlu0 %729
        %731 = vrot.lane.b32.xlu0 %v640, 8
        %v732 = vpop.permute.xlu0 %731
        %733 = vrot.lane.b32.xlu0 %v642, 8
        %v734 = vpop.permute.xlu0 %733
        %735 = vrot.lane.b32.xlu0 %v644, 8
        %v736 = vpop.permute.xlu0 %735
        %737 = vrot.lane.b32.xlu0 %v645, 8
        %v738 = vpop.permute.xlu0 %737
        %739 = vrot.lane.b32.xlu0 %v647, 8
        %v740 = vpop.permute.xlu0 %739
        %741 = vrot.lane.b32.xlu0 %v649, 8
        %v742 = vpop.permute.xlu0 %741
        %743 = vrot.lane.b32.xlu0 %v650, 8
        %v744 = vpop.permute.xlu0 %743
        %745 = vrot.lane.b32.xlu0 %v652, 8
        %v746 = vpop.permute.xlu0 %745
        %747 = vrot.lane.b32.xlu0 %v654, 8
        %v748 = vpop.permute.xlu0 %747
        %749 = vrot.lane.b32.xlu0 %v655, 8
        %v750 = vpop.permute.xlu0 %749
        %751 = vrot.lane.b32.xlu0 %v657, 8
        %v752 = vpop.permute.xlu0 %751
        %753 = vrot.lane.b32.xlu0 %v659, 8
        %v754 = vpop.permute.xlu0 %753
        %755 = vrot.lane.b32.xlu0 %v660, 8
        %v756 = vpop.permute.xlu0 %755
        %757 = vrot.lane.b32.xlu0 %v662, 8
        %v758 = vpop.permute.xlu0 %757
        %759 = vrot.lane.b32.xlu0 %v664, 8
        %v760 = vpop.permute.xlu0 %759
        %827 = vrot.lane.b32.xlu0 %v275, 12
        %v828 = vpop.permute.xlu0 %827
        %829 = vrot.lane.b32.xlu0 %v276, 12
        %v830 = vpop.permute.xlu0 %829
        %831 = vrot.lane.b32.xlu0 %v277, 12
        %v832 = vpop.permute.xlu0 %831
        %833 = vrot.lane.b32.xlu0 %v279, 12
        %v834 = vpop.permute.xlu0 %833
        %835 = vrot.lane.b32.xlu0 %v280, 12
        %v836 = vpop.permute.xlu0 %835
        %837 = vrot.lane.b32.xlu0 %v281, 12
        %v838 = vpop.permute.xlu0 %837
        %839 = vrot.lane.b32.xlu0 %v283, 12
        %v840 = vpop.permute.xlu0 %839
        %841 = vrot.lane.b32.xlu0 %v284, 12
        %v842 = vpop.permute.xlu0 %841
        %843 = vrot.lane.b32.xlu0 %v285, 12
        %v844 = vpop.permute.xlu0 %843
        %845 = vrot.lane.b32.xlu0 %v287, 12
        %v846 = vpop.permute.xlu0 %845
        %847 = vrot.lane.b32.xlu0 %v288, 12
        %v848 = vpop.permute.xlu0 %847
        %849 = vrot.lane.b32.xlu0 %v289, 12
        %v850 = vpop.permute.xlu0 %849
        %851 = vrot.lane.b32.xlu0 %v291, 12
        %v852 = vpop.permute.xlu0 %851
        %853 = vrot.lane.b32.xlu0 %v292, 12
        %v854 = vpop.permute.xlu0 %853
        %855 = vrot.lane.b32.xlu0 %v293, 12
        %v856 = vpop.permute.xlu0 %855
        %857 = vrot.lane.b32.xlu0 %v295, 12
        %v858 = vpop.permute.xlu0 %857
        %859 = vrot.lane.b32.xlu0 %v296, 12
        %v860 = vpop.permute.xlu0 %859
        %861 = vrot.lane.b32.xlu0 %v297, 12
        %v862 = vpop.permute.xlu0 %861
        %863 = vrot.lane.b32.xlu0 %v299, 12
        %v864 = vpop.permute.xlu0 %863
        %865 = vrot.lane.b32.xlu0 %v300, 12
        %v866 = vpop.permute.xlu0 %865
        %867 = vrot.lane.b32.xlu0 %v301, 12
        %v868 = vpop.permute.xlu0 %867
        %869 = vrot.lane.b32.xlu0 %v303, 12
        %v870 = vpop.permute.xlu0 %869
        %871 = vrot.lane.b32.xlu0 %v304, 12
        %v872 = vpop.permute.xlu0 %871
        %873 = vrot.lane.b32.xlu0 %v305, 12
        %v874 = vpop.permute.xlu0 %873
        %875 = vrot.lane.b32.xlu0 %v307, 12
        %v876 = vpop.permute.xlu0 %875
        %877 = vrot.lane.b32.xlu0 %v308, 12
        %v878 = vpop.permute.xlu0 %877
        %879 = vrot.lane.b32.xlu0 %v309, 12
        %v880 = vpop.permute.xlu0 %879
        %881 = vrot.lane.b32.xlu0 %v311, 12
        %v882 = vpop.permute.xlu0 %881
        %883 = vrot.lane.b32.xlu0 %v312, 12
        %v884 = vpop.permute.xlu0 %883
        %885 = vrot.lane.b32.xlu0 %v313, 12
        %v886 = vpop.permute.xlu0 %885
        %887 = vrot.lane.b32.xlu0 %v315, 12
        %v888 = vpop.permute.xlu0 %887
        %889 = vrot.lane.b32.xlu0 %v316, 12
        %v890 = vpop.permute.xlu0 %889
        %891 = vrot.lane.b32.xlu0 %v317, 12
        %v892 = vpop.permute.xlu0 %891
        %893 = vrot.lane.b32.xlu0 %v319, 12
        %v894 = vpop.permute.xlu0 %893
        %895 = vrot.lane.b32.xlu0 %v320, 12
        %v896 = vpop.permute.xlu0 %895
        %897 = vrot.lane.b32.xlu0 %v321, 12
        %v898 = vpop.permute.xlu0 %897
        %899 = vrot.lane.b32.xlu0 %v323, 12
        %v900 = vpop.permute.xlu0 %899
        %901 = vrot.lane.b32.xlu0 %v324, 12
        %v902 = vpop.permute.xlu0 %901
        %903 = vrot.lane.b32.xlu0 %v325, 12
        %v904 = vpop.permute.xlu0 %903
        %905 = vrot.lane.b32.xlu0 %v327, 12
        %v906 = vpop.permute.xlu0 %905
        %907 = vrot.lane.b32.xlu0 %v328, 12
        %v908 = vpop.permute.xlu0 %907
        %909 = vrot.lane.b32.xlu0 %v329, 12
        %v910 = vpop.permute.xlu0 %909
        %911 = vrot.lane.b32.xlu0 %v331, 12
        %v912 = vpop.permute.xlu0 %911
        %913 = vrot.lane.b32.xlu0 %v332, 12
        %v914 = vpop.permute.xlu0 %913
        %915 = vrot.lane.b32.xlu0 %v333, 12
        %v916 = vpop.permute.xlu0 %915
        %917 = vrot.lane.b32.xlu0 %v335, 12
        %v918 = vpop.permute.xlu0 %917
        %919 = vrot.lane.b32.xlu0 %v336, 12
        %v920 = vpop.permute.xlu0 %919
        %921 = vrot.lane.b32.xlu0 %v337, 12
        %v922 = vpop.permute.xlu0 %921
        %v971 = vrot.slane %v336, 1
        %v972 = vrot.slane %v337, 1
        %v973 = vsel %vm375, %v971, %v972
        %974 = vrot.lane.b32.xlu0 %v379, 16
        %v975 = vpop.permute.xlu0 %974
        %976 = vrot.lane.b32.xlu0 %v381, 16
        %v977 = vpop.permute.xlu0 %976
        %978 = vrot.lane.b32.xlu0 %v380, 16
        %v979 = vpop.permute.xlu0 %978
        %980 = vrot.lane.b32.xlu0 %v382, 16
        %v981 = vpop.permute.xlu0 %980
        %982 = vrot.lane.b32.xlu0 %v384, 16
        %v983 = vpop.permute.xlu0 %982
        %984 = vrot.lane.b32.xlu0 %v383, 16
        %v985 = vpop.permute.xlu0 %984
        %986 = vrot.lane.b32.xlu0 %v385, 16
        %v987 = vpop.permute.xlu0 %986
        %988 = vrot.lane.b32.xlu0 %v387, 16
        %v989 = vpop.permute.xlu0 %988
        %990 = vrot.lane.b32.xlu0 %v386, 16
        %v991 = vpop.permute.xlu0 %990
        %992 = vrot.lane.b32.xlu0 %v388, 16
        %v993 = vpop.permute.xlu0 %992
        %994 = vrot.lane.b32.xlu0 %v390, 16
        %v995 = vpop.permute.xlu0 %994
        %996 = vrot.lane.b32.xlu0 %v389, 16
        %v997 = vpop.permute.xlu0 %996
        %998 = vrot.lane.b32.xlu0 %v391, 16
        %v999 = vpop.permute.xlu0 %998
        %1000 = vrot.lane.b32.xlu0 %v393, 16
        %v1001 = vpop.permute.xlu0 %1000
        %1002 = vrot.lane.b32.xlu0 %v392, 16
        %v1003 = vpop.permute.xlu0 %1002
        %1004 = vrot.lane.b32.xlu0 %v394, 16
        %v1005 = vpop.permute.xlu0 %1004
        %1006 = vrot.lane.b32.xlu0 %v396, 16
        %v1007 = vpop.permute.xlu0 %1006
        %1008 = vrot.lane.b32.xlu0 %v395, 16
        %v1009 = vpop.permute.xlu0 %1008
        %1010 = vrot.lane.b32.xlu0 %v397, 16
        %v1011 = vpop.permute.xlu0 %1010
        %1012 = vrot.lane.b32.xlu0 %v399, 16
        %v1013 = vpop.permute.xlu0 %1012
        %1014 = vrot.lane.b32.xlu0 %v398, 16
        %v1015 = vpop.permute.xlu0 %1014
        %1016 = vrot.lane.b32.xlu0 %v400, 16
        %v1017 = vpop.permute.xlu0 %1016
        %1018 = vrot.lane.b32.xlu0 %v402, 16
        %v1019 = vpop.permute.xlu0 %1018
        %1020 = vrot.lane.b32.xlu0 %v401, 16
        %v1021 = vpop.permute.xlu0 %1020
        %1022 = vrot.lane.b32.xlu0 %v403, 16
        %v1023 = vpop.permute.xlu0 %1022
        %1024 = vrot.lane.b32.xlu0 %v405, 16
        %v1025 = vpop.permute.xlu0 %1024
        %1026 = vrot.lane.b32.xlu0 %v404, 16
        %v1027 = vpop.permute.xlu0 %1026
        %1028 = vrot.lane.b32.xlu0 %v406, 16
        %v1029 = vpop.permute.xlu0 %1028
        %1030 = vrot.lane.b32.xlu0 %v408, 16
        %v1031 = vpop.permute.xlu0 %1030
        %1032 = vrot.lane.b32.xlu0 %v407, 16
        %v1033 = vpop.permute.xlu0 %1032
        %1034 = vrot.lane.b32.xlu0 %v409, 16
        %v1035 = vpop.permute.xlu0 %1034
        %1036 = vrot.lane.b32.xlu0 %v411, 16
        %v1037 = vpop.permute.xlu0 %1036
        %1038 = vrot.lane.b32.xlu0 %v410, 16
        %v1039 = vpop.permute.xlu0 %1038
        %1040 = vrot.lane.b32.xlu0 %v412, 16
        %v1041 = vpop.permute.xlu0 %1040
        %1042 = vrot.lane.b32.xlu0 %v414, 16
        %v1043 = vpop.permute.xlu0 %1042
        %1044 = vrot.lane.b32.xlu0 %v413, 16
        %v1045 = vpop.permute.xlu0 %1044
        %1046 = vrot.lane.b32.xlu0 %v415, 16
        %v1047 = vpop.permute.xlu0 %1046
        %1048 = vrot.lane.b32.xlu0 %v417, 16
        %v1049 = vpop.permute.xlu0 %1048
        %1050 = vrot.lane.b32.xlu0 %v416, 16
        %v1051 = vpop.permute.xlu0 %1050
        %1052 = vrot.lane.b32.xlu0 %v418, 16
        %v1053 = vpop.permute.xlu0 %1052
        %1054 = vrot.lane.b32.xlu0 %v420, 16
        %v1055 = vpop.permute.xlu0 %1054
        %1056 = vrot.lane.b32.xlu0 %v419, 16
        %v1057 = vpop.permute.xlu0 %1056
        %1058 = vrot.lane.b32.xlu0 %v421, 16
        %v1059 = vpop.permute.xlu0 %1058
        %1060 = vrot.lane.b32.xlu0 %v423, 16
        %v1061 = vpop.permute.xlu0 %1060
        %1062 = vrot.lane.b32.xlu0 %v422, 16
        %v1063 = vpop.permute.xlu0 %1062
        %1064 = vrot.lane.b32.xlu0 %v971, 16
        %v1065 = vpop.permute.xlu0 %1064
        %1066 = vrot.lane.b32.xlu0 %v973, 16
        %v1067 = vpop.permute.xlu0 %1066
        %1068 = vrot.lane.b32.xlu0 %v972, 16
        %v1069 = vpop.permute.xlu0 %1068
        %v1119 = vrot.slane %v336, 2
        %v1120 = vrot.slane %v337, 2
        %v1121 = vsel %vm584, %v1119, %v1120
        %v1122 = vrot.slane %v338, 2
        %v1123 = vsel %vm584, %v1120, %v1122
        %1124 = vrot.lane.b32.xlu0 %v590, 20
        %v1125 = vpop.permute.xlu0 %1124
        %1126 = vrot.lane.b32.xlu0 %v592, 20
        %v1127 = vpop.permute.xlu0 %1126
        %1128 = vrot.lane.b32.xlu0 %v594, 20
        %v1129 = vpop.permute.xlu0 %1128
        %1130 = vrot.lane.b32.xlu0 %v595, 20
        %v1131 = vpop.permute.xlu0 %1130
        %1132 = vrot.lane.b32.xlu0 %v597, 20
        %v1133 = vpop.permute.xlu0 %1132
        %1134 = vrot.lane.b32.xlu0 %v599, 20
        %v1135 = vpop.permute.xlu0 %1134
        %1136 = vrot.lane.b32.xlu0 %v600, 20
        %v1137 = vpop.permute.xlu0 %1136
        %1138 = vrot.lane.b32.xlu0 %v602, 20
        %v1139 = vpop.permute.xlu0 %1138
        %1140 = vrot.lane.b32.xlu0 %v604, 20
        %v1141 = vpop.permute.xlu0 %1140
        %1142 = vrot.lane.b32.xlu0 %v605, 20
        %v1143 = vpop.permute.xlu0 %1142
        %1144 = vrot.lane.b32.xlu0 %v607, 20
        %v1145 = vpop.permute.xlu0 %1144
        %1146 = vrot.lane.b32.xlu0 %v609, 20
        %v1147 = vpop.permute.xlu0 %1146
        %1148 = vrot.lane.b32.xlu0 %v610, 20
        %v1149 = vpop.permute.xlu0 %1148
        %1150 = vrot.lane.b32.xlu0 %v612, 20
        %v1151 = vpop.permute.xlu0 %1150
        %1152 = vrot.lane.b32.xlu0 %v614, 20
        %v1153 = vpop.permute.xlu0 %1152
        %1154 = vrot.lane.b32.xlu0 %v615, 20
        %v1155 = vpop.permute.xlu0 %1154
        %1156 = vrot.lane.b32.xlu0 %v617, 20
        %v1157 = vpop.permute.xlu0 %1156
        %1158 = vrot.lane.b32.xlu0 %v619, 20
        %v1159 = vpop.permute.xlu0 %1158
        %1160 = vrot.lane.b32.xlu0 %v620, 20
        %v1161 = vpop.permute.xlu0 %1160
        %1162 = vrot.lane.b32.xlu0 %v622, 20
        %v1163 = vpop.permute.xlu0 %1162
        %1164 = vrot.lane.b32.xlu0 %v624, 20
        %v1165 = vpop.permute.xlu0 %1164
        %1166 = vrot.lane.b32.xlu0 %v625, 20
        %v1167 = vpop.permute.xlu0 %1166
        %1168 = vrot.lane.b32.xlu0 %v627, 20
        %v1169 = vpop.permute.xlu0 %1168
        %1170 = vrot.lane.b32.xlu0 %v629, 20
        %v1171 = vpop.permute.xlu0 %1170
        %1172 = vrot.lane.b32.xlu0 %v630, 20
        %v1173 = vpop.permute.xlu0 %1172
        %1174 = vrot.lane.b32.xlu0 %v632, 20
        %v1175 = vpop.permute.xlu0 %1174
        %1176 = vrot.lane.b32.xlu0 %v634, 20
        %v1177 = vpop.permute.xlu0 %1176
        %1178 = vrot.lane.b32.xlu0 %v635, 20
        %v1179 = vpop.permute.xlu0 %1178
        %1180 = vrot.lane.b32.xlu0 %v637, 20
        %v1181 = vpop.permute.xlu0 %1180
        %1182 = vrot.lane.b32.xlu0 %v639, 20
        %v1183 = vpop.permute.xlu0 %1182
        %1184 = vrot.lane.b32.xlu0 %v640, 20
        %v1185 = vpop.permute.xlu0 %1184
        %1186 = vrot.lane.b32.xlu0 %v642, 20
        %v1187 = vpop.permute.xlu0 %1186
        %1188 = vrot.lane.b32.xlu0 %v644, 20
        %v1189 = vpop.permute.xlu0 %1188
        %1190 = vrot.lane.b32.xlu0 %v645, 20
        %v1191 = vpop.permute.xlu0 %1190
        %1192 = vrot.lane.b32.xlu0 %v647, 20
        %v1193 = vpop.permute.xlu0 %1192
        %1194 = vrot.lane.b32.xlu0 %v649, 20
        %v1195 = vpop.permute.xlu0 %1194
        %1196 = vrot.lane.b32.xlu0 %v650, 20
        %v1197 = vpop.permute.xlu0 %1196
        %1198 = vrot.lane.b32.xlu0 %v652, 20
        %v1199 = vpop.permute.xlu0 %1198
        %1200 = vrot.lane.b32.xlu0 %v654, 20
        %v1201 = vpop.permute.xlu0 %1200
        %1202 = vrot.lane.b32.xlu0 %v655, 20
        %v1203 = vpop.permute.xlu0 %1202
        %1204 = vrot.lane.b32.xlu0 %v657, 20
        %v1205 = vpop.permute.xlu0 %1204
        %1206 = vrot.lane.b32.xlu0 %v659, 20
        %v1207 = vpop.permute.xlu0 %1206
        %1208 = vrot.lane.b32.xlu0 %v660, 20
        %v1209 = vpop.permute.xlu0 %1208
        %1210 = vrot.lane.b32.xlu0 %v662, 20
        %v1211 = vpop.permute.xlu0 %1210
        %1212 = vrot.lane.b32.xlu0 %v664, 20
        %v1213 = vpop.permute.xlu0 %1212
        %1214 = vrot.lane.b32.xlu0 %v1119, 20
        %v1215 = vpop.permute.xlu0 %1214
        %1216 = vrot.lane.b32.xlu0 %v1121, 20
        %v1217 = vpop.permute.xlu0 %1216
        %1218 = vrot.lane.b32.xlu0 %v1123, 20
        %v1219 = vpop.permute.xlu0 %1218
        %1271 = vrot.lane.b32.xlu0 %v279, 24
        %v1272 = vpop.permute.xlu0 %1271
        %1273 = vrot.lane.b32.xlu0 %v280, 24
        %v1274 = vpop.permute.xlu0 %1273
        %1275 = vrot.lane.b32.xlu0 %v281, 24
        %v1276 = vpop.permute.xlu0 %1275
        %1277 = vrot.lane.b32.xlu0 %v283, 24
        %v1278 = vpop.permute.xlu0 %1277
        %1279 = vrot.lane.b32.xlu0 %v284, 24
        %v1280 = vpop.permute.xlu0 %1279
        %1281 = vrot.lane.b32.xlu0 %v285, 24
        %v1282 = vpop.permute.xlu0 %1281
        %1283 = vrot.lane.b32.xlu0 %v287, 24
        %v1284 = vpop.permute.xlu0 %1283
        %1285 = vrot.lane.b32.xlu0 %v288, 24
        %v1286 = vpop.permute.xlu0 %1285
        %1287 = vrot.lane.b32.xlu0 %v289, 24
        %v1288 = vpop.permute.xlu0 %1287
        %1289 = vrot.lane.b32.xlu0 %v291, 24
        %v1290 = vpop.permute.xlu0 %1289
        %1291 = vrot.lane.b32.xlu0 %v292, 24
        %v1292 = vpop.permute.xlu0 %1291
        %1293 = vrot.lane.b32.xlu0 %v293, 24
        %v1294 = vpop.permute.xlu0 %1293
        %1295 = vrot.lane.b32.xlu0 %v295, 24
        %v1296 = vpop.permute.xlu0 %1295
        %1297 = vrot.lane.b32.xlu0 %v296, 24
        %v1298 = vpop.permute.xlu0 %1297
        %1299 = vrot.lane.b32.xlu0 %v297, 24
        %v1300 = vpop.permute.xlu0 %1299
        %1301 = vrot.lane.b32.xlu0 %v299, 24
        %v1302 = vpop.permute.xlu0 %1301
        %1303 = vrot.lane.b32.xlu0 %v300, 24
        %v1304 = vpop.permute.xlu0 %1303
        %1305 = vrot.lane.b32.xlu0 %v301, 24
        %v1306 = vpop.permute.xlu0 %1305
        %1307 = vrot.lane.b32.xlu0 %v303, 24
        %v1308 = vpop.permute.xlu0 %1307
        %1309 = vrot.lane.b32.xlu0 %v304, 24
        %v1310 = vpop.permute.xlu0 %1309
        %1311 = vrot.lane.b32.xlu0 %v305, 24
        %v1312 = vpop.permute.xlu0 %1311
        %1313 = vrot.lane.b32.xlu0 %v307, 24
        %v1314 = vpop.permute.xlu0 %1313
        %1315 = vrot.lane.b32.xlu0 %v308, 24
        %v1316 = vpop.permute.xlu0 %1315
        %1317 = vrot.lane.b32.xlu0 %v309, 24
        %v1318 = vpop.permute.xlu0 %1317
        %1319 = vrot.lane.b32.xlu0 %v311, 24
        %v1320 = vpop.permute.xlu0 %1319
        %1321 = vrot.lane.b32.xlu0 %v312, 24
        %v1322 = vpop.permute.xlu0 %1321
        %1323 = vrot.lane.b32.xlu0 %v313, 24
        %v1324 = vpop.permute.xlu0 %1323
        %1325 = vrot.lane.b32.xlu0 %v315, 24
        %v1326 = vpop.permute.xlu0 %1325
        %1327 = vrot.lane.b32.xlu0 %v316, 24
        %v1328 = vpop.permute.xlu0 %1327
        %1329 = vrot.lane.b32.xlu0 %v317, 24
        %v1330 = vpop.permute.xlu0 %1329
        %1331 = vrot.lane.b32.xlu0 %v319, 24
        %v1332 = vpop.permute.xlu0 %1331
        %1333 = vrot.lane.b32.xlu0 %v320, 24
        %v1334 = vpop.permute.xlu0 %1333
        %1335 = vrot.lane.b32.xlu0 %v321, 24
        %v1336 = vpop.permute.xlu0 %1335
        %1337 = vrot.lane.b32.xlu0 %v323, 24
        %v1338 = vpop.permute.xlu0 %1337
        %1339 = vrot.lane.b32.xlu0 %v324, 24
        %v1340 = vpop.permute.xlu0 %1339
        %1341 = vrot.lane.b32.xlu0 %v325, 24
        %v1342 = vpop.permute.xlu0 %1341
        %1343 = vrot.lane.b32.xlu0 %v327, 24
        %v1344 = vpop.permute.xlu0 %1343
        %1345 = vrot.lane.b32.xlu0 %v328, 24
        %v1346 = vpop.permute.xlu0 %1345
        %1347 = vrot.lane.b32.xlu0 %v329, 24
        %v1348 = vpop.permute.xlu0 %1347
        %1349 = vrot.lane.b32.xlu0 %v331, 24
        %v1350 = vpop.permute.xlu0 %1349
        %1351 = vrot.lane.b32.xlu0 %v332, 24
        %v1352 = vpop.permute.xlu0 %1351
        %1353 = vrot.lane.b32.xlu0 %v333, 24
        %v1354 = vpop.permute.xlu0 %1353
        %1355 = vrot.lane.b32.xlu0 %v335, 24
        %v1356 = vpop.permute.xlu0 %1355
        %1357 = vrot.lane.b32.xlu0 %v336, 24
        %v1358 = vpop.permute.xlu0 %1357
        %1359 = vrot.lane.b32.xlu0 %v337, 24
        %v1360 = vpop.permute.xlu0 %1359
        %1361 = vrot.lane.b32.xlu0 %v339, 24
        %v1362 = vpop.permute.xlu0 %1361
        %1363 = vrot.lane.b32.xlu0 %v340, 24
        %v1364 = vpop.permute.xlu0 %1363
        %1365 = vrot.lane.b32.xlu0 %v341, 24
        %v1366 = vpop.permute.xlu0 %1365
        %v1415 = vrot.slane %v340, 1
        %v1416 = vrot.slane %v341, 1
        %v1417 = vsel %vm375, %v1415, %v1416
        %1418 = vrot.lane.b32.xlu0 %v382, 28
        %v1419 = vpop.permute.xlu0 %1418
        %1420 = vrot.lane.b32.xlu0 %v384, 28
        %v1421 = vpop.permute.xlu0 %1420
        %1422 = vrot.lane.b32.xlu0 %v383, 28
        %v1423 = vpop.permute.xlu0 %1422
        %1424 = vrot.lane.b32.xlu0 %v385, 28
        %v1425 = vpop.permute.xlu0 %1424
        %1426 = vrot.lane.b32.xlu0 %v387, 28
        %v1427 = vpop.permute.xlu0 %1426
        %1428 = vrot.lane.b32.xlu0 %v386, 28
        %v1429 = vpop.permute.xlu0 %1428
        %1430 = vrot.lane.b32.xlu0 %v388, 28
        %v1431 = vpop.permute.xlu0 %1430
        %1432 = vrot.lane.b32.xlu0 %v390, 28
        %v1433 = vpop.permute.xlu0 %1432
        %1434 = vrot.lane.b32.xlu0 %v389, 28
        %v1435 = vpop.permute.xlu0 %1434
        %1436 = vrot.lane.b32.xlu0 %v391, 28
        %v1437 = vpop.permute.xlu0 %1436
        %1438 = vrot.lane.b32.xlu0 %v393, 28
        %v1439 = vpop.permute.xlu0 %1438
        %1440 = vrot.lane.b32.xlu0 %v392, 28
        %v1441 = vpop.permute.xlu0 %1440
        %1442 = vrot.lane.b32.xlu0 %v394, 28
        %v1443 = vpop.permute.xlu0 %1442
        %1444 = vrot.lane.b32.xlu0 %v396, 28
        %v1445 = vpop.permute.xlu0 %1444
        %1446 = vrot.lane.b32.xlu0 %v395, 28
        %v1447 = vpop.permute.xlu0 %1446
        %1448 = vrot.lane.b32.xlu0 %v397, 28
        %v1449 = vpop.permute.xlu0 %1448
        %1450 = vrot.lane.b32.xlu0 %v399, 28
        %v1451 = vpop.permute.xlu0 %1450
        %1452 = vrot.lane.b32.xlu0 %v398, 28
        %v1453 = vpop.permute.xlu0 %1452
        %1454 = vrot.lane.b32.xlu0 %v400, 28
        %v1455 = vpop.permute.xlu0 %1454
        %1456 = vrot.lane.b32.xlu0 %v402, 28
        %v1457 = vpop.permute.xlu0 %1456
        %1458 = vrot.lane.b32.xlu0 %v401, 28
        %v1459 = vpop.permute.xlu0 %1458
        %1460 = vrot.lane.b32.xlu0 %v403, 28
        %v1461 = vpop.permute.xlu0 %1460
        %1462 = vrot.lane.b32.xlu0 %v405, 28
        %v1463 = vpop.permute.xlu0 %1462
        %1464 = vrot.lane.b32.xlu0 %v404, 28
        %v1465 = vpop.permute.xlu0 %1464
        %1466 = vrot.lane.b32.xlu0 %v406, 28
        %v1467 = vpop.permute.xlu0 %1466
        %1468 = vrot.lane.b32.xlu0 %v408, 28
        %v1469 = vpop.permute.xlu0 %1468
        %1470 = vrot.lane.b32.xlu0 %v407, 28
        %v1471 = vpop.permute.xlu0 %1470
        %1472 = vrot.lane.b32.xlu0 %v409, 28
        %v1473 = vpop.permute.xlu0 %1472
        %1474 = vrot.lane.b32.xlu0 %v411, 28
        %v1475 = vpop.permute.xlu0 %1474
        %1476 = vrot.lane.b32.xlu0 %v410, 28
        %v1477 = vpop.permute.xlu0 %1476
        %1478 = vrot.lane.b32.xlu0 %v412, 28
        %v1479 = vpop.permute.xlu0 %1478
        %1480 = vrot.lane.b32.xlu0 %v414, 28
        %v1481 = vpop.permute.xlu0 %1480
        %1482 = vrot.lane.b32.xlu0 %v413, 28
        %v1483 = vpop.permute.xlu0 %1482
        %1484 = vrot.lane.b32.xlu0 %v415, 28
        %v1485 = vpop.permute.xlu0 %1484
        %1486 = vrot.lane.b32.xlu0 %v417, 28
        %v1487 = vpop.permute.xlu0 %1486
        %1488 = vrot.lane.b32.xlu0 %v416, 28
        %v1489 = vpop.permute.xlu0 %1488
        %1490 = vrot.lane.b32.xlu0 %v418, 28
        %v1491 = vpop.permute.xlu0 %1490
        %1492 = vrot.lane.b32.xlu0 %v420, 28
        %v1493 = vpop.permute.xlu0 %1492
        %1494 = vrot.lane.b32.xlu0 %v419, 28
        %v1495 = vpop.permute.xlu0 %1494
        %1496 = vrot.lane.b32.xlu0 %v421, 28
        %v1497 = vpop.permute.xlu0 %1496
        %1498 = vrot.lane.b32.xlu0 %v423, 28
        %v1499 = vpop.permute.xlu0 %1498
        %1500 = vrot.lane.b32.xlu0 %v422, 28
        %v1501 = vpop.permute.xlu0 %1500
        %1502 = vrot.lane.b32.xlu0 %v971, 28
        %v1503 = vpop.permute.xlu0 %1502
        %1504 = vrot.lane.b32.xlu0 %v973, 28
        %v1505 = vpop.permute.xlu0 %1504
        %1506 = vrot.lane.b32.xlu0 %v972, 28
        %v1507 = vpop.permute.xlu0 %1506
        %1508 = vrot.lane.b32.xlu0 %v1415, 28
        %v1509 = vpop.permute.xlu0 %1508
        %1510 = vrot.lane.b32.xlu0 %v1417, 28
        %v1511 = vpop.permute.xlu0 %1510
        %1512 = vrot.lane.b32.xlu0 %v1416, 28
        %v1513 = vpop.permute.xlu0 %1512
        %v1563 = vrot.slane %v340, 2
        %v1564 = vrot.slane %v341, 2
        %v1565 = vsel %vm584, %v1563, %v1564
        %v1566 = vrot.slane %v342, 2
        %v1567 = vsel %vm584, %v1564, %v1566
        %1568 = vrot.lane.b32.xlu0 %v595, 32
        %v1569 = vpop.permute.xlu0 %1568
        %1570 = vrot.lane.b32.xlu0 %v597, 32
        %v1571 = vpop.permute.xlu0 %1570
        %1572 = vrot.lane.b32.xlu0 %v599, 32
        %v1573 = vpop.permute.xlu0 %1572
        %1574 = vrot.lane.b32.xlu0 %v600, 32
        %v1575 = vpop.permute.xlu0 %1574
        %1576 = vrot.lane.b32.xlu0 %v602, 32
        %v1577 = vpop.permute.xlu0 %1576
        %1578 = vrot.lane.b32.xlu0 %v604, 32
        %v1579 = vpop.permute.xlu0 %1578
        %1580 = vrot.lane.b32.xlu0 %v605, 32
        %v1581 = vpop.permute.xlu0 %1580
        %1582 = vrot.lane.b32.xlu0 %v607, 32
        %v1583 = vpop.permute.xlu0 %1582
        %1584 = vrot.lane.b32.xlu0 %v609, 32
        %v1585 = vpop.permute.xlu0 %1584
        %1586 = vrot.lane.b32.xlu0 %v610, 32
        %v1587 = vpop.permute.xlu0 %1586
        %1588 = vrot.lane.b32.xlu0 %v612, 32
        %v1589 = vpop.permute.xlu0 %1588
        %1590 = vrot.lane.b32.xlu0 %v614, 32
        %v1591 = vpop.permute.xlu0 %1590
        %1592 = vrot.lane.b32.xlu0 %v615, 32
        %v1593 = vpop.permute.xlu0 %1592
        %1594 = vrot.lane.b32.xlu0 %v617, 32
        %v1595 = vpop.permute.xlu0 %1594
        %1596 = vrot.lane.b32.xlu0 %v619, 32
        %v1597 = vpop.permute.xlu0 %1596
        %1598 = vrot.lane.b32.xlu0 %v620, 32
        %v1599 = vpop.permute.xlu0 %1598
        %1600 = vrot.lane.b32.xlu0 %v622, 32
        %v1601 = vpop.permute.xlu0 %1600
        %1602 = vrot.lane.b32.xlu0 %v624, 32
        %v1603 = vpop.permute.xlu0 %1602
        %1604 = vrot.lane.b32.xlu0 %v625, 32
        %v1605 = vpop.permute.xlu0 %1604
        %1606 = vrot.lane.b32.xlu0 %v627, 32
        %v1607 = vpop.permute.xlu0 %1606
        %1608 = vrot.lane.b32.xlu0 %v629, 32
        %v1609 = vpop.permute.xlu0 %1608
        %1610 = vrot.lane.b32.xlu0 %v630, 32
        %v1611 = vpop.permute.xlu0 %1610
        %1612 = vrot.lane.b32.xlu0 %v632, 32
        %v1613 = vpop.permute.xlu0 %1612
        %1614 = vrot.lane.b32.xlu0 %v634, 32
        %v1615 = vpop.permute.xlu0 %1614
        %1616 = vrot.lane.b32.xlu0 %v635, 32
        %v1617 = vpop.permute.xlu0 %1616
        %1618 = vrot.lane.b32.xlu0 %v637, 32
        %v1619 = vpop.permute.xlu0 %1618
        %1620 = vrot.lane.b32.xlu0 %v639, 32
        %v1621 = vpop.permute.xlu0 %1620
        %1622 = vrot.lane.b32.xlu0 %v640, 32
        %v1623 = vpop.permute.xlu0 %1622
        %1624 = vrot.lane.b32.xlu0 %v642, 32
        %v1625 = vpop.permute.xlu0 %1624
        %1626 = vrot.lane.b32.xlu0 %v644, 32
        %v1627 = vpop.permute.xlu0 %1626
        %1628 = vrot.lane.b32.xlu0 %v645, 32
        %v1629 = vpop.permute.xlu0 %1628
        %1630 = vrot.lane.b32.xlu0 %v647, 32
        %v1631 = vpop.permute.xlu0 %1630
        %1632 = vrot.lane.b32.xlu0 %v649, 32
        %v1633 = vpop.permute.xlu0 %1632
        %1634 = vrot.lane.b32.xlu0 %v650, 32
        %v1635 = vpop.permute.xlu0 %1634
        %1636 = vrot.lane.b32.xlu0 %v652, 32
        %v1637 = vpop.permute.xlu0 %1636
        %1638 = vrot.lane.b32.xlu0 %v654, 32
        %v1639 = vpop.permute.xlu0 %1638
        %1640 = vrot.lane.b32.xlu0 %v655, 32
        %v1641 = vpop.permute.xlu0 %1640
        %1642 = vrot.lane.b32.xlu0 %v657, 32
        %v1643 = vpop.permute.xlu0 %1642
        %1644 = vrot.lane.b32.xlu0 %v659, 32
        %v1645 = vpop.permute.xlu0 %1644
        %1646 = vrot.lane.b32.xlu0 %v660, 32
        %v1647 = vpop.permute.xlu0 %1646
        %1648 = vrot.lane.b32.xlu0 %v662, 32
        %v1649 = vpop.permute.xlu0 %1648
        %1650 = vrot.lane.b32.xlu0 %v664, 32
        %v1651 = vpop.permute.xlu0 %1650
        %1652 = vrot.lane.b32.xlu0 %v1119, 32
        %v1653 = vpop.permute.xlu0 %1652
        %1654 = vrot.lane.b32.xlu0 %v1121, 32
        %v1655 = vpop.permute.xlu0 %1654
        %1656 = vrot.lane.b32.xlu0 %v1123, 32
        %v1657 = vpop.permute.xlu0 %1656
        %1658 = vrot.lane.b32.xlu0 %v1563, 32
        %v1659 = vpop.permute.xlu0 %1658
        %1660 = vrot.lane.b32.xlu0 %v1565, 32
        %v1661 = vpop.permute.xlu0 %1660
        %1662 = vrot.lane.b32.xlu0 %v1567, 32
        %v1663 = vpop.permute.xlu0 %1662
        %vm1712 = vcmask 31744
        %v1713 = vsel %vm1712, %v271, %v425
        %v1714 = vsel %vm1712, %v272, %v427
        %v1715 = vsel %vm1712, %v273, %v429
        %v1716 = vsel %vm1712, %v275, %v431
        %v1717 = vsel %vm1712, %v276, %v433
        %v1718 = vsel %vm1712, %v277, %v435
        %v1719 = vsel %vm1712, %v279, %v437
        %v1720 = vsel %vm1712, %v280, %v439
        %v1721 = vsel %vm1712, %v281, %v441
        %v1722 = vsel %vm1712, %v283, %v443
        %v1723 = vsel %vm1712, %v284, %v445
        %v1724 = vsel %vm1712, %v285, %v447
        %v1725 = vsel %vm1712, %v287, %v449
        %v1726 = vsel %vm1712, %v288, %v451
        %v1727 = vsel %vm1712, %v289, %v453
        %v1728 = vsel %vm1712, %v291, %v455
        %v1729 = vsel %vm1712, %v292, %v457
        %v1730 = vsel %vm1712, %v293, %v459
        %v1731 = vsel %vm1712, %v295, %v461
        %v1732 = vsel %vm1712, %v296, %v463
        %v1733 = vsel %vm1712, %v297, %v465
        %v1734 = vsel %vm1712, %v299, %v467
        %v1735 = vsel %vm1712, %v300, %v469
        %v1736 = vsel %vm1712, %v301, %v471
        %v1737 = vsel %vm1712, %v303, %v473
        %v1738 = vsel %vm1712, %v304, %v475
        %v1739 = vsel %vm1712, %v305, %v477
        %v1740 = vsel %vm1712, %v307, %v479
        %v1741 = vsel %vm1712, %v308, %v481
        %v1742 = vsel %vm1712, %v309, %v483
        %v1743 = vsel %vm1712, %v311, %v485
        %v1744 = vsel %vm1712, %v312, %v487
        %v1745 = vsel %vm1712, %v313, %v489
        %v1746 = vsel %vm1712, %v315, %v491
        %v1747 = vsel %vm1712, %v316, %v493
        %v1748 = vsel %vm1712, %v317, %v495
        %v1749 = vsel %vm1712, %v319, %v497
        %v1750 = vsel %vm1712, %v320, %v499
        %v1751 = vsel %vm1712, %v321, %v501
        %v1752 = vsel %vm1712, %v323, %v503
        %v1753 = vsel %vm1712, %v324, %v505
        %v1754 = vsel %vm1712, %v325, %v507
        %v1755 = vsel %vm1712, %v327, %v509
        %v1756 = vsel %vm1712, %v328, %v511
        %v1757 = vsel %vm1712, %v329, %v513
        %v1758 = vsel %vm1712, %v331, %v515
        %v1759 = vsel %vm1712, %v332, %v517
        %v1760 = vsel %vm1712, %v333, %v519
        %vm1761 = vcmask 64512
        %v1762 = vsel %vm1761, %v1713, %v666
        %v1763 = vsel %vm1761, %v1714, %v668
        %v1764 = vsel %vm1761, %v1715, %v670
        %v1765 = vsel %vm1761, %v1716, %v672
        %v1766 = vsel %vm1761, %v1717, %v674
        %v1767 = vsel %vm1761, %v1718, %v676
        %v1768 = vsel %vm1761, %v1719, %v678
        %v1769 = vsel %vm1761, %v1720, %v680
        %v1770 = vsel %vm1761, %v1721, %v682
        %v1771 = vsel %vm1761, %v1722, %v684
        %v1772 = vsel %vm1761, %v1723, %v686
        %v1773 = vsel %vm1761, %v1724, %v688
        %v1774 = vsel %vm1761, %v1725, %v690
        %v1775 = vsel %vm1761, %v1726, %v692
        %v1776 = vsel %vm1761, %v1727, %v694
        %v1777 = vsel %vm1761, %v1728, %v696
        %v1778 = vsel %vm1761, %v1729, %v698
        %v1779 = vsel %vm1761, %v1730, %v700
        %v1780 = vsel %vm1761, %v1731, %v702
        %v1781 = vsel %vm1761, %v1732, %v704
        %v1782 = vsel %vm1761, %v1733, %v706
        %v1783 = vsel %vm1761, %v1734, %v708
        %v1784 = vsel %vm1761, %v1735, %v710
        %v1785 = vsel %vm1761, %v1736, %v712
        %v1786 = vsel %vm1761, %v1737, %v714
        %v1787 = vsel %vm1761, %v1738, %v716
        %v1788 = vsel %vm1761, %v1739, %v718
        %v1789 = vsel %vm1761, %v1740, %v720
        %v1790 = vsel %vm1761, %v1741, %v722
        %v1791 = vsel %vm1761, %v1742, %v724
        %v1792 = vsel %vm1761, %v1743, %v726
        %v1793 = vsel %vm1761, %v1744, %v728
        %v1794 = vsel %vm1761, %v1745, %v730
        %v1795 = vsel %vm1761, %v1746, %v732
        %v1796 = vsel %vm1761, %v1747, %v734
        %v1797 = vsel %vm1761, %v1748, %v736
        %v1798 = vsel %vm1761, %v1749, %v738
        %v1799 = vsel %vm1761, %v1750, %v740
        %v1800 = vsel %vm1761, %v1751, %v742
        %v1801 = vsel %vm1761, %v1752, %v744
        %v1802 = vsel %vm1761, %v1753, %v746
        %v1803 = vsel %vm1761, %v1754, %v748
        %v1804 = vsel %vm1761, %v1755, %v750
        %v1805 = vsel %vm1761, %v1756, %v752
        %v1806 = vsel %vm1761, %v1757, %v754
        %v1807 = vsel %vm1761, %v1758, %v756
        %v1808 = vsel %vm1761, %v1759, %v758
        %v1809 = vsel %vm1761, %v1760, %v760
        %vm1810 = vcmask 97280
        %v1811 = vsel %vm1810, %v1762, %v828
        %v1812 = vsel %vm1810, %v1763, %v830
        %v1813 = vsel %vm1810, %v1764, %v832
        %v1814 = vsel %vm1810, %v1765, %v834
        %v1815 = vsel %vm1810, %v1766, %v836
        %v1816 = vsel %vm1810, %v1767, %v838
        %v1817 = vsel %vm1810, %v1768, %v840
        %v1818 = vsel %vm1810, %v1769, %v842
        %v1819 = vsel %vm1810, %v1770, %v844
        %v1820 = vsel %vm1810, %v1771, %v846
        %v1821 = vsel %vm1810, %v1772, %v848
        %v1822 = vsel %vm1810, %v1773, %v850
        %v1823 = vsel %vm1810, %v1774, %v852
        %v1824 = vsel %vm1810, %v1775, %v854
        %v1825 = vsel %vm1810, %v1776, %v856
        %v1826 = vsel %vm1810, %v1777, %v858
        %v1827 = vsel %vm1810, %v1778, %v860
        %v1828 = vsel %vm1810, %v1779, %v862
        %v1829 = vsel %vm1810, %v1780, %v864
        %v1830 = vsel %vm1810, %v1781, %v866
        %v1831 = vsel %vm1810, %v1782, %v868
        %v1832 = vsel %vm1810, %v1783, %v870
        %v1833 = vsel %vm1810, %v1784, %v872
        %v1834 = vsel %vm1810, %v1785, %v874
        %v1835 = vsel %vm1810, %v1786, %v876
        %v1836 = vsel %vm1810, %v1787, %v878
        %v1837 = vsel %vm1810, %v1788, %v880
        %v1838 = vsel %vm1810, %v1789, %v882
        %v1839 = vsel %vm1810, %v1790, %v884
        %v1840 = vsel %vm1810, %v1791, %v886
        %v1841 = vsel %vm1810, %v1792, %v888
        %v1842 = vsel %vm1810, %v1793, %v890
        %v1843 = vsel %vm1810, %v1794, %v892
        %v1844 = vsel %vm1810, %v1795, %v894
        %v1845 = vsel %vm1810, %v1796, %v896
        %v1846 = vsel %vm1810, %v1797, %v898
        %v1847 = vsel %vm1810, %v1798, %v900
        %v1848 = vsel %vm1810, %v1799, %v902
        %v1849 = vsel %vm1810, %v1800, %v904
        %v1850 = vsel %vm1810, %v1801, %v906
        %v1851 = vsel %vm1810, %v1802, %v908
        %v1852 = vsel %vm1810, %v1803, %v910
        %v1853 = vsel %vm1810, %v1804, %v912
        %v1854 = vsel %vm1810, %v1805, %v914
        %v1855 = vsel %vm1810, %v1806, %v916
        %v1856 = vsel %vm1810, %v1807, %v918
        %v1857 = vsel %vm1810, %v1808, %v920
        %v1858 = vsel %vm1810, %v1809, %v922
        %vm1859 = vcmask 130048
        %v1860 = vsel %vm1859, %v1811, %v975
        %v1861 = vsel %vm1859, %v1812, %v977
        %v1862 = vsel %vm1859, %v1813, %v979
        %v1863 = vsel %vm1859, %v1814, %v981
        %v1864 = vsel %vm1859, %v1815, %v983
        %v1865 = vsel %vm1859, %v1816, %v985
        %v1866 = vsel %vm1859, %v1817, %v987
        %v1867 = vsel %vm1859, %v1818, %v989
        %v1868 = vsel %vm1859, %v1819, %v991
        %v1869 = vsel %vm1859, %v1820, %v993
        %v1870 = vsel %vm1859, %v1821, %v995
        %v1871 = vsel %vm1859, %v1822, %v997
        %v1872 = vsel %vm1859, %v1823, %v999
        %v1873 = vsel %vm1859, %v1824, %v1001
        %v1874 = vsel %vm1859, %v1825, %v1003
        %v1875 = vsel %vm1859, %v1826, %v1005
        %v1876 = vsel %vm1859, %v1827, %v1007
        %v1877 = vsel %vm1859, %v1828, %v1009
        %v1878 = vsel %vm1859, %v1829, %v1011
        %v1879 = vsel %vm1859, %v1830, %v1013
        %v1880 = vsel %vm1859, %v1831, %v1015
        %v1881 = vsel %vm1859, %v1832, %v1017
        %v1882 = vsel %vm1859, %v1833, %v1019
        %v1883 = vsel %vm1859, %v1834, %v1021
        %v1884 = vsel %vm1859, %v1835, %v1023
        %v1885 = vsel %vm1859, %v1836, %v1025
        %v1886 = vsel %vm1859, %v1837, %v1027
        %v1887 = vsel %vm1859, %v1838, %v1029
        %v1888 = vsel %vm1859, %v1839, %v1031
        %v1889 = vsel %vm1859, %v1840, %v1033
        %v1890 = vsel %vm1859, %v1841, %v1035
        %v1891 = vsel %vm1859, %v1842, %v1037
        %v1892 = vsel %vm1859, %v1843, %v1039
        %v1893 = vsel %vm1859, %v1844, %v1041
        %v1894 = vsel %vm1859, %v1845, %v1043
        %v1895 = vsel %vm1859, %v1846, %v1045
        %v1896 = vsel %vm1859, %v1847, %v1047
        %v1897 = vsel %vm1859, %v1848, %v1049
        %v1898 = vsel %vm1859, %v1849, %v1051
        %v1899 = vsel %vm1859, %v1850, %v1053
        %v1900 = vsel %vm1859, %v1851, %v1055
        %v1901 = vsel %vm1859, %v1852, %v1057
        %v1902 = vsel %vm1859, %v1853, %v1059
        %v1903 = vsel %vm1859, %v1854, %v1061
        %v1904 = vsel %vm1859, %v1855, %v1063
        %v1905 = vsel %vm1859, %v1856, %v1065
        %v1906 = vsel %vm1859, %v1857, %v1067
        %v1907 = vsel %vm1859, %v1858, %v1069
        %vm1908 = vcmask 162816
        %v1909 = vsel %vm1908, %v1860, %v1125
        %v1910 = vsel %vm1908, %v1861, %v1127
        %v1911 = vsel %vm1908, %v1862, %v1129
        %v1912 = vsel %vm1908, %v1863, %v1131
        %v1913 = vsel %vm1908, %v1864, %v1133
        %v1914 = vsel %vm1908, %v1865, %v1135
        %v1915 = vsel %vm1908, %v1866, %v1137
        %v1916 = vsel %vm1908, %v1867, %v1139
        %v1917 = vsel %vm1908, %v1868, %v1141
        %v1918 = vsel %vm1908, %v1869, %v1143
        %v1919 = vsel %vm1908, %v1870, %v1145
        %v1920 = vsel %vm1908, %v1871, %v1147
        %v1921 = vsel %vm1908, %v1872, %v1149
        %v1922 = vsel %vm1908, %v1873, %v1151
        %v1923 = vsel %vm1908, %v1874, %v1153
        %v1924 = vsel %vm1908, %v1875, %v1155
        %v1925 = vsel %vm1908, %v1876, %v1157
        %v1926 = vsel %vm1908, %v1877, %v1159
        %v1927 = vsel %vm1908, %v1878, %v1161
        %v1928 = vsel %vm1908, %v1879, %v1163
        %v1929 = vsel %vm1908, %v1880, %v1165
        %v1930 = vsel %vm1908, %v1881, %v1167
        %v1931 = vsel %vm1908, %v1882, %v1169
        %v1932 = vsel %vm1908, %v1883, %v1171
        %v1933 = vsel %vm1908, %v1884, %v1173
        %v1934 = vsel %vm1908, %v1885, %v1175
        %v1935 = vsel %vm1908, %v1886, %v1177
        %v1936 = vsel %vm1908, %v1887, %v1179
        %v1937 = vsel %vm1908, %v1888, %v1181
        %v1938 = vsel %vm1908, %v1889, %v1183
        %v1939 = vsel %vm1908, %v1890, %v1185
        %v1940 = vsel %vm1908, %v1891, %v1187
        %v1941 = vsel %vm1908, %v1892, %v1189
        %v1942 = vsel %vm1908, %v1893, %v1191
        %v1943 = vsel %vm1908, %v1894, %v1193
        %v1944 = vsel %vm1908, %v1895, %v1195
        %v1945 = vsel %vm1908, %v1896, %v1197
        %v1946 = vsel %vm1908, %v1897, %v1199
        %v1947 = vsel %vm1908, %v1898, %v1201
        %v1948 = vsel %vm1908, %v1899, %v1203
        %v1949 = vsel %vm1908, %v1900, %v1205
        %v1950 = vsel %vm1908, %v1901, %v1207
        %v1951 = vsel %vm1908, %v1902, %v1209
        %v1952 = vsel %vm1908, %v1903, %v1211
        %v1953 = vsel %vm1908, %v1904, %v1213
        %v1954 = vsel %vm1908, %v1905, %v1215
        %v1955 = vsel %vm1908, %v1906, %v1217
        %v1956 = vsel %vm1908, %v1907, %v1219
        %vm1957 = vcmask 195584
        %v1958 = vsel %vm1957, %v1909, %v1272
        %v1959 = vsel %vm1957, %v1910, %v1274
        %v1960 = vsel %vm1957, %v1911, %v1276
        %v1961 = vsel %vm1957, %v1912, %v1278
        %v1962 = vsel %vm1957, %v1913, %v1280
        %v1963 = vsel %vm1957, %v1914, %v1282
        %v1964 = vsel %vm1957, %v1915, %v1284
        %v1965 = vsel %vm1957, %v1916, %v1286
        %v1966 = vsel %vm1957, %v1917, %v1288
        %v1967 = vsel %vm1957, %v1918, %v1290
        %v1968 = vsel %vm1957, %v1919, %v1292
        %v1969 = vsel %vm1957, %v1920, %v1294
        %v1970 = vsel %vm1957, %v1921, %v1296
        %v1971 = vsel %vm1957, %v1922, %v1298
        %v1972 = vsel %vm1957, %v1923, %v1300
        %v1973 = vsel %vm1957, %v1924, %v1302
        %v1974 = vsel %vm1957, %v1925, %v1304
        %v1975 = vsel %vm1957, %v1926, %v1306
        %v1976 = vsel %vm1957, %v1927, %v1308
        %v1977 = vsel %vm1957, %v1928, %v1310
        %v1978 = vsel %vm1957, %v1929, %v1312
        %v1979 = vsel %vm1957, %v1930, %v1314
        %v1980 = vsel %vm1957, %v1931, %v1316
        %v1981 = vsel %vm1957, %v1932, %v1318
        %v1982 = vsel %vm1957, %v1933, %v1320
        %v1983 = vsel %vm1957, %v1934, %v1322
        %v1984 = vsel %vm1957, %v1935, %v1324
        %v1985 = vsel %vm1957, %v1936, %v1326
        %v1986 = vsel %vm1957, %v1937, %v1328
        %v1987 = vsel %vm1957, %v1938, %v1330
        %v1988 = vsel %vm1957, %v1939, %v1332
        %v1989 = vsel %vm1957, %v1940, %v1334
        %v1990 = vsel %vm1957, %v1941, %v1336
        %v1991 = vsel %vm1957, %v1942, %v1338
        %v1992 = vsel %vm1957, %v1943, %v1340
        %v1993 = vsel %vm1957, %v1944, %v1342
        %v1994 = vsel %vm1957, %v1945, %v1344
        %v1995 = vsel %vm1957, %v1946, %v1346
        %v1996 = vsel %vm1957, %v1947, %v1348
        %v1997 = vsel %vm1957, %v1948, %v1350
        %v1998 = vsel %vm1957, %v1949, %v1352
        %v1999 = vsel %vm1957, %v1950, %v1354
        %v2000 = vsel %vm1957, %v1951, %v1356
        %v2001 = vsel %vm1957, %v1952, %v1358
        %v2002 = vsel %vm1957, %v1953, %v1360
        %v2003 = vsel %vm1957, %v1954, %v1362
        %v2004 = vsel %vm1957, %v1955, %v1364
        %v2005 = vsel %vm1957, %v1956, %v1366
        %vm2006 = vcmask 228352
        %v2007 = vsel %vm2006, %v1958, %v1419
        %v2008 = vsel %vm2006, %v1959, %v1421
        %v2009 = vsel %vm2006, %v1960, %v1423
        %v2010 = vsel %vm2006, %v1961, %v1425
        %v2011 = vsel %vm2006, %v1962, %v1427
        %v2012 = vsel %vm2006, %v1963, %v1429
        %v2013 = vsel %vm2006, %v1964, %v1431
        %v2014 = vsel %vm2006, %v1965, %v1433
        %v2015 = vsel %vm2006, %v1966, %v1435
        %v2016 = vsel %vm2006, %v1967, %v1437
        %v2017 = vsel %vm2006, %v1968, %v1439
        %v2018 = vsel %vm2006, %v1969, %v1441
        %v2019 = vsel %vm2006, %v1970, %v1443
        %v2020 = vsel %vm2006, %v1971, %v1445
        %v2021 = vsel %vm2006, %v1972, %v1447
        %v2022 = vsel %vm2006, %v1973, %v1449
        %v2023 = vsel %vm2006, %v1974, %v1451
        %v2024 = vsel %vm2006, %v1975, %v1453
        %v2025 = vsel %vm2006, %v1976, %v1455
        %v2026 = vsel %vm2006, %v1977, %v1457
        %v2027 = vsel %vm2006, %v1978, %v1459
        %v2028 = vsel %vm2006, %v1979, %v1461
        %v2029 = vsel %vm2006, %v1980, %v1463
        %v2030 = vsel %vm2006, %v1981, %v1465
        %v2031 = vsel %vm2006, %v1982, %v1467
        %v2032 = vsel %vm2006, %v1983, %v1469
        %v2033 = vsel %vm2006, %v1984, %v1471
        %v2034 = vsel %vm2006, %v1985, %v1473
        %v2035 = vsel %vm2006, %v1986, %v1475
        %v2036 = vsel %vm2006, %v1987, %v1477
        %v2037 = vsel %vm2006, %v1988, %v1479
        %v2038 = vsel %vm2006, %v1989, %v1481
        %v2039 = vsel %vm2006, %v1990, %v1483
        %v2040 = vsel %vm2006, %v1991, %v1485
        %v2041 = vsel %vm2006, %v1992, %v1487
        %v2042 = vsel %vm2006, %v1993, %v1489
        %v2043 = vsel %vm2006, %v1994, %v1491
        %v2044 = vsel %vm2006, %v1995, %v1493
        %v2045 = vsel %vm2006, %v1996, %v1495
        %v2046 = vsel %vm2006, %v1997, %v1497
        %v2047 = vsel %vm2006, %v1998, %v1499
        %v2048 = vsel %vm2006, %v1999, %v1501
        %v2049 = vsel %vm2006, %v2000, %v1503
        %v2050 = vsel %vm2006, %v2001, %v1505
        %v2051 = vsel %vm2006, %v2002, %v1507
        %v2052 = vsel %vm2006, %v2003, %v1509
        %v2053 = vsel %vm2006, %v2004, %v1511
        %v2054 = vsel %vm2006, %v2005, %v1513
        %vm2055 = vcmask 261120
        %v2056 = vsel %vm2055, %v2007, %v1569
        %v2057 = vsel %vm2055, %v2008, %v1571
        %v2058 = vsel %vm2055, %v2009, %v1573
        %v2059 = vsel %vm2055, %v2010, %v1575
        %v2060 = vsel %vm2055, %v2011, %v1577
        %v2061 = vsel %vm2055, %v2012, %v1579
        %v2062 = vsel %vm2055, %v2013, %v1581
        %v2063 = vsel %vm2055, %v2014, %v1583
        %v2064 = vsel %vm2055, %v2015, %v1585
        %v2065 = vsel %vm2055, %v2016, %v1587
        %v2066 = vsel %vm2055, %v2017, %v1589
        %v2067 = vsel %vm2055, %v2018, %v1591
        %v2068 = vsel %vm2055, %v2019, %v1593
        %v2069 = vsel %vm2055, %v2020, %v1595
        %v2070 = vsel %vm2055, %v2021, %v1597
        %v2071 = vsel %vm2055, %v2022, %v1599
        %v2072 = vsel %vm2055, %v2023, %v1601
        %v2073 = vsel %vm2055, %v2024, %v1603
        %v2074 = vsel %vm2055, %v2025, %v1605
        %v2075 = vsel %vm2055, %v2026, %v1607
        %v2076 = vsel %vm2055, %v2027, %v1609
        %v2077 = vsel %vm2055, %v2028, %v1611
        %v2078 = vsel %vm2055, %v2029, %v1613
        %v2079 = vsel %vm2055, %v2030, %v1615
        %v2080 = vsel %vm2055, %v2031, %v1617
        %v2081 = vsel %vm2055, %v2032, %v1619
        %v2082 = vsel %vm2055, %v2033, %v1621
        %v2083 = vsel %vm2055, %v2034, %v1623
        %v2084 = vsel %vm2055, %v2035, %v1625
        %v2085 = vsel %vm2055, %v2036, %v1627
        %v2086 = vsel %vm2055, %v2037, %v1629
        %v2087 = vsel %vm2055, %v2038, %v1631
        %v2088 = vsel %vm2055, %v2039, %v1633
        %v2089 = vsel %vm2055, %v2040, %v1635
        %v2090 = vsel %vm2055, %v2041, %v1637
        %v2091 = vsel %vm2055, %v2042, %v1639
        %v2092 = vsel %vm2055, %v2043, %v1641
        %v2093 = vsel %vm2055, %v2044, %v1643
        %v2094 = vsel %vm2055, %v2045, %v1645
        %v2095 = vsel %vm2055, %v2046, %v1647
        %v2096 = vsel %vm2055, %v2047, %v1649
        %v2097 = vsel %vm2055, %v2048, %v1651
        %v2098 = vsel %vm2055, %v2049, %v1653
        %v2099 = vsel %vm2055, %v2050, %v1655
        %v2100 = vsel %vm2055, %v2051, %v1657
        %v2101 = vsel %vm2055, %v2052, %v1659
        %v2102 = vsel %vm2055, %v2053, %v1661
        %v2103 = vsel %vm2055, %v2054, %v1663
        %vm2152 = vcmask 1040384
        %v2153 = vrot.slane %v2056, 7
        %v2154 = vrot.slane %v2057, 7
        %v2155 = vsel %vm2152, %v2153, %v2154
        %v2156 = vrot.slane %v2058, 7
        %v2157 = vsel %vm2152, %v2154, %v2156
        %v2158 = vrot.slane %v2059, 7
        %v2159 = vrot.slane %v2060, 7
        %v2160 = vsel %vm2152, %v2158, %v2159
        %v2161 = vrot.slane %v2061, 7
        %v2162 = vsel %vm2152, %v2159, %v2161
        %v2163 = vrot.slane %v2062, 7
        %v2164 = vrot.slane %v2063, 7
        %v2165 = vsel %vm2152, %v2163, %v2164
        %v2166 = vrot.slane %v2064, 7
        %v2167 = vsel %vm2152, %v2164, %v2166
        %v2168 = vrot.slane %v2065, 7
        %v2169 = vrot.slane %v2066, 7
        %v2170 = vsel %vm2152, %v2168, %v2169
        %v2171 = vrot.slane %v2067, 7
        %v2172 = vsel %vm2152, %v2169, %v2171
        %v2173 = vrot.slane %v2068, 7
        %v2174 = vrot.slane %v2069, 7
        %v2175 = vsel %vm2152, %v2173, %v2174
        %v2176 = vrot.slane %v2070, 7
        %v2177 = vsel %vm2152, %v2174, %v2176
        %v2178 = vrot.slane %v2071, 7
        %v2179 = vrot.slane %v2072, 7
        %v2180 = vsel %vm2152, %v2178, %v2179
        %v2181 = vrot.slane %v2073, 7
        %v2182 = vsel %vm2152, %v2179, %v2181
        %v2183 = vrot.slane %v2074, 7
        %v2184 = vrot.slane %v2075, 7
        %v2185 = vsel %vm2152, %v2183, %v2184
        %v2186 = vrot.slane %v2076, 7
        %v2187 = vsel %vm2152, %v2184, %v2186
        %v2188 = vrot.slane %v2077, 7
        %v2189 = vrot.slane %v2078, 7
        %v2190 = vsel %vm2152, %v2188, %v2189
        %v2191 = vrot.slane %v2079, 7
        %v2192 = vsel %vm2152, %v2189, %v2191
        %v2193 = vrot.slane %v2080, 7
        %v2194 = vrot.slane %v2081, 7
        %v2195 = vsel %vm2152, %v2193, %v2194
        %v2196 = vrot.slane %v2082, 7
        %v2197 = vsel %vm2152, %v2194, %v2196
        %v2198 = vrot.slane %v2083, 7
        %v2199 = vrot.slane %v2084, 7
        %v2200 = vsel %vm2152, %v2198, %v2199
        %v2201 = vrot.slane %v2085, 7
        %v2202 = vsel %vm2152, %v2199, %v2201
        %v2203 = vrot.slane %v2086, 7
        %v2204 = vrot.slane %v2087, 7
        %v2205 = vsel %vm2152, %v2203, %v2204
        %v2206 = vrot.slane %v2088, 7
        %v2207 = vsel %vm2152, %v2204, %v2206
        %v2208 = vrot.slane %v2089, 7
        %v2209 = vrot.slane %v2090, 7
        %v2210 = vsel %vm2152, %v2208, %v2209
        %v2211 = vrot.slane %v2091, 7
        %v2212 = vsel %vm2152, %v2209, %v2211
        %v2213 = vrot.slane %v2092, 7
        %v2214 = vrot.slane %v2093, 7
        %v2215 = vsel %vm2152, %v2213, %v2214
        %v2216 = vrot.slane %v2094, 7
        %v2217 = vsel %vm2152, %v2214, %v2216
        %v2218 = vrot.slane %v2095, 7
        %v2219 = vrot.slane %v2096, 7
        %v2220 = vsel %vm2152, %v2218, %v2219
        %v2221 = vrot.slane %v2097, 7
        %v2222 = vsel %vm2152, %v2219, %v2221
        %v2223 = vrot.slane %v2098, 7
        %v2224 = vrot.slane %v2099, 7
        %v2225 = vsel %vm2152, %v2223, %v2224
        %v2226 = vrot.slane %v2100, 7
        %v2227 = vsel %vm2152, %v2224, %v2226
        %v2228 = vrot.slane %v2101, 7
        %v2229 = vrot.slane %v2102, 7
        %v2230 = vsel %vm2152, %v2228, %v2229
        %v2231 = vrot.slane %v2103, 7
        %v2232 = vsel %vm2152, %v2229, %v2231
        %v2233 = vld [vmem:[%s1] sm:$0xff]
        %v2234 = vld [vmem:[%s1 + $0x8] sm:$0xff]
        %v2235 = vld [vmem:[%s1 + $0x10] sm:$0xff]
        %v2236 = vld [vmem:[%s1 + $0x18] sm:$0xff]
        %v2237 = vld [vmem:[%s1 + $0x20] sm:$0xf]
        %vm2238 = vcmask 293888
        %v2239 = vsel %vm2238, %v2155, 0
        %v2241 = vsel %vm2238, %v2157, 0
        %v2243 = vsel %vm2238, %v2160, 0
        %v2245 = vsel %vm2238, %v2162, 0
        %v2247 = vsel %vm2238, %v2165, 0
        %v2249 = vsel %vm2238, %v2167, 0
        %v2251 = vsel %vm2238, %v2170, 0
        %v2253 = vsel %vm2238, %v2172, 0
        %v2255 = vsel %vm2238, %v2175, 0
        %v2257 = vsel %vm2238, %v2177, 0
        %v2259 = vsel %vm2238, %v2180, 0
        %v2261 = vsel %vm2238, %v2182, 0
        %v2263 = vsel %vm2238, %v2185, 0
        %v2265 = vsel %vm2238, %v2187, 0
        %v2267 = vsel %vm2238, %v2190, 0
        %v2269 = vsel %vm2238, %v2192, 0
        %v2271 = vsel %vm2238, %v2195, 0
        %v2273 = vsel %vm2238, %v2197, 0
        %v2275 = vsel %vm2238, %v2200, 0
        %v2277 = vsel %vm2238, %v2202, 0
        %v2279 = vsel %vm2238, %v2205, 0
        %v2281 = vsel %vm2238, %v2207, 0
        %v2283 = vsel %vm2238, %v2210, 0
        %v2285 = vsel %vm2238, %v2212, 0
        %v2287 = vsel %vm2238, %v2215, 0
        %v2289 = vsel %vm2238, %v2217, 0
        %v2291 = vsel %vm2238, %v2220, 0
        %v2293 = vsel %vm2238, %v2222, 0
        %v2295 = vsel %vm2238, %v2225, 0
        %v2297 = vsel %vm2238, %v2227, 0
        %v2299 = vsel %vm2238, %v2230, 0
        %v2301 = vsel %vm2238, %v2232, 0
        %vm2303 = vcmask 1043456
        %v2305 = vsel %vm2303, %v2237, 0
        %2307 = vmatprep.subr.mxu0 0.0
        %2308 = vmatpush1.msra.mxu0 0.0
        %2309 = vmatprep.subr.mxu0 0.0
        %2310 = vmatpush1.msra.mxu0 0.0
        %2311 = vmatprep.subr.mxu0 0.0
        %2312 = vmatpush1.msra.mxu0 0.0
        %2313 = vmatprep.subr.mxu0 0.0
        %2314 = vmatpush1.msra.mxu0 0.0
        %2315 = vmatprep.subr.mxu0 0.0
        %2316 = vmatpush1.msra.mxu0 0.0
        %2317 = vmatprep.subr.mxu0 0.0
        %2318 = vmatpush1.msra.mxu0 0.0
        %2319 = vmatprep.subr.mxu0 0.0
        %2320 = vmatpush1.msra.mxu0 0.0
        %2321 = vmatprep.subr.mxu0 0.0
        %2322 = vmatpush1.msra.mxu0 0.0
        %2323 = vmatprep.subr.mxu0 0.0
        %2324 = vmatpush1.msra.mxu0 0.0
        %2325 = vmatprep.subr.mxu0 0.0
        %2326 = vmatpush1.msra.mxu0 0.0
        %2327 = vmatprep.subr.mxu0 0.0
        %2328 = vmatpush1.msra.mxu0 0.0
        %2329 = vmatprep.subr.mxu0 0.0
        %v2330 = vand.u32 %v2305, 4294901760
        %2331 = vmatpush1.msra.mxu0 %v2330
        %2332 = vmatprep.subr.mxu0 0.0
        %v2333 = vand.u32 %v2236, 4294901760
        %2334 = vmatpush1.msra.mxu0 %v2333
        %2335 = vmatprep.subr.mxu0 0.0
        %v2336 = vand.u32 %v2235, 4294901760
        %2337 = vmatpush1.msra.mxu0 %v2336
        %2338 = vmatprep.subr.mxu0 0.0
        %v2339 = vand.u32 %v2234, 4294901760
        %2340 = vmatpush1.msra.mxu0 %v2339
        %2341 = vmatprep.subr.mxu0 0.0
        %v2342 = vand.u32 %v2233, 4294901760
        %2343 = vmatpush1.msra.mxu0 %v2342
        %2344 = vmatprep.subr.mxu0 0.0
        %2345 = vmatpush2.msra.mxu0 0.0
        %2346 = vmatprep.subr.mxu0 0.0
        %2347 = vmatpush2.msra.mxu0 0.0
        %2348 = vmatprep.subr.mxu0 0.0
        %2349 = vmatpush2.msra.mxu0 0.0
        %2350 = vmatprep.subr.mxu0 0.0
        %2351 = vmatpush2.msra.mxu0 0.0
        %2352 = vmatprep.subr.mxu0 0.0
        %2353 = vmatpush2.msra.mxu0 0.0
        %2354 = vmatprep.subr.mxu0 0.0
        %2355 = vmatpush2.msra.mxu0 0.0
        %2356 = vmatprep.subr.mxu0 0.0
        %2357 = vmatpush2.msra.mxu0 0.0
        %2358 = vmatprep.subr.mxu0 0.0
        %2359 = vmatpush2.msra.mxu0 0.0
        %2360 = vmatprep.subr.mxu0 0.0
        %2361 = vmatpush2.msra.mxu0 0.0
        %2362 = vmatprep.subr.mxu0 0.0
        %2363 = vmatpush2.msra.mxu0 0.0
        %2364 = vmatprep.subr.mxu0 0.0
        %2365 = vmatpush2.msra.mxu0 0.0
        %2366 = vmatprep.subr.mxu0 0.0
        %2367 = vmatpush2.msra.mxu0 0.0
        %2368 = vmatprep.subr.mxu0 0.0
        %2369 = vmatpush2.msra.mxu0 0.0
        %2370 = vmatprep.subr.mxu0 0.0
        %2371 = vmatpush2.msra.mxu0 0.0
        %2372 = vmatprep.subr.mxu0 0.0
        %2373 = vmatpush2.msra.mxu0 0.0
        %2374 = vmatprep.subr.mxu0 0.0
        %2375 = vmatpush2.msra.mxu0 0.0
        %2376 = vmatprep.mubr.f32.mxu0 0.0
        %v2377 = vand.u32 %v2239, 4294901760
        %v2378 = vsub.f32 %v2239, %v2377
        %v2379 = vand.u32 %v2378, 4294901760
        %v2380 = vsub.f32 %v2378, %v2379
        %v2381 = vand.u32 %v2380, 4294901760
        %2382 = vmatmul.mubr.f32.gmra.mxu0 %v2381
        %v2383 = vpop.f32.mrf.mxu0
        %v2384 = vadd.f32 0.0, %v2383
        %v2385 = vpop.f32.mrf.mxu0
        %2386 = vmatprep.mubr.f32.mxu0 0.0
        %v2387 = vand.u32 %v2241, 4294901760
        %v2388 = vsub.f32 %v2241, %v2387
        %v2389 = vand.u32 %v2388, 4294901760
        %v2390 = vsub.f32 %v2388, %v2389
        %v2391 = vand.u32 %v2390, 4294901760
        %2392 = vmatmul.mubr.f32.gmra.mxu0 %v2391
        %v2393 = vpop.f32.mrf.mxu0
        %v2394 = vadd.f32 0.0, %v2393
        %v2395 = vpop.f32.mrf.mxu0
        %2396 = vmatprep.mubr.f32.mxu0 0.0
        %v2397 = vand.u32 %v2243, 4294901760
        %v2398 = vsub.f32 %v2243, %v2397
        %v2399 = vand.u32 %v2398, 4294901760
        %v2400 = vsub.f32 %v2398, %v2399
        %v2401 = vand.u32 %v2400, 4294901760
        %2402 = vmatmul.mubr.f32.gmra.mxu0 %v2401
        %v2403 = vpop.f32.mrf.mxu0
        %v2404 = vadd.f32 0.0, %v2403
        %v2405 = vpop.f32.mrf.mxu0
        %2406 = vmatprep.mubr.f32.mxu0 0.0
        %v2407 = vand.u32 %v2245, 4294901760
        %v2408 = vsub.f32 %v2245, %v2407
        %v2409 = vand.u32 %v2408, 4294901760
        %v2410 = vsub.f32 %v2408, %v2409
        %v2411 = vand.u32 %v2410, 4294901760
        %2412 = vmatmul.mubr.f32.gmra.mxu0 %v2411
        %v2413 = vpop.f32.mrf.mxu0
        %v2414 = vadd.f32 0.0, %v2413
        %v2415 = vpop.f32.mrf.mxu0
        %2416 = vmatprep.mubr.f32.mxu0 0.0
        %v2417 = vand.u32 %v2247, 4294901760
        %v2418 = vsub.f32 %v2247, %v2417
        %v2419 = vand.u32 %v2418, 4294901760
        %v2420 = vsub.f32 %v2418, %v2419
        %v2421 = vand.u32 %v2420, 4294901760
        %2422 = vmatmul.mubr.f32.gmra.mxu0 %v2421
        %v2423 = vpop.f32.mrf.mxu0
        %v2424 = vadd.f32 0.0, %v2423
        %v2425 = vpop.f32.mrf.mxu0
        %2426 = vmatprep.mubr.f32.mxu0 0.0
        %v2427 = vand.u32 %v2249, 4294901760
        %v2428 = vsub.f32 %v2249, %v2427
        %v2429 = vand.u32 %v2428, 4294901760
        %v2430 = vsub.f32 %v2428, %v2429
        %v2431 = vand.u32 %v2430, 4294901760
        %2432 = vmatmul.mubr.f32.gmra.mxu0 %v2431
        %v2433 = vpop.f32.mrf.mxu0
        %v2434 = vadd.f32 0.0, %v2433
        %v2435 = vpop.f32.mrf.mxu0
        %2436 = vmatprep.mubr.f32.mxu0 0.0
        %v2437 = vand.u32 %v2251, 4294901760
        %v2438 = vsub.f32 %v2251, %v2437
        %v2439 = vand.u32 %v2438, 4294901760
        %v2440 = vsub.f32 %v2438, %v2439
        %v2441 = vand.u32 %v2440, 4294901760
        %2442 = vmatmul.mubr.f32.gmra.mxu0 %v2441
        %v2443 = vpop.f32.mrf.mxu0
        %v2444 = vadd.f32 0.0, %v2443
        %v2445 = vpop.f32.mrf.mxu0
        %2446 = vmatprep.mubr.f32.mxu0 0.0
        %v2447 = vand.u32 %v2253, 4294901760
        %v2448 = vsub.f32 %v2253, %v2447
        %v2449 = vand.u32 %v2448, 4294901760
        %v2450 = vsub.f32 %v2448, %v2449
        %v2451 = vand.u32 %v2450, 4294901760
        %2452 = vmatmul.mubr.f32.gmra.mxu0 %v2451
        %v2453 = vpop.f32.mrf.mxu0
        %v2454 = vadd.f32 0.0, %v2453
        %v2455 = vpop.f32.mrf.mxu0
        %2456 = vmatprep.mubr.f32.mxu0 0.0
        %v2457 = vand.u32 %v2255, 4294901760
        %v2458 = vsub.f32 %v2255, %v2457
        %v2459 = vand.u32 %v2458, 4294901760
        %v2460 = vsub.f32 %v2458, %v2459
        %v2461 = vand.u32 %v2460, 4294901760
        %2462 = vmatmul.mubr.f32.gmra.mxu0 %v2461
        %v2463 = vpop.f32.mrf.mxu0
        %v2464 = vadd.f32 0.0, %v2463
        %v2465 = vpop.f32.mrf.mxu0
        %2466 = vmatprep.mubr.f32.mxu0 0.0
        %v2467 = vand.u32 %v2257, 4294901760
        %v2468 = vsub.f32 %v2257, %v2467
        %v2469 = vand.u32 %v2468, 4294901760
        %v2470 = vsub.f32 %v2468, %v2469
        %v2471 = vand.u32 %v2470, 4294901760
        %2472 = vmatmul.mubr.f32.gmra.mxu0 %v2471
        %v2473 = vpop.f32.mrf.mxu0
        %v2474 = vadd.f32 0.0, %v2473
        %v2475 = vpop.f32.mrf.mxu0
        %2476 = vmatprep.mubr.f32.mxu0 0.0
        %v2477 = vand.u32 %v2259, 4294901760
        %v2478 = vsub.f32 %v2259, %v2477
        %v2479 = vand.u32 %v2478, 4294901760
        %v2480 = vsub.f32 %v2478, %v2479
        %v2481 = vand.u32 %v2480, 4294901760
        %2482 = vmatmul.mubr.f32.gmra.mxu0 %v2481
        %v2483 = vpop.f32.mrf.mxu0
        %v2484 = vadd.f32 0.0, %v2483
        %v2485 = vpop.f32.mrf.mxu0
        %2486 = vmatprep.mubr.f32.mxu0 0.0
        %v2487 = vand.u32 %v2261, 4294901760
        %v2488 = vsub.f32 %v2261, %v2487
        %v2489 = vand.u32 %v2488, 4294901760
        %v2490 = vsub.f32 %v2488, %v2489
        %v2491 = vand.u32 %v2490, 4294901760
        %2492 = vmatmul.mubr.f32.gmra.mxu0 %v2491
        %v2493 = vpop.f32.mrf.mxu0
        %v2494 = vadd.f32 0.0, %v2493
        %v2495 = vpop.f32.mrf.mxu0
        %2496 = vmatprep.mubr.f32.mxu0 0.0
        %v2497 = vand.u32 %v2263, 4294901760
        %v2498 = vsub.f32 %v2263, %v2497
        %v2499 = vand.u32 %v2498, 4294901760
        %v2500 = vsub.f32 %v2498, %v2499
        %v2501 = vand.u32 %v2500, 4294901760
        %2502 = vmatmul.mubr.f32.gmra.mxu0 %v2501
        %v2503 = vpop.f32.mrf.mxu0
        %v2504 = vadd.f32 0.0, %v2503
        %v2505 = vpop.f32.mrf.mxu0
        %2506 = vmatprep.mubr.f32.mxu0 0.0
        %v2507 = vand.u32 %v2265, 4294901760
        %v2508 = vsub.f32 %v2265, %v2507
        %v2509 = vand.u32 %v2508, 4294901760
        %v2510 = vsub.f32 %v2508, %v2509
        %v2511 = vand.u32 %v2510, 4294901760
        %2512 = vmatmul.mubr.f32.gmra.mxu0 %v2511
        %v2513 = vpop.f32.mrf.mxu0
        %v2514 = vadd.f32 0.0, %v2513
        %v2515 = vpop.f32.mrf.mxu0
        %2516 = vmatprep.mubr.f32.mxu0 0.0
        %v2517 = vand.u32 %v2267, 4294901760
        %v2518 = vsub.f32 %v2267, %v2517
        %v2519 = vand.u32 %v2518, 4294901760
        %v2520 = vsub.f32 %v2518, %v2519
        %v2521 = vand.u32 %v2520, 4294901760
        %2522 = vmatmul.mubr.f32.gmra.mxu0 %v2521
        %v2523 = vpop.f32.mrf.mxu0
        %v2524 = vadd.f32 0.0, %v2523
        %v2525 = vpop.f32.mrf.mxu0
        %2526 = vmatprep.mubr.f32.mxu0 0.0
        %v2527 = vand.u32 %v2269, 4294901760
        %v2528 = vsub.f32 %v2269, %v2527
        %v2529 = vand.u32 %v2528, 4294901760
        %v2530 = vsub.f32 %v2528, %v2529
        %v2531 = vand.u32 %v2530, 4294901760
        %2532 = vmatmul.mubr.f32.gmra.mxu0 %v2531
        %v2533 = vpop.f32.mrf.mxu0
        %v2534 = vadd.f32 0.0, %v2533
        %v2535 = vpop.f32.mrf.mxu0
        %2536 = vmatprep.mubr.f32.mxu0 0.0
        %v2537 = vand.u32 %v2271, 4294901760
        %v2538 = vsub.f32 %v2271, %v2537
        %v2539 = vand.u32 %v2538, 4294901760
        %v2540 = vsub.f32 %v2538, %v2539
        %v2541 = vand.u32 %v2540, 4294901760
        %2542 = vmatmul.mubr.f32.gmra.mxu0 %v2541
        %v2543 = vpop.f32.mrf.mxu0
        %v2544 = vadd.f32 0.0, %v2543
        %v2545 = vpop.f32.mrf.mxu0
        %2546 = vmatprep.mubr.f32.mxu0 0.0
        %v2547 = vand.u32 %v2273, 4294901760
        %v2548 = vsub.f32 %v2273, %v2547
        %v2549 = vand.u32 %v2548, 4294901760
        %v2550 = vsub.f32 %v2548, %v2549
        %v2551 = vand.u32 %v2550, 4294901760
        %2552 = vmatmul.mubr.f32.gmra.mxu0 %v2551
        %v2553 = vpop.f32.mrf.mxu0
        %v2554 = vadd.f32 0.0, %v2553
        %v2555 = vpop.f32.mrf.mxu0
        %2556 = vmatprep.mubr.f32.mxu0 0.0
        %v2557 = vand.u32 %v2275, 4294901760
        %v2558 = vsub.f32 %v2275, %v2557
        %v2559 = vand.u32 %v2558, 4294901760
        %v2560 = vsub.f32 %v2558, %v2559
        %v2561 = vand.u32 %v2560, 4294901760
        %2562 = vmatmul.mubr.f32.gmra.mxu0 %v2561
        %v2563 = vpop.f32.mrf.mxu0
        %v2564 = vadd.f32 0.0, %v2563
        %v2565 = vpop.f32.mrf.mxu0
        %2566 = vmatprep.mubr.f32.mxu0 0.0
        %v2567 = vand.u32 %v2277, 4294901760
        %v2568 = vsub.f32 %v2277, %v2567
        %v2569 = vand.u32 %v2568, 4294901760
        %v2570 = vsub.f32 %v2568, %v2569
        %v2571 = vand.u32 %v2570, 4294901760
        %2572 = vmatmul.mubr.f32.gmra.mxu0 %v2571
        %v2573 = vpop.f32.mrf.mxu0
        %v2574 = vadd.f32 0.0, %v2573
        %v2575 = vpop.f32.mrf.mxu0
        %2576 = vmatprep.mubr.f32.mxu0 0.0
        %v2577 = vand.u32 %v2279, 4294901760
        %v2578 = vsub.f32 %v2279, %v2577
        %v2579 = vand.u32 %v2578, 4294901760
        %v2580 = vsub.f32 %v2578, %v2579
        %v2581 = vand.u32 %v2580, 4294901760
        %2582 = vmatmul.mubr.f32.gmra.mxu0 %v2581
        %v2583 = vpop.f32.mrf.mxu0
        %v2584 = vadd.f32 0.0, %v2583
        %v2585 = vpop.f32.mrf.mxu0
        %2586 = vmatprep.mubr.f32.mxu0 0.0
        %v2587 = vand.u32 %v2281, 4294901760
        %v2588 = vsub.f32 %v2281, %v2587
        %v2589 = vand.u32 %v2588, 4294901760
        %v2590 = vsub.f32 %v2588, %v2589
        %v2591 = vand.u32 %v2590, 4294901760
        %2592 = vmatmul.mubr.f32.gmra.mxu0 %v2591
        %v2593 = vpop.f32.mrf.mxu0
        %v2594 = vadd.f32 0.0, %v2593
        %v2595 = vpop.f32.mrf.mxu0
        %2596 = vmatprep.mubr.f32.mxu0 0.0
        %v2597 = vand.u32 %v2283, 4294901760
        %v2598 = vsub.f32 %v2283, %v2597
        %v2599 = vand.u32 %v2598, 4294901760
        %v2600 = vsub.f32 %v2598, %v2599
        %v2601 = vand.u32 %v2600, 4294901760
        %2602 = vmatmul.mubr.f32.gmra.mxu0 %v2601
        %v2603 = vpop.f32.mrf.mxu0
        %v2604 = vadd.f32 0.0, %v2603
        %v2605 = vpop.f32.mrf.mxu0
        %2606 = vmatprep.mubr.f32.mxu0 0.0
        %v2607 = vand.u32 %v2285, 4294901760
        %v2608 = vsub.f32 %v2285, %v2607
        %v2609 = vand.u32 %v2608, 4294901760
        %v2610 = vsub.f32 %v2608, %v2609
        %v2611 = vand.u32 %v2610, 4294901760
        %2612 = vmatmul.mubr.f32.gmra.mxu0 %v2611
        %v2613 = vpop.f32.mrf.mxu0
        %v2614 = vadd.f32 0.0, %v2613
        %v2615 = vpop.f32.mrf.mxu0
        %2616 = vmatprep.mubr.f32.mxu0 0.0
        %v2617 = vand.u32 %v2287, 4294901760
        %v2618 = vsub.f32 %v2287, %v2617
        %v2619 = vand.u32 %v2618, 4294901760
        %v2620 = vsub.f32 %v2618, %v2619
        %v2621 = vand.u32 %v2620, 4294901760
        %2622 = vmatmul.mubr.f32.gmra.mxu0 %v2621
        %v2623 = vpop.f32.mrf.mxu0
        %v2624 = vadd.f32 0.0, %v2623
        %v2625 = vpop.f32.mrf.mxu0
        %2626 = vmatprep.mubr.f32.mxu0 0.0
        %v2627 = vand.u32 %v2289, 4294901760
        %v2628 = vsub.f32 %v2289, %v2627
        %v2629 = vand.u32 %v2628, 4294901760
        %v2630 = vsub.f32 %v2628, %v2629
        %v2631 = vand.u32 %v2630, 4294901760
        %2632 = vmatmul.mubr.f32.gmra.mxu0 %v2631
        %v2633 = vpop.f32.mrf.mxu0
        %v2634 = vadd.f32 0.0, %v2633
        %v2635 = vpop.f32.mrf.mxu0
        %2636 = vmatprep.mubr.f32.mxu0 0.0
        %v2637 = vand.u32 %v2291, 4294901760
        %v2638 = vsub.f32 %v2291, %v2637
        %v2639 = vand.u32 %v2638, 4294901760
        %v2640 = vsub.f32 %v2638, %v2639
        %v2641 = vand.u32 %v2640, 4294901760
        %2642 = vmatmul.mubr.f32.gmra.mxu0 %v2641
        %v2643 = vpop.f32.mrf.mxu0
        %v2644 = vadd.f32 0.0, %v2643
        %v2645 = vpop.f32.mrf.mxu0
        %2646 = vmatprep.mubr.f32.mxu0 0.0
        %v2647 = vand.u32 %v2293, 4294901760
        %v2648 = vsub.f32 %v2293, %v2647
        %v2649 = vand.u32 %v2648, 4294901760
        %v2650 = vsub.f32 %v2648, %v2649
        %v2651 = vand.u32 %v2650, 4294901760
        %2652 = vmatmul.mubr.f32.gmra.mxu0 %v2651
        %v2653 = vpop.f32.mrf.mxu0
        %v2654 = vadd.f32 0.0, %v2653
        %v2655 = vpop.f32.mrf.mxu0
        %2656 = vmatprep.mubr.f32.mxu0 0.0
        %v2657 = vand.u32 %v2295, 4294901760
        %v2658 = vsub.f32 %v2295, %v2657
        %v2659 = vand.u32 %v2658, 4294901760
        %v2660 = vsub.f32 %v2658, %v2659
        %v2661 = vand.u32 %v2660, 4294901760
        %2662 = vmatmul.mubr.f32.gmra.mxu0 %v2661
        %v2663 = vpop.f32.mrf.mxu0
        %v2664 = vadd.f32 0.0, %v2663
        %v2665 = vpop.f32.mrf.mxu0
        %2666 = vmatprep.mubr.f32.mxu0 0.0
        %v2667 = vand.u32 %v2297, 4294901760
        %v2668 = vsub.f32 %v2297, %v2667
        %v2669 = vand.u32 %v2668, 4294901760
        %v2670 = vsub.f32 %v2668, %v2669
        %v2671 = vand.u32 %v2670, 4294901760
        %2672 = vmatmul.mubr.f32.gmra.mxu0 %v2671
        %v2673 = vpop.f32.mrf.mxu0
        %v2674 = vadd.f32 0.0, %v2673
        %v2675 = vpop.f32.mrf.mxu0
        %2676 = vmatprep.mubr.f32.mxu0 0.0
        %v2677 = vand.u32 %v2299, 4294901760
        %v2678 = vsub.f32 %v2299, %v2677
        %v2679 = vand.u32 %v2678, 4294901760
        %v2680 = vsub.f32 %v2678, %v2679
        %v2681 = vand.u32 %v2680, 4294901760
        %2682 = vmatmul.mubr.f32.gmra.mxu0 %v2681
        %v2683 = vpop.f32.mrf.mxu0
        %v2684 = vadd.f32 0.0, %v2683
        %v2685 = vpop.f32.mrf.mxu0
        %2686 = vmatprep.mubr.f32.mxu0 0.0
        %v2687 = vand.u32 %v2301, 4294901760
        %v2688 = vsub.f32 %v2301, %v2687
        %v2689 = vand.u32 %v2688, 4294901760
        %v2690 = vsub.f32 %v2688, %v2689
        %v2691 = vand.u32 %v2690, 4294901760
        %2692 = vmatmul.mubr.f32.gmra.mxu0 %v2691
        %v2693 = vpop.f32.mrf.mxu0
        %v2694 = vadd.f32 0.0, %v2693
        %v2695 = vpop.f32.mrf.mxu0
        %2696 = vdwg.mxu0
        %2697 = vmatprep.subr.mxu0 0.0
        %2698 = vmatpush1.msra.mxu0 0.0
        %2699 = vmatprep.subr.mxu0 0.0
        %2700 = vmatpush1.msra.mxu0 0.0
        %2701 = vmatprep.subr.mxu0 0.0
        %2702 = vmatpush1.msra.mxu0 0.0
        %2703 = vmatprep.subr.mxu0 0.0
        %2704 = vmatpush1.msra.mxu0 0.0
        %2705 = vmatprep.subr.mxu0 0.0
        %2706 = vmatpush1.msra.mxu0 0.0
        %2707 = vmatprep.subr.mxu0 0.0
        %2708 = vmatpush1.msra.mxu0 0.0
        %2709 = vmatprep.subr.mxu0 0.0
        %2710 = vmatpush1.msra.mxu0 0.0
        %2711 = vmatprep.subr.mxu0 0.0
        %2712 = vmatpush1.msra.mxu0 0.0
        %2713 = vmatprep.subr.mxu0 0.0
        %2714 = vmatpush1.msra.mxu0 0.0
        %2715 = vmatprep.subr.mxu0 0.0
        %2716 = vmatpush1.msra.mxu0 0.0
        %2717 = vmatprep.subr.mxu0 0.0
        %2718 = vmatpush1.msra.mxu0 0.0
        %2719 = vmatprep.subr.mxu0 0.0
        %v2720 = vand.u32 %v2305, 4294901760
        %v2721 = vsub.f32 %v2305, %v2720
        %v2722 = vand.u32 %v2721, 4294901760
        %v2723 = vsub.f32 %v2721, %v2722
        %v2724 = vand.u32 %v2723, 4294901760
        %2725 = vmatpush1.msra.mxu0 %v2724
        %2726 = vmatprep.subr.mxu0 0.0
        %v2727 = vand.u32 %v2236, 4294901760
        %v2728 = vsub.f32 %v2236, %v2727
        %v2729 = vand.u32 %v2728, 4294901760
        %v2730 = vsub.f32 %v2728, %v2729
        %v2731 = vand.u32 %v2730, 4294901760
        %2732 = vmatpush1.msra.mxu0 %v2731
        %2733 = vmatprep.subr.mxu0 0.0
        %v2734 = vand.u32 %v2235, 4294901760
        %v2735 = vsub.f32 %v2235, %v2734
        %v2736 = vand.u32 %v2735, 4294901760
        %v2737 = vsub.f32 %v2735, %v2736
        %v2738 = vand.u32 %v2737, 4294901760
        %2739 = vmatpush1.msra.mxu0 %v2738
        %2740 = vmatprep.subr.mxu0 0.0
        %v2741 = vand.u32 %v2234, 4294901760
        %v2742 = vsub.f32 %v2234, %v2741
        %v2743 = vand.u32 %v2742, 4294901760
        %v2744 = vsub.f32 %v2742, %v2743
        %v2745 = vand.u32 %v2744, 4294901760
        %2746 = vmatpush1.msra.mxu0 %v2745
        %2747 = vmatprep.subr.mxu0 0.0
        %v2748 = vand.u32 %v2233, 4294901760
        %v2749 = vsub.f32 %v2233, %v2748
        %v2750 = vand.u32 %v2749, 4294901760
        %v2751 = vsub.f32 %v2749, %v2750
        %v2752 = vand.u32 %v2751, 4294901760
        %2753 = vmatpush1.msra.mxu0 %v2752
        %2754 = vmatprep.subr.mxu0 0.0
        %2755 = vmatpush2.msra.mxu0 0.0
        %2756 = vmatprep.subr.mxu0 0.0
        %2757 = vmatpush2.msra.mxu0 0.0
        %2758 = vmatprep.subr.mxu0 0.0
        %2759 = vmatpush2.msra.mxu0 0.0
        %2760 = vmatprep.subr.mxu0 0.0
        %2761 = vmatpush2.msra.mxu0 0.0
        %2762 = vmatprep.subr.mxu0 0.0
        %2763 = vmatpush2.msra.mxu0 0.0
        %2764 = vmatprep.subr.mxu0 0.0
        %2765 = vmatpush2.msra.mxu0 0.0
        %2766 = vmatprep.subr.mxu0 0.0
        %2767 = vmatpush2.msra.mxu0 0.0
        %2768 = vmatprep.subr.mxu0 0.0
        %2769 = vmatpush2.msra.mxu0 0.0
        %2770 = vmatprep.subr.mxu0 0.0
        %2771 = vmatpush2.msra.mxu0 0.0
        %2772 = vmatprep.subr.mxu0 0.0
        %2773 = vmatpush2.msra.mxu0 0.0
        %2774 = vmatprep.subr.mxu0 0.0
        %2775 = vmatpush2.msra.mxu0 0.0
        %2776 = vmatprep.subr.mxu0 0.0
        %2777 = vmatpush2.msra.mxu0 0.0
        %2778 = vmatprep.subr.mxu0 0.0
        %2779 = vmatpush2.msra.mxu0 0.0
        %2780 = vmatprep.subr.mxu0 0.0
        %2781 = vmatpush2.msra.mxu0 0.0
        %2782 = vmatprep.subr.mxu0 0.0
        %2783 = vmatpush2.msra.mxu0 0.0
        %2784 = vmatprep.subr.mxu0 0.0
        %2785 = vmatpush2.msra.mxu0 0.0
        %2786 = vmatprep.mubr.f32.mxu0 0.0
        %v2787 = vand.u32 %v2239, 4294901760
        %2788 = vmatmul.mubr.f32.gmra.mxu0 %v2787
        %v2789 = vpop.f32.mrf.mxu0
        %v2790 = vadd.f32 %v2384, %v2789
        %v2791 = vpop.f32.mrf.mxu0
        %2792 = vmatprep.mubr.f32.mxu0 0.0
        %v2793 = vand.u32 %v2241, 4294901760
        %2794 = vmatmul.mubr.f32.gmra.mxu0 %v2793
        %v2795 = vpop.f32.mrf.mxu0
        %v2796 = vadd.f32 %v2394, %v2795
        %v2797 = vpop.f32.mrf.mxu0
        %2798 = vmatprep.mubr.f32.mxu0 0.0
        %v2799 = vand.u32 %v2243, 4294901760
        %2800 = vmatmul.mubr.f32.gmra.mxu0 %v2799
        %v2801 = vpop.f32.mrf.mxu0
        %v2802 = vadd.f32 %v2404, %v2801
        %v2803 = vpop.f32.mrf.mxu0
        %2804 = vmatprep.mubr.f32.mxu0 0.0
        %v2805 = vand.u32 %v2245, 4294901760
        %2806 = vmatmul.mubr.f32.gmra.mxu0 %v2805
        %v2807 = vpop.f32.mrf.mxu0
        %v2808 = vadd.f32 %v2414, %v2807
        %v2809 = vpop.f32.mrf.mxu0
        %2810 = vmatprep.mubr.f32.mxu0 0.0
        %v2811 = vand.u32 %v2247, 4294901760
        %2812 = vmatmul.mubr.f32.gmra.mxu0 %v2811
        %v2813 = vpop.f32.mrf.mxu0
        %v2814 = vadd.f32 %v2424, %v2813
        %v2815 = vpop.f32.mrf.mxu0
        %2816 = vmatprep.mubr.f32.mxu0 0.0
        %v2817 = vand.u32 %v2249, 4294901760
        %2818 = vmatmul.mubr.f32.gmra.mxu0 %v2817
        %v2819 = vpop.f32.mrf.mxu0
        %v2820 = vadd.f32 %v2434, %v2819
        %v2821 = vpop.f32.mrf.mxu0
        %2822 = vmatprep.mubr.f32.mxu0 0.0
        %v2823 = vand.u32 %v2251, 4294901760
        %2824 = vmatmul.mubr.f32.gmra.mxu0 %v2823
        %v2825 = vpop.f32.mrf.mxu0
        %v2826 = vadd.f32 %v2444, %v2825
        %v2827 = vpop.f32.mrf.mxu0
        %2828 = vmatprep.mubr.f32.mxu0 0.0
        %v2829 = vand.u32 %v2253, 4294901760
        %2830 = vmatmul.mubr.f32.gmra.mxu0 %v2829
        %v2831 = vpop.f32.mrf.mxu0
        %v2832 = vadd.f32 %v2454, %v2831
        %v2833 = vpop.f32.mrf.mxu0
        %2834 = vmatprep.mubr.f32.mxu0 0.0
        %v2835 = vand.u32 %v2255, 4294901760
        %2836 = vmatmul.mubr.f32.gmra.mxu0 %v2835
        %v2837 = vpop.f32.mrf.mxu0
        %v2838 = vadd.f32 %v2464, %v2837
        %v2839 = vpop.f32.mrf.mxu0
        %2840 = vmatprep.mubr.f32.mxu0 0.0
        %v2841 = vand.u32 %v2257, 4294901760
        %2842 = vmatmul.mubr.f32.gmra.mxu0 %v2841
        %v2843 = vpop.f32.mrf.mxu0
        %v2844 = vadd.f32 %v2474, %v2843
        %v2845 = vpop.f32.mrf.mxu0
        %2846 = vmatprep.mubr.f32.mxu0 0.0
        %v2847 = vand.u32 %v2259, 4294901760
        %2848 = vmatmul.mubr.f32.gmra.mxu0 %v2847
        %v2849 = vpop.f32.mrf.mxu0
        %v2850 = vadd.f32 %v2484, %v2849
        %v2851 = vpop.f32.mrf.mxu0
        %2852 = vmatprep.mubr.f32.mxu0 0.0
        %v2853 = vand.u32 %v2261, 4294901760
        %2854 = vmatmul.mubr.f32.gmra.mxu0 %v2853
        %v2855 = vpop.f32.mrf.mxu0
        %v2856 = vadd.f32 %v2494, %v2855
        %v2857 = vpop.f32.mrf.mxu0
        %2858 = vmatprep.mubr.f32.mxu0 0.0
        %v2859 = vand.u32 %v2263, 4294901760
        %2860 = vmatmul.mubr.f32.gmra.mxu0 %v2859
        %v2861 = vpop.f32.mrf.mxu0
        %v2862 = vadd.f32 %v2504, %v2861
        %v2863 = vpop.f32.mrf.mxu0
        %2864 = vmatprep.mubr.f32.mxu0 0.0
        %v2865 = vand.u32 %v2265, 4294901760
        %2866 = vmatmul.mubr.f32.gmra.mxu0 %v2865
        %v2867 = vpop.f32.mrf.mxu0
        %v2868 = vadd.f32 %v2514, %v2867
        %v2869 = vpop.f32.mrf.mxu0
        %2870 = vmatprep.mubr.f32.mxu0 0.0
        %v2871 = vand.u32 %v2267, 4294901760
        %2872 = vmatmul.mubr.f32.gmra.mxu0 %v2871
        %v2873 = vpop.f32.mrf.mxu0
        %v2874 = vadd.f32 %v2524, %v2873
        %v2875 = vpop.f32.mrf.mxu0
        %2876 = vmatprep.mubr.f32.mxu0 0.0
        %v2877 = vand.u32 %v2269, 4294901760
        %2878 = vmatmul.mubr.f32.gmra.mxu0 %v2877
        %v2879 = vpop.f32.mrf.mxu0
        %v2880 = vadd.f32 %v2534, %v2879
        %v2881 = vpop.f32.mrf.mxu0
        %2882 = vmatprep.mubr.f32.mxu0 0.0
        %v2883 = vand.u32 %v2271, 4294901760
        %2884 = vmatmul.mubr.f32.gmra.mxu0 %v2883
        %v2885 = vpop.f32.mrf.mxu0
        %v2886 = vadd.f32 %v2544, %v2885
        %v2887 = vpop.f32.mrf.mxu0
        %2888 = vmatprep.mubr.f32.mxu0 0.0
        %v2889 = vand.u32 %v2273, 4294901760
        %2890 = vmatmul.mubr.f32.gmra.mxu0 %v2889
        %v2891 = vpop.f32.mrf.mxu0
        %v2892 = vadd.f32 %v2554, %v2891
        %v2893 = vpop.f32.mrf.mxu0
        %2894 = vmatprep.mubr.f32.mxu0 0.0
        %v2895 = vand.u32 %v2275, 4294901760
        %2896 = vmatmul.mubr.f32.gmra.mxu0 %v2895
        %v2897 = vpop.f32.mrf.mxu0
        %v2898 = vadd.f32 %v2564, %v2897
        %v2899 = vpop.f32.mrf.mxu0
        %2900 = vmatprep.mubr.f32.mxu0 0.0
        %v2901 = vand.u32 %v2277, 4294901760
        %2902 = vmatmul.mubr.f32.gmra.mxu0 %v2901
        %v2903 = vpop.f32.mrf.mxu0
        %v2904 = vadd.f32 %v2574, %v2903
        %v2905 = vpop.f32.mrf.mxu0
        %2906 = vmatprep.mubr.f32.mxu0 0.0
        %v2907 = vand.u32 %v2279, 4294901760
        %2908 = vmatmul.mubr.f32.gmra.mxu0 %v2907
        %v2909 = vpop.f32.mrf.mxu0
        %v2910 = vadd.f32 %v2584, %v2909
        %v2911 = vpop.f32.mrf.mxu0
        %2912 = vmatprep.mubr.f32.mxu0 0.0
        %v2913 = vand.u32 %v2281, 4294901760
        %2914 = vmatmul.mubr.f32.gmra.mxu0 %v2913
        %v2915 = vpop.f32.mrf.mxu0
        %v2916 = vadd.f32 %v2594, %v2915
        %v2917 = vpop.f32.mrf.mxu0
        %2918 = vmatprep.mubr.f32.mxu0 0.0
        %v2919 = vand.u32 %v2283, 4294901760
        %2920 = vmatmul.mubr.f32.gmra.mxu0 %v2919
        %v2921 = vpop.f32.mrf.mxu0
        %v2922 = vadd.f32 %v2604, %v2921
        %v2923 = vpop.f32.mrf.mxu0
        %2924 = vmatprep.mubr.f32.mxu0 0.0
        %v2925 = vand.u32 %v2285, 4294901760
        %2926 = vmatmul.mubr.f32.gmra.mxu0 %v2925
        %v2927 = vpop.f32.mrf.mxu0
        %v2928 = vadd.f32 %v2614, %v2927
        %v2929 = vpop.f32.mrf.mxu0
        %2930 = vmatprep.mubr.f32.mxu0 0.0
        %v2931 = vand.u32 %v2287, 4294901760
        %2932 = vmatmul.mubr.f32.gmra.mxu0 %v2931
        %v2933 = vpop.f32.mrf.mxu0
        %v2934 = vadd.f32 %v2624, %v2933
        %v2935 = vpop.f32.mrf.mxu0
        %2936 = vmatprep.mubr.f32.mxu0 0.0
        %v2937 = vand.u32 %v2289, 4294901760
        %2938 = vmatmul.mubr.f32.gmra.mxu0 %v2937
        %v2939 = vpop.f32.mrf.mxu0
        %v2940 = vadd.f32 %v2634, %v2939
        %v2941 = vpop.f32.mrf.mxu0
        %2942 = vmatprep.mubr.f32.mxu0 0.0
        %v2943 = vand.u32 %v2291, 4294901760
        %2944 = vmatmul.mubr.f32.gmra.mxu0 %v2943
        %v2945 = vpop.f32.mrf.mxu0
        %v2946 = vadd.f32 %v2644, %v2945
        %v2947 = vpop.f32.mrf.mxu0
        %2948 = vmatprep.mubr.f32.mxu0 0.0
        %v2949 = vand.u32 %v2293, 4294901760
        %2950 = vmatmul.mubr.f32.gmra.mxu0 %v2949
        %v2951 = vpop.f32.mrf.mxu0
        %v2952 = vadd.f32 %v2654, %v2951
        %v2953 = vpop.f32.mrf.mxu0
        %2954 = vmatprep.mubr.f32.mxu0 0.0
        %v2955 = vand.u32 %v2295, 4294901760
        %2956 = vmatmul.mubr.f32.gmra.mxu0 %v2955
        %v2957 = vpop.f32.mrf.mxu0
        %v2958 = vadd.f32 %v2664, %v2957
        %v2959 = vpop.f32.mrf.mxu0
        %2960 = vmatprep.mubr.f32.mxu0 0.0
        %v2961 = vand.u32 %v2297, 4294901760
        %2962 = vmatmul.mubr.f32.gmra.mxu0 %v2961
        %v2963 = vpop.f32.mrf.mxu0
        %v2964 = vadd.f32 %v2674, %v2963
        %v2965 = vpop.f32.mrf.mxu0
        %2966 = vmatprep.mubr.f32.mxu0 0.0
        %v2967 = vand.u32 %v2299, 4294901760
        %2968 = vmatmul.mubr.f32.gmra.mxu0 %v2967
        %v2969 = vpop.f32.mrf.mxu0
        %v2970 = vadd.f32 %v2684, %v2969
        %v2971 = vpop.f32.mrf.mxu0
        %2972 = vmatprep.mubr.f32.mxu0 0.0
        %v2973 = vand.u32 %v2301, 4294901760
        %2974 = vmatmul.mubr.f32.gmra.mxu0 %v2973
        %v2975 = vpop.f32.mrf.mxu0
        %v2976 = vadd.f32 %v2694, %v2975
        %v2977 = vpop.f32.mrf.mxu0
        %2978 = vdwg.mxu0
        %2979 = vmatprep.subr.mxu0 0.0
        %2980 = vmatpush1.msra.mxu0 0.0
        %2981 = vmatprep.subr.mxu0 0.0
        %2982 = vmatpush1.msra.mxu0 0.0
        %2983 = vmatprep.subr.mxu0 0.0
        %2984 = vmatpush1.msra.mxu0 0.0
        %2985 = vmatprep.subr.mxu0 0.0
        %2986 = vmatpush1.msra.mxu0 0.0
        %2987 = vmatprep.subr.mxu0 0.0
        %2988 = vmatpush1.msra.mxu0 0.0
        %2989 = vmatprep.subr.mxu0 0.0
        %2990 = vmatpush1.msra.mxu0 0.0
        %2991 = vmatprep.subr.mxu0 0.0
        %2992 = vmatpush1.msra.mxu0 0.0
        %2993 = vmatprep.subr.mxu0 0.0
        %2994 = vmatpush1.msra.mxu0 0.0
        %2995 = vmatprep.subr.mxu0 0.0
        %2996 = vmatpush1.msra.mxu0 0.0
        %2997 = vmatprep.subr.mxu0 0.0
        %2998 = vmatpush1.msra.mxu0 0.0
        %2999 = vmatprep.subr.mxu0 0.0
        %3000 = vmatpush1.msra.mxu0 0.0
        %3001 = vmatprep.subr.mxu0 0.0
        %v3002 = vand.u32 %v2305, 4294901760
        %v3003 = vsub.f32 %v2305, %v3002
        %3004 = vmatpush1.msra.mxu0 %v3003
        %3005 = vmatprep.subr.mxu0 0.0
        %v3006 = vand.u32 %v2236, 4294901760
        %v3007 = vsub.f32 %v2236, %v3006
        %3008 = vmatpush1.msra.mxu0 %v3007
        %3009 = vmatprep.subr.mxu0 0.0
        %v3010 = vand.u32 %v2235, 4294901760
        %v3011 = vsub.f32 %v2235, %v3010
        %3012 = vmatpush1.msra.mxu0 %v3011
        %3013 = vmatprep.subr.mxu0 0.0
        %v3014 = vand.u32 %v2234, 4294901760
        %v3015 = vsub.f32 %v2234, %v3014
        %3016 = vmatpush1.msra.mxu0 %v3015
        %3017 = vmatprep.subr.mxu0 0.0
        %v3018 = vand.u32 %v2233, 4294901760
        %v3019 = vsub.f32 %v2233, %v3018
        %3020 = vmatpush1.msra.mxu0 %v3019
        %3021 = vmatprep.subr.mxu0 0.0
        %3022 = vmatpush2.msra.mxu0 0.0
        %3023 = vmatprep.subr.mxu0 0.0
        %3024 = vmatpush2.msra.mxu0 0.0
        %3025 = vmatprep.subr.mxu0 0.0
        %3026 = vmatpush2.msra.mxu0 0.0
        %3027 = vmatprep.subr.mxu0 0.0
        %3028 = vmatpush2.msra.mxu0 0.0
        %3029 = vmatprep.subr.mxu0 0.0
        %3030 = vmatpush2.msra.mxu0 0.0
        %3031 = vmatprep.subr.mxu0 0.0
        %3032 = vmatpush2.msra.mxu0 0.0
        %3033 = vmatprep.subr.mxu0 0.0
        %3034 = vmatpush2.msra.mxu0 0.0
        %3035 = vmatprep.subr.mxu0 0.0
        %3036 = vmatpush2.msra.mxu0 0.0
        %3037 = vmatprep.subr.mxu0 0.0
        %3038 = vmatpush2.msra.mxu0 0.0
        %3039 = vmatprep.subr.mxu0 0.0
        %3040 = vmatpush2.msra.mxu0 0.0
        %3041 = vmatprep.subr.mxu0 0.0
        %3042 = vmatpush2.msra.mxu0 0.0
        %3043 = vmatprep.subr.mxu0 0.0
        %3044 = vmatpush2.msra.mxu0 0.0
        %3045 = vmatprep.subr.mxu0 0.0
        %3046 = vmatpush2.msra.mxu0 0.0
        %3047 = vmatprep.subr.mxu0 0.0
        %3048 = vmatpush2.msra.mxu0 0.0
        %3049 = vmatprep.subr.mxu0 0.0
        %3050 = vmatpush2.msra.mxu0 0.0
        %3051 = vmatprep.subr.mxu0 0.0
        %3052 = vmatpush2.msra.mxu0 0.0
        %3053 = vmatprep.mubr.f32.mxu0 0.0
        %v3054 = vand.u32 %v2239, 4294901760
        %v3055 = vsub.f32 %v2239, %v3054
        %3056 = vmatmul.mubr.f32.gmra.mxu0 %v3055
        %v3057 = vpop.f32.mrf.mxu0
        %v3058 = vadd.f32 %v2790, %v3057
        %v3059 = vpop.f32.mrf.mxu0
        %3060 = vmatprep.mubr.f32.mxu0 0.0
        %v3061 = vand.u32 %v2241, 4294901760
        %v3062 = vsub.f32 %v2241, %v3061
        %3063 = vmatmul.mubr.f32.gmra.mxu0 %v3062
        %v3064 = vpop.f32.mrf.mxu0
        %v3065 = vadd.f32 %v2796, %v3064
        %v3066 = vpop.f32.mrf.mxu0
        %3067 = vmatprep.mubr.f32.mxu0 0.0
        %v3068 = vand.u32 %v2243, 4294901760
        %v3069 = vsub.f32 %v2243, %v3068
        %3070 = vmatmul.mubr.f32.gmra.mxu0 %v3069
        %v3071 = vpop.f32.mrf.mxu0
        %v3072 = vadd.f32 %v2802, %v3071
        %v3073 = vpop.f32.mrf.mxu0
        %3074 = vmatprep.mubr.f32.mxu0 0.0
        %v3075 = vand.u32 %v2245, 4294901760
        %v3076 = vsub.f32 %v2245, %v3075
        %3077 = vmatmul.mubr.f32.gmra.mxu0 %v3076
        %v3078 = vpop.f32.mrf.mxu0
        %v3079 = vadd.f32 %v2808, %v3078
        %v3080 = vpop.f32.mrf.mxu0
        %3081 = vmatprep.mubr.f32.mxu0 0.0
        %v3082 = vand.u32 %v2247, 4294901760
        %v3083 = vsub.f32 %v2247, %v3082
        %3084 = vmatmul.mubr.f32.gmra.mxu0 %v3083
        %v3085 = vpop.f32.mrf.mxu0
        %v3086 = vadd.f32 %v2814, %v3085
        %v3087 = vpop.f32.mrf.mxu0
        %3088 = vmatprep.mubr.f32.mxu0 0.0
        %v3089 = vand.u32 %v2249, 4294901760
        %v3090 = vsub.f32 %v2249, %v3089
        %3091 = vmatmul.mubr.f32.gmra.mxu0 %v3090
        %v3092 = vpop.f32.mrf.mxu0
        %v3093 = vadd.f32 %v2820, %v3092
        %v3094 = vpop.f32.mrf.mxu0
        %3095 = vmatprep.mubr.f32.mxu0 0.0
        %v3096 = vand.u32 %v2251, 4294901760
        %v3097 = vsub.f32 %v2251, %v3096
        %3098 = vmatmul.mubr.f32.gmra.mxu0 %v3097
        %v3099 = vpop.f32.mrf.mxu0
        %v3100 = vadd.f32 %v2826, %v3099
        %v3101 = vpop.f32.mrf.mxu0
        %3102 = vmatprep.mubr.f32.mxu0 0.0
        %v3103 = vand.u32 %v2253, 4294901760
        %v3104 = vsub.f32 %v2253, %v3103
        %3105 = vmatmul.mubr.f32.gmra.mxu0 %v3104
        %v3106 = vpop.f32.mrf.mxu0
        %v3107 = vadd.f32 %v2832, %v3106
        %v3108 = vpop.f32.mrf.mxu0
        %3109 = vmatprep.mubr.f32.mxu0 0.0
        %v3110 = vand.u32 %v2255, 4294901760
        %v3111 = vsub.f32 %v2255, %v3110
        %3112 = vmatmul.mubr.f32.gmra.mxu0 %v3111
        %v3113 = vpop.f32.mrf.mxu0
        %v3114 = vadd.f32 %v2838, %v3113
        %v3115 = vpop.f32.mrf.mxu0
        %3116 = vmatprep.mubr.f32.mxu0 0.0
        %v3117 = vand.u32 %v2257, 4294901760
        %v3118 = vsub.f32 %v2257, %v3117
        %3119 = vmatmul.mubr.f32.gmra.mxu0 %v3118
        %v3120 = vpop.f32.mrf.mxu0
        %v3121 = vadd.f32 %v2844, %v3120
        %v3122 = vpop.f32.mrf.mxu0
        %3123 = vmatprep.mubr.f32.mxu0 0.0
        %v3124 = vand.u32 %v2259, 4294901760
        %v3125 = vsub.f32 %v2259, %v3124
        %3126 = vmatmul.mubr.f32.gmra.mxu0 %v3125
        %v3127 = vpop.f32.mrf.mxu0
        %v3128 = vadd.f32 %v2850, %v3127
        %v3129 = vpop.f32.mrf.mxu0
        %3130 = vmatprep.mubr.f32.mxu0 0.0
        %v3131 = vand.u32 %v2261, 4294901760
        %v3132 = vsub.f32 %v2261, %v3131
        %3133 = vmatmul.mubr.f32.gmra.mxu0 %v3132
        %v3134 = vpop.f32.mrf.mxu0
        %v3135 = vadd.f32 %v2856, %v3134
        %v3136 = vpop.f32.mrf.mxu0
        %3137 = vmatprep.mubr.f32.mxu0 0.0
        %v3138 = vand.u32 %v2263, 4294901760
        %v3139 = vsub.f32 %v2263, %v3138
        %3140 = vmatmul.mubr.f32.gmra.mxu0 %v3139
        %v3141 = vpop.f32.mrf.mxu0
        %v3142 = vadd.f32 %v2862, %v3141
        %v3143 = vpop.f32.mrf.mxu0
        %3144 = vmatprep.mubr.f32.mxu0 0.0
        %v3145 = vand.u32 %v2265, 4294901760
        %v3146 = vsub.f32 %v2265, %v3145
        %3147 = vmatmul.mubr.f32.gmra.mxu0 %v3146
        %v3148 = vpop.f32.mrf.mxu0
        %v3149 = vadd.f32 %v2868, %v3148
        %v3150 = vpop.f32.mrf.mxu0
        %3151 = vmatprep.mubr.f32.mxu0 0.0
        %v3152 = vand.u32 %v2267, 4294901760
        %v3153 = vsub.f32 %v2267, %v3152
        %3154 = vmatmul.mubr.f32.gmra.mxu0 %v3153
        %v3155 = vpop.f32.mrf.mxu0
        %v3156 = vadd.f32 %v2874, %v3155
        %v3157 = vpop.f32.mrf.mxu0
        %3158 = vmatprep.mubr.f32.mxu0 0.0
        %v3159 = vand.u32 %v2269, 4294901760
        %v3160 = vsub.f32 %v2269, %v3159
        %3161 = vmatmul.mubr.f32.gmra.mxu0 %v3160
        %v3162 = vpop.f32.mrf.mxu0
        %v3163 = vadd.f32 %v2880, %v3162
        %v3164 = vpop.f32.mrf.mxu0
        %3165 = vmatprep.mubr.f32.mxu0 0.0
        %v3166 = vand.u32 %v2271, 4294901760
        %v3167 = vsub.f32 %v2271, %v3166
        %3168 = vmatmul.mubr.f32.gmra.mxu0 %v3167
        %v3169 = vpop.f32.mrf.mxu0
        %v3170 = vadd.f32 %v2886, %v3169
        %v3171 = vpop.f32.mrf.mxu0
        %3172 = vmatprep.mubr.f32.mxu0 0.0
        %v3173 = vand.u32 %v2273, 4294901760
        %v3174 = vsub.f32 %v2273, %v3173
        %3175 = vmatmul.mubr.f32.gmra.mxu0 %v3174
        %v3176 = vpop.f32.mrf.mxu0
        %v3177 = vadd.f32 %v2892, %v3176
        %v3178 = vpop.f32.mrf.mxu0
        %3179 = vmatprep.mubr.f32.mxu0 0.0
        %v3180 = vand.u32 %v2275, 4294901760
        %v3181 = vsub.f32 %v2275, %v3180
        %3182 = vmatmul.mubr.f32.gmra.mxu0 %v3181
        %v3183 = vpop.f32.mrf.mxu0
        %v3184 = vadd.f32 %v2898, %v3183
        %v3185 = vpop.f32.mrf.mxu0
        %3186 = vmatprep.mubr.f32.mxu0 0.0
        %v3187 = vand.u32 %v2277, 4294901760
        %v3188 = vsub.f32 %v2277, %v3187
        %3189 = vmatmul.mubr.f32.gmra.mxu0 %v3188
        %v3190 = vpop.f32.mrf.mxu0
        %v3191 = vadd.f32 %v2904, %v3190
        %v3192 = vpop.f32.mrf.mxu0
        %3193 = vmatprep.mubr.f32.mxu0 0.0
        %v3194 = vand.u32 %v2279, 4294901760
        %v3195 = vsub.f32 %v2279, %v3194
        %3196 = vmatmul.mubr.f32.gmra.mxu0 %v3195
        %v3197 = vpop.f32.mrf.mxu0
        %v3198 = vadd.f32 %v2910, %v3197
        %v3199 = vpop.f32.mrf.mxu0
        %3200 = vmatprep.mubr.f32.mxu0 0.0
        %v3201 = vand.u32 %v2281, 4294901760
        %v3202 = vsub.f32 %v2281, %v3201
        %3203 = vmatmul.mubr.f32.gmra.mxu0 %v3202
        %v3204 = vpop.f32.mrf.mxu0
        %v3205 = vadd.f32 %v2916, %v3204
        %v3206 = vpop.f32.mrf.mxu0
        %3207 = vmatprep.mubr.f32.mxu0 0.0
        %v3208 = vand.u32 %v2283, 4294901760
        %v3209 = vsub.f32 %v2283, %v3208
        %3210 = vmatmul.mubr.f32.gmra.mxu0 %v3209
        %v3211 = vpop.f32.mrf.mxu0
        %v3212 = vadd.f32 %v2922, %v3211
        %v3213 = vpop.f32.mrf.mxu0
        %3214 = vmatprep.mubr.f32.mxu0 0.0
        %v3215 = vand.u32 %v2285, 4294901760
        %v3216 = vsub.f32 %v2285, %v3215
        %3217 = vmatmul.mubr.f32.gmra.mxu0 %v3216
        %v3218 = vpop.f32.mrf.mxu0
        %v3219 = vadd.f32 %v2928, %v3218
        %v3220 = vpop.f32.mrf.mxu0
        %3221 = vmatprep.mubr.f32.mxu0 0.0
        %v3222 = vand.u32 %v2287, 4294901760
        %v3223 = vsub.f32 %v2287, %v3222
        %3224 = vmatmul.mubr.f32.gmra.mxu0 %v3223
        %v3225 = vpop.f32.mrf.mxu0
        %v3226 = vadd.f32 %v2934, %v3225
        %v3227 = vpop.f32.mrf.mxu0
        %3228 = vmatprep.mubr.f32.mxu0 0.0
        %v3229 = vand.u32 %v2289, 4294901760
        %v3230 = vsub.f32 %v2289, %v3229
        %3231 = vmatmul.mubr.f32.gmra.mxu0 %v3230
        %v3232 = vpop.f32.mrf.mxu0
        %v3233 = vadd.f32 %v2940, %v3232
        %v3234 = vpop.f32.mrf.mxu0
        %3235 = vmatprep.mubr.f32.mxu0 0.0
        %v3236 = vand.u32 %v2291, 4294901760
        %v3237 = vsub.f32 %v2291, %v3236
        %3238 = vmatmul.mubr.f32.gmra.mxu0 %v3237
        %v3239 = vpop.f32.mrf.mxu0
        %v3240 = vadd.f32 %v2946, %v3239
        %v3241 = vpop.f32.mrf.mxu0
        %3242 = vmatprep.mubr.f32.mxu0 0.0
        %v3243 = vand.u32 %v2293, 4294901760
        %v3244 = vsub.f32 %v2293, %v3243
        %3245 = vmatmul.mubr.f32.gmra.mxu0 %v3244
        %v3246 = vpop.f32.mrf.mxu0
        %v3247 = vadd.f32 %v2952, %v3246
        %v3248 = vpop.f32.mrf.mxu0
        %3249 = vmatprep.mubr.f32.mxu0 0.0
        %v3250 = vand.u32 %v2295, 4294901760
        %v3251 = vsub.f32 %v2295, %v3250
        %3252 = vmatmul.mubr.f32.gmra.mxu0 %v3251
        %v3253 = vpop.f32.mrf.mxu0
        %v3254 = vadd.f32 %v2958, %v3253
        %v3255 = vpop.f32.mrf.mxu0
        %3256 = vmatprep.mubr.f32.mxu0 0.0
        %v3257 = vand.u32 %v2297, 4294901760
        %v3258 = vsub.f32 %v2297, %v3257
        %3259 = vmatmul.mubr.f32.gmra.mxu0 %v3258
        %v3260 = vpop.f32.mrf.mxu0
        %v3261 = vadd.f32 %v2964, %v3260
        %v3262 = vpop.f32.mrf.mxu0
        %3263 = vmatprep.mubr.f32.mxu0 0.0
        %v3264 = vand.u32 %v2299, 4294901760
        %v3265 = vsub.f32 %v2299, %v3264
        %3266 = vmatmul.mubr.f32.gmra.mxu0 %v3265
        %v3267 = vpop.f32.mrf.mxu0
        %v3268 = vadd.f32 %v2970, %v3267
        %v3269 = vpop.f32.mrf.mxu0
        %3270 = vmatprep.mubr.f32.mxu0 0.0
        %v3271 = vand.u32 %v2301, 4294901760
        %v3272 = vsub.f32 %v2301, %v3271
        %3273 = vmatmul.mubr.f32.gmra.mxu0 %v3272
        %v3274 = vpop.f32.mrf.mxu0
        %v3275 = vadd.f32 %v2976, %v3274
        %v3276 = vpop.f32.mrf.mxu0
        %3277 = vdwg.mxu0
        %3278 = vmatprep.subr.mxu0 0.0
        %3279 = vmatpush1.msra.mxu0 0.0
        %3280 = vmatprep.subr.mxu0 0.0
        %3281 = vmatpush1.msra.mxu0 0.0
        %3282 = vmatprep.subr.mxu0 0.0
        %3283 = vmatpush1.msra.mxu0 0.0
        %3284 = vmatprep.subr.mxu0 0.0
        %3285 = vmatpush1.msra.mxu0 0.0
        %3286 = vmatprep.subr.mxu0 0.0
        %3287 = vmatpush1.msra.mxu0 0.0
        %3288 = vmatprep.subr.mxu0 0.0
        %3289 = vmatpush1.msra.mxu0 0.0
        %3290 = vmatprep.subr.mxu0 0.0
        %3291 = vmatpush1.msra.mxu0 0.0
        %3292 = vmatprep.subr.mxu0 0.0
        %3293 = vmatpush1.msra.mxu0 0.0
        %3294 = vmatprep.subr.mxu0 0.0
        %3295 = vmatpush1.msra.mxu0 0.0
        %3296 = vmatprep.subr.mxu0 0.0
        %3297 = vmatpush1.msra.mxu0 0.0
        %3298 = vmatprep.subr.mxu0 0.0
        %3299 = vmatpush1.msra.mxu0 0.0
        %3300 = vmatprep.subr.mxu0 0.0
        %v3301 = vand.u32 %v2305, 4294901760
        %3302 = vmatpush1.msra.mxu0 %v3301
        %3303 = vmatprep.subr.mxu0 0.0
        %v3304 = vand.u32 %v2236, 4294901760
        %3305 = vmatpush1.msra.mxu0 %v3304
        %3306 = vmatprep.subr.mxu0 0.0
        %v3307 = vand.u32 %v2235, 4294901760
        %3308 = vmatpush1.msra.mxu0 %v3307
        %3309 = vmatprep.subr.mxu0 0.0
        %v3310 = vand.u32 %v2234, 4294901760
        %3311 = vmatpush1.msra.mxu0 %v3310
        %3312 = vmatprep.subr.mxu0 0.0
        %v3313 = vand.u32 %v2233, 4294901760
        %3314 = vmatpush1.msra.mxu0 %v3313
        %3315 = vmatprep.subr.mxu0 0.0
        %3316 = vmatpush2.msra.mxu0 0.0
        %3317 = vmatprep.subr.mxu0 0.0
        %3318 = vmatpush2.msra.mxu0 0.0
        %3319 = vmatprep.subr.mxu0 0.0
        %3320 = vmatpush2.msra.mxu0 0.0
        %3321 = vmatprep.subr.mxu0 0.0
        %3322 = vmatpush2.msra.mxu0 0.0
        %3323 = vmatprep.subr.mxu0 0.0
        %3324 = vmatpush2.msra.mxu0 0.0
        %3325 = vmatprep.subr.mxu0 0.0
        %3326 = vmatpush2.msra.mxu0 0.0
        %3327 = vmatprep.subr.mxu0 0.0
        %3328 = vmatpush2.msra.mxu0 0.0
        %3329 = vmatprep.subr.mxu0 0.0
        %3330 = vmatpush2.msra.mxu0 0.0
        %3331 = vmatprep.subr.mxu0 0.0
        %3332 = vmatpush2.msra.mxu0 0.0
        %3333 = vmatprep.subr.mxu0 0.0
        %3334 = vmatpush2.msra.mxu0 0.0
        %3335 = vmatprep.subr.mxu0 0.0
        %3336 = vmatpush2.msra.mxu0 0.0
        %3337 = vmatprep.subr.mxu0 0.0
        %3338 = vmatpush2.msra.mxu0 0.0
        %3339 = vmatprep.subr.mxu0 0.0
        %3340 = vmatpush2.msra.mxu0 0.0
        %3341 = vmatprep.subr.mxu0 0.0
        %3342 = vmatpush2.msra.mxu0 0.0
        %3343 = vmatprep.subr.mxu0 0.0
        %3344 = vmatpush2.msra.mxu0 0.0
        %3345 = vmatprep.subr.mxu0 0.0
        %3346 = vmatpush2.msra.mxu0 0.0
        %3347 = vmatprep.mubr.f32.mxu0 0.0
        %v3348 = vand.u32 %v2239, 4294901760
        %v3349 = vsub.f32 %v2239, %v3348
        %v3350 = vand.u32 %v3349, 4294901760
        %3351 = vmatmul.mubr.f32.gmra.mxu0 %v3350
        %v3352 = vpop.f32.mrf.mxu0
        %v3353 = vadd.f32 %v3058, %v3352
        %v3354 = vpop.f32.mrf.mxu0
        %3355 = vmatprep.mubr.f32.mxu0 0.0
        %v3356 = vand.u32 %v2241, 4294901760
        %v3357 = vsub.f32 %v2241, %v3356
        %v3358 = vand.u32 %v3357, 4294901760
        %3359 = vmatmul.mubr.f32.gmra.mxu0 %v3358
        %v3360 = vpop.f32.mrf.mxu0
        %v3361 = vadd.f32 %v3065, %v3360
        %v3362 = vpop.f32.mrf.mxu0
        %3363 = vmatprep.mubr.f32.mxu0 0.0
        %v3364 = vand.u32 %v2243, 4294901760
        %v3365 = vsub.f32 %v2243, %v3364
        %v3366 = vand.u32 %v3365, 4294901760
        %3367 = vmatmul.mubr.f32.gmra.mxu0 %v3366
        %v3368 = vpop.f32.mrf.mxu0
        %v3369 = vadd.f32 %v3072, %v3368
        %v3370 = vpop.f32.mrf.mxu0
        %3371 = vmatprep.mubr.f32.mxu0 0.0
        %v3372 = vand.u32 %v2245, 4294901760
        %v3373 = vsub.f32 %v2245, %v3372
        %v3374 = vand.u32 %v3373, 4294901760
        %3375 = vmatmul.mubr.f32.gmra.mxu0 %v3374
        %v3376 = vpop.f32.mrf.mxu0
        %v3377 = vadd.f32 %v3079, %v3376
        %v3378 = vpop.f32.mrf.mxu0
        %3379 = vmatprep.mubr.f32.mxu0 0.0
        %v3380 = vand.u32 %v2247, 4294901760
        %v3381 = vsub.f32 %v2247, %v3380
        %v3382 = vand.u32 %v3381, 4294901760
        %3383 = vmatmul.mubr.f32.gmra.mxu0 %v3382
        %v3384 = vpop.f32.mrf.mxu0
        %v3385 = vadd.f32 %v3086, %v3384
        %v3386 = vpop.f32.mrf.mxu0
        %3387 = vmatprep.mubr.f32.mxu0 0.0
        %v3388 = vand.u32 %v2249, 4294901760
        %v3389 = vsub.f32 %v2249, %v3388
        %v3390 = vand.u32 %v3389, 4294901760
        %3391 = vmatmul.mubr.f32.gmra.mxu0 %v3390
        %v3392 = vpop.f32.mrf.mxu0
        %v3393 = vadd.f32 %v3093, %v3392
        %v3394 = vpop.f32.mrf.mxu0
        %3395 = vmatprep.mubr.f32.mxu0 0.0
        %v3396 = vand.u32 %v2251, 4294901760
        %v3397 = vsub.f32 %v2251, %v3396
        %v3398 = vand.u32 %v3397, 4294901760
        %3399 = vmatmul.mubr.f32.gmra.mxu0 %v3398
        %v3400 = vpop.f32.mrf.mxu0
        %v3401 = vadd.f32 %v3100, %v3400
        %v3402 = vpop.f32.mrf.mxu0
        %3403 = vmatprep.mubr.f32.mxu0 0.0
        %v3404 = vand.u32 %v2253, 4294901760
        %v3405 = vsub.f32 %v2253, %v3404
        %v3406 = vand.u32 %v3405, 4294901760
        %3407 = vmatmul.mubr.f32.gmra.mxu0 %v3406
        %v3408 = vpop.f32.mrf.mxu0
        %v3409 = vadd.f32 %v3107, %v3408
        %v3410 = vpop.f32.mrf.mxu0
        %3411 = vmatprep.mubr.f32.mxu0 0.0
        %v3412 = vand.u32 %v2255, 4294901760
        %v3413 = vsub.f32 %v2255, %v3412
        %v3414 = vand.u32 %v3413, 4294901760
        %3415 = vmatmul.mubr.f32.gmra.mxu0 %v3414
        %v3416 = vpop.f32.mrf.mxu0
        %v3417 = vadd.f32 %v3114, %v3416
        %v3418 = vpop.f32.mrf.mxu0
        %3419 = vmatprep.mubr.f32.mxu0 0.0
        %v3420 = vand.u32 %v2257, 4294901760
        %v3421 = vsub.f32 %v2257, %v3420
        %v3422 = vand.u32 %v3421, 4294901760
        %3423 = vmatmul.mubr.f32.gmra.mxu0 %v3422
        %v3424 = vpop.f32.mrf.mxu0
        %v3425 = vadd.f32 %v3121, %v3424
        %v3426 = vpop.f32.mrf.mxu0
        %3427 = vmatprep.mubr.f32.mxu0 0.0
        %v3428 = vand.u32 %v2259, 4294901760
        %v3429 = vsub.f32 %v2259, %v3428
        %v3430 = vand.u32 %v3429, 4294901760
        %3431 = vmatmul.mubr.f32.gmra.mxu0 %v3430
        %v3432 = vpop.f32.mrf.mxu0
        %v3433 = vadd.f32 %v3128, %v3432
        %v3434 = vpop.f32.mrf.mxu0
        %3435 = vmatprep.mubr.f32.mxu0 0.0
        %v3436 = vand.u32 %v2261, 4294901760
        %v3437 = vsub.f32 %v2261, %v3436
        %v3438 = vand.u32 %v3437, 4294901760
        %3439 = vmatmul.mubr.f32.gmra.mxu0 %v3438
        %v3440 = vpop.f32.mrf.mxu0
        %v3441 = vadd.f32 %v3135, %v3440
        %v3442 = vpop.f32.mrf.mxu0
        %3443 = vmatprep.mubr.f32.mxu0 0.0
        %v3444 = vand.u32 %v2263, 4294901760
        %v3445 = vsub.f32 %v2263, %v3444
        %v3446 = vand.u32 %v3445, 4294901760
        %3447 = vmatmul.mubr.f32.gmra.mxu0 %v3446
        %v3448 = vpop.f32.mrf.mxu0
        %v3449 = vadd.f32 %v3142, %v3448
        %v3450 = vpop.f32.mrf.mxu0
        %3451 = vmatprep.mubr.f32.mxu0 0.0
        %v3452 = vand.u32 %v2265, 4294901760
        %v3453 = vsub.f32 %v2265, %v3452
        %v3454 = vand.u32 %v3453, 4294901760
        %3455 = vmatmul.mubr.f32.gmra.mxu0 %v3454
        %v3456 = vpop.f32.mrf.mxu0
        %v3457 = vadd.f32 %v3149, %v3456
        %v3458 = vpop.f32.mrf.mxu0
        %3459 = vmatprep.mubr.f32.mxu0 0.0
        %v3460 = vand.u32 %v2267, 4294901760
        %v3461 = vsub.f32 %v2267, %v3460
        %v3462 = vand.u32 %v3461, 4294901760
        %3463 = vmatmul.mubr.f32.gmra.mxu0 %v3462
        %v3464 = vpop.f32.mrf.mxu0
        %v3465 = vadd.f32 %v3156, %v3464
        %v3466 = vpop.f32.mrf.mxu0
        %3467 = vmatprep.mubr.f32.mxu0 0.0
        %v3468 = vand.u32 %v2269, 4294901760
        %v3469 = vsub.f32 %v2269, %v3468
        %v3470 = vand.u32 %v3469, 4294901760
        %3471 = vmatmul.mubr.f32.gmra.mxu0 %v3470
        %v3472 = vpop.f32.mrf.mxu0
        %v3473 = vadd.f32 %v3163, %v3472
        %v3474 = vpop.f32.mrf.mxu0
        %3475 = vmatprep.mubr.f32.mxu0 0.0
        %v3476 = vand.u32 %v2271, 4294901760
        %v3477 = vsub.f32 %v2271, %v3476
        %v3478 = vand.u32 %v3477, 4294901760
        %3479 = vmatmul.mubr.f32.gmra.mxu0 %v3478
        %v3480 = vpop.f32.mrf.mxu0
        %v3481 = vadd.f32 %v3170, %v3480
        %v3482 = vpop.f32.mrf.mxu0
        %3483 = vmatprep.mubr.f32.mxu0 0.0
        %v3484 = vand.u32 %v2273, 4294901760
        %v3485 = vsub.f32 %v2273, %v3484
        %v3486 = vand.u32 %v3485, 4294901760
        %3487 = vmatmul.mubr.f32.gmra.mxu0 %v3486
        %v3488 = vpop.f32.mrf.mxu0
        %v3489 = vadd.f32 %v3177, %v3488
        %v3490 = vpop.f32.mrf.mxu0
        %3491 = vmatprep.mubr.f32.mxu0 0.0
        %v3492 = vand.u32 %v2275, 4294901760
        %v3493 = vsub.f32 %v2275, %v3492
        %v3494 = vand.u32 %v3493, 4294901760
        %3495 = vmatmul.mubr.f32.gmra.mxu0 %v3494
        %v3496 = vpop.f32.mrf.mxu0
        %v3497 = vadd.f32 %v3184, %v3496
        %v3498 = vpop.f32.mrf.mxu0
        %3499 = vmatprep.mubr.f32.mxu0 0.0
        %v3500 = vand.u32 %v2277, 4294901760
        %v3501 = vsub.f32 %v2277, %v3500
        %v3502 = vand.u32 %v3501, 4294901760
        %3503 = vmatmul.mubr.f32.gmra.mxu0 %v3502
        %v3504 = vpop.f32.mrf.mxu0
        %v3505 = vadd.f32 %v3191, %v3504
        %v3506 = vpop.f32.mrf.mxu0
        %3507 = vmatprep.mubr.f32.mxu0 0.0
        %v3508 = vand.u32 %v2279, 4294901760
        %v3509 = vsub.f32 %v2279, %v3508
        %v3510 = vand.u32 %v3509, 4294901760
        %3511 = vmatmul.mubr.f32.gmra.mxu0 %v3510
        %v3512 = vpop.f32.mrf.mxu0
        %v3513 = vadd.f32 %v3198, %v3512
        %v3514 = vpop.f32.mrf.mxu0
        %3515 = vmatprep.mubr.f32.mxu0 0.0
        %v3516 = vand.u32 %v2281, 4294901760
        %v3517 = vsub.f32 %v2281, %v3516
        %v3518 = vand.u32 %v3517, 4294901760
        %3519 = vmatmul.mubr.f32.gmra.mxu0 %v3518
        %v3520 = vpop.f32.mrf.mxu0
        %v3521 = vadd.f32 %v3205, %v3520
        %v3522 = vpop.f32.mrf.mxu0
        %3523 = vmatprep.mubr.f32.mxu0 0.0
        %v3524 = vand.u32 %v2283, 4294901760
        %v3525 = vsub.f32 %v2283, %v3524
        %v3526 = vand.u32 %v3525, 4294901760
        %3527 = vmatmul.mubr.f32.gmra.mxu0 %v3526
        %v3528 = vpop.f32.mrf.mxu0
        %v3529 = vadd.f32 %v3212, %v3528
        %v3530 = vpop.f32.mrf.mxu0
        %3531 = vmatprep.mubr.f32.mxu0 0.0
        %v3532 = vand.u32 %v2285, 4294901760
        %v3533 = vsub.f32 %v2285, %v3532
        %v3534 = vand.u32 %v3533, 4294901760
        %3535 = vmatmul.mubr.f32.gmra.mxu0 %v3534
        %v3536 = vpop.f32.mrf.mxu0
        %v3537 = vadd.f32 %v3219, %v3536
        %v3538 = vpop.f32.mrf.mxu0
        %3539 = vmatprep.mubr.f32.mxu0 0.0
        %v3540 = vand.u32 %v2287, 4294901760
        %v3541 = vsub.f32 %v2287, %v3540
        %v3542 = vand.u32 %v3541, 4294901760
        %3543 = vmatmul.mubr.f32.gmra.mxu0 %v3542
        %v3544 = vpop.f32.mrf.mxu0
        %v3545 = vadd.f32 %v3226, %v3544
        %v3546 = vpop.f32.mrf.mxu0
        %3547 = vmatprep.mubr.f32.mxu0 0.0
        %v3548 = vand.u32 %v2289, 4294901760
        %v3549 = vsub.f32 %v2289, %v3548
        %v3550 = vand.u32 %v3549, 4294901760
        %3551 = vmatmul.mubr.f32.gmra.mxu0 %v3550
        %v3552 = vpop.f32.mrf.mxu0
        %v3553 = vadd.f32 %v3233, %v3552
        %v3554 = vpop.f32.mrf.mxu0
        %3555 = vmatprep.mubr.f32.mxu0 0.0
        %v3556 = vand.u32 %v2291, 4294901760
        %v3557 = vsub.f32 %v2291, %v3556
        %v3558 = vand.u32 %v3557, 4294901760
        %3559 = vmatmul.mubr.f32.gmra.mxu0 %v3558
        %v3560 = vpop.f32.mrf.mxu0
        %v3561 = vadd.f32 %v3240, %v3560
        %v3562 = vpop.f32.mrf.mxu0
        %3563 = vmatprep.mubr.f32.mxu0 0.0
        %v3564 = vand.u32 %v2293, 4294901760
        %v3565 = vsub.f32 %v2293, %v3564
        %v3566 = vand.u32 %v3565, 4294901760
        %3567 = vmatmul.mubr.f32.gmra.mxu0 %v3566
        %v3568 = vpop.f32.mrf.mxu0
        %v3569 = vadd.f32 %v3247, %v3568
        %v3570 = vpop.f32.mrf.mxu0
        %3571 = vmatprep.mubr.f32.mxu0 0.0
        %v3572 = vand.u32 %v2295, 4294901760
        %v3573 = vsub.f32 %v2295, %v3572
        %v3574 = vand.u32 %v3573, 4294901760
        %3575 = vmatmul.mubr.f32.gmra.mxu0 %v3574
        %v3576 = vpop.f32.mrf.mxu0
        %v3577 = vadd.f32 %v3254, %v3576
        %v3578 = vpop.f32.mrf.mxu0
        %3579 = vmatprep.mubr.f32.mxu0 0.0
        %v3580 = vand.u32 %v2297, 4294901760
        %v3581 = vsub.f32 %v2297, %v3580
        %v3582 = vand.u32 %v3581, 4294901760
        %3583 = vmatmul.mubr.f32.gmra.mxu0 %v3582
        %v3584 = vpop.f32.mrf.mxu0
        %v3585 = vadd.f32 %v3261, %v3584
        %v3586 = vpop.f32.mrf.mxu0
        %3587 = vmatprep.mubr.f32.mxu0 0.0
        %v3588 = vand.u32 %v2299, 4294901760
        %v3589 = vsub.f32 %v2299, %v3588
        %v3590 = vand.u32 %v3589, 4294901760
        %3591 = vmatmul.mubr.f32.gmra.mxu0 %v3590
        %v3592 = vpop.f32.mrf.mxu0
        %v3593 = vadd.f32 %v3268, %v3592
        %v3594 = vpop.f32.mrf.mxu0
        %3595 = vmatprep.mubr.f32.mxu0 0.0
        %v3596 = vand.u32 %v2301, 4294901760
        %v3597 = vsub.f32 %v2301, %v3596
        %v3598 = vand.u32 %v3597, 4294901760
        %3599 = vmatmul.mubr.f32.gmra.mxu0 %v3598
        %v3600 = vpop.f32.mrf.mxu0
        %v3601 = vadd.f32 %v3275, %v3600
        %v3602 = vpop.f32.mrf.mxu0
        %3603 = vdwg.mxu0
        %3604 = vmatprep.subr.mxu0 0.0
        %3605 = vmatpush1.msra.mxu0 0.0
        %3606 = vmatprep.subr.mxu0 0.0
        %3607 = vmatpush1.msra.mxu0 0.0
        %3608 = vmatprep.subr.mxu0 0.0
        %3609 = vmatpush1.msra.mxu0 0.0
        %3610 = vmatprep.subr.mxu0 0.0
        %3611 = vmatpush1.msra.mxu0 0.0
        %3612 = vmatprep.subr.mxu0 0.0
        %3613 = vmatpush1.msra.mxu0 0.0
        %3614 = vmatprep.subr.mxu0 0.0
        %3615 = vmatpush1.msra.mxu0 0.0
        %3616 = vmatprep.subr.mxu0 0.0
        %3617 = vmatpush1.msra.mxu0 0.0
        %3618 = vmatprep.subr.mxu0 0.0
        %3619 = vmatpush1.msra.mxu0 0.0
        %3620 = vmatprep.subr.mxu0 0.0
        %3621 = vmatpush1.msra.mxu0 0.0
        %3622 = vmatprep.subr.mxu0 0.0
        %3623 = vmatpush1.msra.mxu0 0.0
        %3624 = vmatprep.subr.mxu0 0.0
        %3625 = vmatpush1.msra.mxu0 0.0
        %3626 = vmatprep.subr.mxu0 0.0
        %v3627 = vand.u32 %v2305, 4294901760
        %v3628 = vsub.f32 %v2305, %v3627
        %v3629 = vand.u32 %v3628, 4294901760
        %3630 = vmatpush1.msra.mxu0 %v3629
        %3631 = vmatprep.subr.mxu0 0.0
        %v3632 = vand.u32 %v2236, 4294901760
        %v3633 = vsub.f32 %v2236, %v3632
        %v3634 = vand.u32 %v3633, 4294901760
        %3635 = vmatpush1.msra.mxu0 %v3634
        %3636 = vmatprep.subr.mxu0 0.0
        %v3637 = vand.u32 %v2235, 4294901760
        %v3638 = vsub.f32 %v2235, %v3637
        %v3639 = vand.u32 %v3638, 4294901760
        %3640 = vmatpush1.msra.mxu0 %v3639
        %3641 = vmatprep.subr.mxu0 0.0
        %v3642 = vand.u32 %v2234, 4294901760
        %v3643 = vsub.f32 %v2234, %v3642
        %v3644 = vand.u32 %v3643, 4294901760
        %3645 = vmatpush1.msra.mxu0 %v3644
        %3646 = vmatprep.subr.mxu0 0.0
        %v3647 = vand.u32 %v2233, 4294901760
        %v3648 = vsub.f32 %v2233, %v3647
        %v3649 = vand.u32 %v3648, 4294901760
        %3650 = vmatpush1.msra.mxu0 %v3649
        %3651 = vmatprep.subr.mxu0 0.0
        %3652 = vmatpush2.msra.mxu0 0.0
        %3653 = vmatprep.subr.mxu0 0.0
        %3654 = vmatpush2.msra.mxu0 0.0
        %3655 = vmatprep.subr.mxu0 0.0
        %3656 = vmatpush2.msra.mxu0 0.0
        %3657 = vmatprep.subr.mxu0 0.0
        %3658 = vmatpush2.msra.mxu0 0.0
        %3659 = vmatprep.subr.mxu0 0.0
        %3660 = vmatpush2.msra.mxu0 0.0
        %3661 = vmatprep.subr.mxu0 0.0
        %3662 = vmatpush2.msra.mxu0 0.0
        %3663 = vmatprep.subr.mxu0 0.0
        %3664 = vmatpush2.msra.mxu0 0.0
        %3665 = vmatprep.subr.mxu0 0.0
        %3666 = vmatpush2.msra.mxu0 0.0
        %3667 = vmatprep.subr.mxu0 0.0
        %3668 = vmatpush2.msra.mxu0 0.0
        %3669 = vmatprep.subr.mxu0 0.0
        %3670 = vmatpush2.msra.mxu0 0.0
        %3671 = vmatprep.subr.mxu0 0.0
        %3672 = vmatpush2.msra.mxu0 0.0
        %3673 = vmatprep.subr.mxu0 0.0
        %3674 = vmatpush2.msra.mxu0 0.0
        %3675 = vmatprep.subr.mxu0 0.0
        %3676 = vmatpush2.msra.mxu0 0.0
        %3677 = vmatprep.subr.mxu0 0.0
        %3678 = vmatpush2.msra.mxu0 0.0
        %3679 = vmatprep.subr.mxu0 0.0
        %3680 = vmatpush2.msra.mxu0 0.0
        %3681 = vmatprep.subr.mxu0 0.0
        %3682 = vmatpush2.msra.mxu0 0.0
        %3683 = vmatprep.mubr.f32.mxu0 0.0
        %v3684 = vand.u32 %v2239, 4294901760
        %3685 = vmatmul.mubr.f32.gmra.mxu0 %v3684
        %v3686 = vpop.f32.mrf.mxu0
        %v3687 = vadd.f32 %v3353, %v3686
        %v3688 = vpop.f32.mrf.mxu0
        %3689 = vmatprep.mubr.f32.mxu0 0.0
        %v3690 = vand.u32 %v2241, 4294901760
        %3691 = vmatmul.mubr.f32.gmra.mxu0 %v3690
        %v3692 = vpop.f32.mrf.mxu0
        %v3693 = vadd.f32 %v3361, %v3692
        %v3694 = vpop.f32.mrf.mxu0
        %3695 = vmatprep.mubr.f32.mxu0 0.0
        %v3696 = vand.u32 %v2243, 4294901760
        %3697 = vmatmul.mubr.f32.gmra.mxu0 %v3696
        %v3698 = vpop.f32.mrf.mxu0
        %v3699 = vadd.f32 %v3369, %v3698
        %v3700 = vpop.f32.mrf.mxu0
        %3701 = vmatprep.mubr.f32.mxu0 0.0
        %v3702 = vand.u32 %v2245, 4294901760
        %3703 = vmatmul.mubr.f32.gmra.mxu0 %v3702
        %v3704 = vpop.f32.mrf.mxu0
        %v3705 = vadd.f32 %v3377, %v3704
        %v3706 = vpop.f32.mrf.mxu0
        %3707 = vmatprep.mubr.f32.mxu0 0.0
        %v3708 = vand.u32 %v2247, 4294901760
        %3709 = vmatmul.mubr.f32.gmra.mxu0 %v3708
        %v3710 = vpop.f32.mrf.mxu0
        %v3711 = vadd.f32 %v3385, %v3710
        %v3712 = vpop.f32.mrf.mxu0
        %3713 = vmatprep.mubr.f32.mxu0 0.0
        %v3714 = vand.u32 %v2249, 4294901760
        %3715 = vmatmul.mubr.f32.gmra.mxu0 %v3714
        %v3716 = vpop.f32.mrf.mxu0
        %v3717 = vadd.f32 %v3393, %v3716
        %v3718 = vpop.f32.mrf.mxu0
        %3719 = vmatprep.mubr.f32.mxu0 0.0
        %v3720 = vand.u32 %v2251, 4294901760
        %3721 = vmatmul.mubr.f32.gmra.mxu0 %v3720
        %v3722 = vpop.f32.mrf.mxu0
        %v3723 = vadd.f32 %v3401, %v3722
        %v3724 = vpop.f32.mrf.mxu0
        %3725 = vmatprep.mubr.f32.mxu0 0.0
        %v3726 = vand.u32 %v2253, 4294901760
        %3727 = vmatmul.mubr.f32.gmra.mxu0 %v3726
        %v3728 = vpop.f32.mrf.mxu0
        %v3729 = vadd.f32 %v3409, %v3728
        %v3730 = vpop.f32.mrf.mxu0
        %3731 = vmatprep.mubr.f32.mxu0 0.0
        %v3732 = vand.u32 %v2255, 4294901760
        %3733 = vmatmul.mubr.f32.gmra.mxu0 %v3732
        %v3734 = vpop.f32.mrf.mxu0
        %v3735 = vadd.f32 %v3417, %v3734
        %v3736 = vpop.f32.mrf.mxu0
        %3737 = vmatprep.mubr.f32.mxu0 0.0
        %v3738 = vand.u32 %v2257, 4294901760
        %3739 = vmatmul.mubr.f32.gmra.mxu0 %v3738
        %v3740 = vpop.f32.mrf.mxu0
        %v3741 = vadd.f32 %v3425, %v3740
        %v3742 = vpop.f32.mrf.mxu0
        %3743 = vmatprep.mubr.f32.mxu0 0.0
        %v3744 = vand.u32 %v2259, 4294901760
        %3745 = vmatmul.mubr.f32.gmra.mxu0 %v3744
        %v3746 = vpop.f32.mrf.mxu0
        %v3747 = vadd.f32 %v3433, %v3746
        %v3748 = vpop.f32.mrf.mxu0
        %3749 = vmatprep.mubr.f32.mxu0 0.0
        %v3750 = vand.u32 %v2261, 4294901760
        %3751 = vmatmul.mubr.f32.gmra.mxu0 %v3750
        %v3752 = vpop.f32.mrf.mxu0
        %v3753 = vadd.f32 %v3441, %v3752
        %v3754 = vpop.f32.mrf.mxu0
        %3755 = vmatprep.mubr.f32.mxu0 0.0
        %v3756 = vand.u32 %v2263, 4294901760
        %3757 = vmatmul.mubr.f32.gmra.mxu0 %v3756
        %v3758 = vpop.f32.mrf.mxu0
        %v3759 = vadd.f32 %v3449, %v3758
        %v3760 = vpop.f32.mrf.mxu0
        %3761 = vmatprep.mubr.f32.mxu0 0.0
        %v3762 = vand.u32 %v2265, 4294901760
        %3763 = vmatmul.mubr.f32.gmra.mxu0 %v3762
        %v3764 = vpop.f32.mrf.mxu0
        %v3765 = vadd.f32 %v3457, %v3764
        %v3766 = vpop.f32.mrf.mxu0
        %3767 = vmatprep.mubr.f32.mxu0 0.0
        %v3768 = vand.u32 %v2267, 4294901760
        %3769 = vmatmul.mubr.f32.gmra.mxu0 %v3768
        %v3770 = vpop.f32.mrf.mxu0
        %v3771 = vadd.f32 %v3465, %v3770
        %v3772 = vpop.f32.mrf.mxu0
        %3773 = vmatprep.mubr.f32.mxu0 0.0
        %v3774 = vand.u32 %v2269, 4294901760
        %3775 = vmatmul.mubr.f32.gmra.mxu0 %v3774
        %v3776 = vpop.f32.mrf.mxu0
        %v3777 = vadd.f32 %v3473, %v3776
        %v3778 = vpop.f32.mrf.mxu0
        %3779 = vmatprep.mubr.f32.mxu0 0.0
        %v3780 = vand.u32 %v2271, 4294901760
        %3781 = vmatmul.mubr.f32.gmra.mxu0 %v3780
        %v3782 = vpop.f32.mrf.mxu0
        %v3783 = vadd.f32 %v3481, %v3782
        %v3784 = vpop.f32.mrf.mxu0
        %3785 = vmatprep.mubr.f32.mxu0 0.0
        %v3786 = vand.u32 %v2273, 4294901760
        %3787 = vmatmul.mubr.f32.gmra.mxu0 %v3786
        %v3788 = vpop.f32.mrf.mxu0
        %v3789 = vadd.f32 %v3489, %v3788
        %v3790 = vpop.f32.mrf.mxu0
        %3791 = vmatprep.mubr.f32.mxu0 0.0
        %v3792 = vand.u32 %v2275, 4294901760
        %3793 = vmatmul.mubr.f32.gmra.mxu0 %v3792
        %v3794 = vpop.f32.mrf.mxu0
        %v3795 = vadd.f32 %v3497, %v3794
        %v3796 = vpop.f32.mrf.mxu0
        %3797 = vmatprep.mubr.f32.mxu0 0.0
        %v3798 = vand.u32 %v2277, 4294901760
        %3799 = vmatmul.mubr.f32.gmra.mxu0 %v3798
        %v3800 = vpop.f32.mrf.mxu0
        %v3801 = vadd.f32 %v3505, %v3800
        %v3802 = vpop.f32.mrf.mxu0
        %3803 = vmatprep.mubr.f32.mxu0 0.0
        %v3804 = vand.u32 %v2279, 4294901760
        %3805 = vmatmul.mubr.f32.gmra.mxu0 %v3804
        %v3806 = vpop.f32.mrf.mxu0
        %v3807 = vadd.f32 %v3513, %v3806
        %v3808 = vpop.f32.mrf.mxu0
        %3809 = vmatprep.mubr.f32.mxu0 0.0
        %v3810 = vand.u32 %v2281, 4294901760
        %3811 = vmatmul.mubr.f32.gmra.mxu0 %v3810
        %v3812 = vpop.f32.mrf.mxu0
        %v3813 = vadd.f32 %v3521, %v3812
        %v3814 = vpop.f32.mrf.mxu0
        %3815 = vmatprep.mubr.f32.mxu0 0.0
        %v3816 = vand.u32 %v2283, 4294901760
        %3817 = vmatmul.mubr.f32.gmra.mxu0 %v3816
        %v3818 = vpop.f32.mrf.mxu0
        %v3819 = vadd.f32 %v3529, %v3818
        %v3820 = vpop.f32.mrf.mxu0
        %3821 = vmatprep.mubr.f32.mxu0 0.0
        %v3822 = vand.u32 %v2285, 4294901760
        %3823 = vmatmul.mubr.f32.gmra.mxu0 %v3822
        %v3824 = vpop.f32.mrf.mxu0
        %v3825 = vadd.f32 %v3537, %v3824
        %v3826 = vpop.f32.mrf.mxu0
        %3827 = vmatprep.mubr.f32.mxu0 0.0
        %v3828 = vand.u32 %v2287, 4294901760
        %3829 = vmatmul.mubr.f32.gmra.mxu0 %v3828
        %v3830 = vpop.f32.mrf.mxu0
        %v3831 = vadd.f32 %v3545, %v3830
        %v3832 = vpop.f32.mrf.mxu0
        %3833 = vmatprep.mubr.f32.mxu0 0.0
        %v3834 = vand.u32 %v2289, 4294901760
        %3835 = vmatmul.mubr.f32.gmra.mxu0 %v3834
        %v3836 = vpop.f32.mrf.mxu0
        %v3837 = vadd.f32 %v3553, %v3836
        %v3838 = vpop.f32.mrf.mxu0
        %3839 = vmatprep.mubr.f32.mxu0 0.0
        %v3840 = vand.u32 %v2291, 4294901760
        %3841 = vmatmul.mubr.f32.gmra.mxu0 %v3840
        %v3842 = vpop.f32.mrf.mxu0
        %v3843 = vadd.f32 %v3561, %v3842
        %v3844 = vpop.f32.mrf.mxu0
        %3845 = vmatprep.mubr.f32.mxu0 0.0
        %v3846 = vand.u32 %v2293, 4294901760
        %3847 = vmatmul.mubr.f32.gmra.mxu0 %v3846
        %v3848 = vpop.f32.mrf.mxu0
        %v3849 = vadd.f32 %v3569, %v3848
        %v3850 = vpop.f32.mrf.mxu0
        %3851 = vmatprep.mubr.f32.mxu0 0.0
        %v3852 = vand.u32 %v2295, 4294901760
        %3853 = vmatmul.mubr.f32.gmra.mxu0 %v3852
        %v3854 = vpop.f32.mrf.mxu0
        %v3855 = vadd.f32 %v3577, %v3854
        %v3856 = vpop.f32.mrf.mxu0
        %3857 = vmatprep.mubr.f32.mxu0 0.0
        %v3858 = vand.u32 %v2297, 4294901760
        %3859 = vmatmul.mubr.f32.gmra.mxu0 %v3858
        %v3860 = vpop.f32.mrf.mxu0
        %v3861 = vadd.f32 %v3585, %v3860
        %v3862 = vpop.f32.mrf.mxu0
        %3863 = vmatprep.mubr.f32.mxu0 0.0
        %v3864 = vand.u32 %v2299, 4294901760
        %3865 = vmatmul.mubr.f32.gmra.mxu0 %v3864
        %v3866 = vpop.f32.mrf.mxu0
        %v3867 = vadd.f32 %v3593, %v3866
        %v3868 = vpop.f32.mrf.mxu0
        %3869 = vmatprep.mubr.f32.mxu0 0.0
        %v3870 = vand.u32 %v2301, 4294901760
        %3871 = vmatmul.mubr.f32.gmra.mxu0 %v3870
        %v3872 = vpop.f32.mrf.mxu0
        %v3873 = vadd.f32 %v3601, %v3872
        %v3874 = vpop.f32.mrf.mxu0
        %3875 = vdwg.mxu0
        %3876 = vmatprep.subr.mxu0 0.0
        %3877 = vmatpush1.msra.mxu0 0.0
        %3878 = vmatprep.subr.mxu0 0.0
        %3879 = vmatpush1.msra.mxu0 0.0
        %3880 = vmatprep.subr.mxu0 0.0
        %3881 = vmatpush1.msra.mxu0 0.0
        %3882 = vmatprep.subr.mxu0 0.0
        %3883 = vmatpush1.msra.mxu0 0.0
        %3884 = vmatprep.subr.mxu0 0.0
        %3885 = vmatpush1.msra.mxu0 0.0
        %3886 = vmatprep.subr.mxu0 0.0
        %3887 = vmatpush1.msra.mxu0 0.0
        %3888 = vmatprep.subr.mxu0 0.0
        %3889 = vmatpush1.msra.mxu0 0.0
        %3890 = vmatprep.subr.mxu0 0.0
        %3891 = vmatpush1.msra.mxu0 0.0
        %3892 = vmatprep.subr.mxu0 0.0
        %3893 = vmatpush1.msra.mxu0 0.0
        %3894 = vmatprep.subr.mxu0 0.0
        %3895 = vmatpush1.msra.mxu0 0.0
        %3896 = vmatprep.subr.mxu0 0.0
        %3897 = vmatpush1.msra.mxu0 0.0
        %3898 = vmatprep.subr.mxu0 0.0
        %v3899 = vand.u32 %v2305, 4294901760
        %3900 = vmatpush1.msra.mxu0 %v3899
        %3901 = vmatprep.subr.mxu0 0.0
        %v3902 = vand.u32 %v2236, 4294901760
        %3903 = vmatpush1.msra.mxu0 %v3902
        %3904 = vmatprep.subr.mxu0 0.0
        %v3905 = vand.u32 %v2235, 4294901760
        %3906 = vmatpush1.msra.mxu0 %v3905
        %3907 = vmatprep.subr.mxu0 0.0
        %v3908 = vand.u32 %v2234, 4294901760
        %3909 = vmatpush1.msra.mxu0 %v3908
        %3910 = vmatprep.subr.mxu0 0.0
        %v3911 = vand.u32 %v2233, 4294901760
        %3912 = vmatpush1.msra.mxu0 %v3911
        %3913 = vmatprep.subr.mxu0 0.0
        %3914 = vmatpush2.msra.mxu0 0.0
        %3915 = vmatprep.subr.mxu0 0.0
        %3916 = vmatpush2.msra.mxu0 0.0
        %3917 = vmatprep.subr.mxu0 0.0
        %3918 = vmatpush2.msra.mxu0 0.0
        %3919 = vmatprep.subr.mxu0 0.0
        %3920 = vmatpush2.msra.mxu0 0.0
        %3921 = vmatprep.subr.mxu0 0.0
        %3922 = vmatpush2.msra.mxu0 0.0
        %3923 = vmatprep.subr.mxu0 0.0
        %3924 = vmatpush2.msra.mxu0 0.0
        %3925 = vmatprep.subr.mxu0 0.0
        %3926 = vmatpush2.msra.mxu0 0.0
        %3927 = vmatprep.subr.mxu0 0.0
        %3928 = vmatpush2.msra.mxu0 0.0
        %3929 = vmatprep.subr.mxu0 0.0
        %3930 = vmatpush2.msra.mxu0 0.0
        %3931 = vmatprep.subr.mxu0 0.0
        %3932 = vmatpush2.msra.mxu0 0.0
        %3933 = vmatprep.subr.mxu0 0.0
        %3934 = vmatpush2.msra.mxu0 0.0
        %3935 = vmatprep.subr.mxu0 0.0
        %3936 = vmatpush2.msra.mxu0 0.0
        %3937 = vmatprep.subr.mxu0 0.0
        %3938 = vmatpush2.msra.mxu0 0.0
        %3939 = vmatprep.subr.mxu0 0.0
        %3940 = vmatpush2.msra.mxu0 0.0
        %3941 = vmatprep.subr.mxu0 0.0
        %3942 = vmatpush2.msra.mxu0 0.0
        %3943 = vmatprep.subr.mxu0 0.0
        %3944 = vmatpush2.msra.mxu0 0.0
        %3945 = vmatprep.mubr.f32.mxu0 0.0
        %v3946 = vand.u32 %v2239, 4294901760
        %3947 = vmatmul.mubr.f32.gmra.mxu0 %v3946
        %v3948 = vpop.f32.mrf.mxu0
        %v3949 = vadd.f32 %v3687, %v3948
        %v3950 = vpop.f32.mrf.mxu0
        %3951 = vmatprep.mubr.f32.mxu0 0.0
        %v3952 = vand.u32 %v2241, 4294901760
        %3953 = vmatmul.mubr.f32.gmra.mxu0 %v3952
        %v3954 = vpop.f32.mrf.mxu0
        %v3955 = vadd.f32 %v3693, %v3954
        %v3956 = vpop.f32.mrf.mxu0
        %3957 = vmatprep.mubr.f32.mxu0 0.0
        %v3958 = vand.u32 %v2243, 4294901760
        %3959 = vmatmul.mubr.f32.gmra.mxu0 %v3958
        %v3960 = vpop.f32.mrf.mxu0
        %v3961 = vadd.f32 %v3699, %v3960
        %v3962 = vpop.f32.mrf.mxu0
        %3963 = vmatprep.mubr.f32.mxu0 0.0
        %v3964 = vand.u32 %v2245, 4294901760
        %3965 = vmatmul.mubr.f32.gmra.mxu0 %v3964
        %v3966 = vpop.f32.mrf.mxu0
        %v3967 = vadd.f32 %v3705, %v3966
        %v3968 = vpop.f32.mrf.mxu0
        %3969 = vmatprep.mubr.f32.mxu0 0.0
        %v3970 = vand.u32 %v2247, 4294901760
        %3971 = vmatmul.mubr.f32.gmra.mxu0 %v3970
        %v3972 = vpop.f32.mrf.mxu0
        %v3973 = vadd.f32 %v3711, %v3972
        %v3974 = vpop.f32.mrf.mxu0
        %3975 = vmatprep.mubr.f32.mxu0 0.0
        %v3976 = vand.u32 %v2249, 4294901760
        %3977 = vmatmul.mubr.f32.gmra.mxu0 %v3976
        %v3978 = vpop.f32.mrf.mxu0
        %v3979 = vadd.f32 %v3717, %v3978
        %v3980 = vpop.f32.mrf.mxu0
        %3981 = vmatprep.mubr.f32.mxu0 0.0
        %v3982 = vand.u32 %v2251, 4294901760
        %3983 = vmatmul.mubr.f32.gmra.mxu0 %v3982
        %v3984 = vpop.f32.mrf.mxu0
        %v3985 = vadd.f32 %v3723, %v3984
        %v3986 = vpop.f32.mrf.mxu0
        %3987 = vmatprep.mubr.f32.mxu0 0.0
        %v3988 = vand.u32 %v2253, 4294901760
        %3989 = vmatmul.mubr.f32.gmra.mxu0 %v3988
        %v3990 = vpop.f32.mrf.mxu0
        %v3991 = vadd.f32 %v3729, %v3990
        %v3992 = vpop.f32.mrf.mxu0
        %3993 = vmatprep.mubr.f32.mxu0 0.0
        %v3994 = vand.u32 %v2255, 4294901760
        %3995 = vmatmul.mubr.f32.gmra.mxu0 %v3994
        %v3996 = vpop.f32.mrf.mxu0
        %v3997 = vadd.f32 %v3735, %v3996
        %v3998 = vpop.f32.mrf.mxu0
        %3999 = vmatprep.mubr.f32.mxu0 0.0
        %v4000 = vand.u32 %v2257, 4294901760
        %4001 = vmatmul.mubr.f32.gmra.mxu0 %v4000
        %v4002 = vpop.f32.mrf.mxu0
        %v4003 = vadd.f32 %v3741, %v4002
        %v4004 = vpop.f32.mrf.mxu0
        %4005 = vmatprep.mubr.f32.mxu0 0.0
        %v4006 = vand.u32 %v2259, 4294901760
        %4007 = vmatmul.mubr.f32.gmra.mxu0 %v4006
        %v4008 = vpop.f32.mrf.mxu0
        %v4009 = vadd.f32 %v3747, %v4008
        %v4010 = vpop.f32.mrf.mxu0
        %4011 = vmatprep.mubr.f32.mxu0 0.0
        %v4012 = vand.u32 %v2261, 4294901760
        %4013 = vmatmul.mubr.f32.gmra.mxu0 %v4012
        %v4014 = vpop.f32.mrf.mxu0
        %v4015 = vadd.f32 %v3753, %v4014
        %v4016 = vpop.f32.mrf.mxu0
        %4017 = vmatprep.mubr.f32.mxu0 0.0
        %v4018 = vand.u32 %v2263, 4294901760
        %4019 = vmatmul.mubr.f32.gmra.mxu0 %v4018
        %v4020 = vpop.f32.mrf.mxu0
        %v4021 = vadd.f32 %v3759, %v4020
        %v4022 = vpop.f32.mrf.mxu0
        %4023 = vmatprep.mubr.f32.mxu0 0.0
        %v4024 = vand.u32 %v2265, 4294901760
        %4025 = vmatmul.mubr.f32.gmra.mxu0 %v4024
        %v4026 = vpop.f32.mrf.mxu0
        %v4027 = vadd.f32 %v3765, %v4026
        %v4028 = vpop.f32.mrf.mxu0
        %4029 = vmatprep.mubr.f32.mxu0 0.0
        %v4030 = vand.u32 %v2267, 4294901760
        %4031 = vmatmul.mubr.f32.gmra.mxu0 %v4030
        %v4032 = vpop.f32.mrf.mxu0
        %v4033 = vadd.f32 %v3771, %v4032
        %v4034 = vpop.f32.mrf.mxu0
        %4035 = vmatprep.mubr.f32.mxu0 0.0
        %v4036 = vand.u32 %v2269, 4294901760
        %4037 = vmatmul.mubr.f32.gmra.mxu0 %v4036
        %v4038 = vpop.f32.mrf.mxu0
        %v4039 = vadd.f32 %v3777, %v4038
        %v4040 = vpop.f32.mrf.mxu0
        %4041 = vmatprep.mubr.f32.mxu0 0.0
        %v4042 = vand.u32 %v2271, 4294901760
        %4043 = vmatmul.mubr.f32.gmra.mxu0 %v4042
        %v4044 = vpop.f32.mrf.mxu0
        %v4045 = vadd.f32 %v3783, %v4044
        %v4046 = vpop.f32.mrf.mxu0
        %4047 = vmatprep.mubr.f32.mxu0 0.0
        %v4048 = vand.u32 %v2273, 4294901760
        %4049 = vmatmul.mubr.f32.gmra.mxu0 %v4048
        %v4050 = vpop.f32.mrf.mxu0
        %v4051 = vadd.f32 %v3789, %v4050
        %v4052 = vpop.f32.mrf.mxu0
        %4053 = vmatprep.mubr.f32.mxu0 0.0
        %v4054 = vand.u32 %v2275, 4294901760
        %4055 = vmatmul.mubr.f32.gmra.mxu0 %v4054
        %v4056 = vpop.f32.mrf.mxu0
        %v4057 = vadd.f32 %v3795, %v4056
        %v4058 = vpop.f32.mrf.mxu0
        %4059 = vmatprep.mubr.f32.mxu0 0.0
        %v4060 = vand.u32 %v2277, 4294901760
        %4061 = vmatmul.mubr.f32.gmra.mxu0 %v4060
        %v4062 = vpop.f32.mrf.mxu0
        %v4063 = vadd.f32 %v3801, %v4062
        %v4064 = vpop.f32.mrf.mxu0
        %4065 = vmatprep.mubr.f32.mxu0 0.0
        %v4066 = vand.u32 %v2279, 4294901760
        %4067 = vmatmul.mubr.f32.gmra.mxu0 %v4066
        %v4068 = vpop.f32.mrf.mxu0
        %v4069 = vadd.f32 %v3807, %v4068
        %v4070 = vpop.f32.mrf.mxu0
        %4071 = vmatprep.mubr.f32.mxu0 0.0
        %v4072 = vand.u32 %v2281, 4294901760
        %4073 = vmatmul.mubr.f32.gmra.mxu0 %v4072
        %v4074 = vpop.f32.mrf.mxu0
        %v4075 = vadd.f32 %v3813, %v4074
        %v4076 = vpop.f32.mrf.mxu0
        %4077 = vmatprep.mubr.f32.mxu0 0.0
        %v4078 = vand.u32 %v2283, 4294901760
        %4079 = vmatmul.mubr.f32.gmra.mxu0 %v4078
        %v4080 = vpop.f32.mrf.mxu0
        %v4081 = vadd.f32 %v3819, %v4080
        %v4082 = vpop.f32.mrf.mxu0
        %4083 = vmatprep.mubr.f32.mxu0 0.0
        %v4084 = vand.u32 %v2285, 4294901760
        %4085 = vmatmul.mubr.f32.gmra.mxu0 %v4084
        %v4086 = vpop.f32.mrf.mxu0
        %v4087 = vadd.f32 %v3825, %v4086
        %v4088 = vpop.f32.mrf.mxu0
        %4089 = vmatprep.mubr.f32.mxu0 0.0
        %v4090 = vand.u32 %v2287, 4294901760
        %4091 = vmatmul.mubr.f32.gmra.mxu0 %v4090
        %v4092 = vpop.f32.mrf.mxu0
        %v4093 = vadd.f32 %v3831, %v4092
        %v4094 = vpop.f32.mrf.mxu0
        %4095 = vmatprep.mubr.f32.mxu0 0.0
        %v4096 = vand.u32 %v2289, 4294901760
        %4097 = vmatmul.mubr.f32.gmra.mxu0 %v4096
        %v4098 = vpop.f32.mrf.mxu0
        %v4099 = vadd.f32 %v3837, %v4098
        %v4100 = vpop.f32.mrf.mxu0
        %4101 = vmatprep.mubr.f32.mxu0 0.0
        %v4102 = vand.u32 %v2291, 4294901760
        %4103 = vmatmul.mubr.f32.gmra.mxu0 %v4102
        %v4104 = vpop.f32.mrf.mxu0
        %v4105 = vadd.f32 %v3843, %v4104
        %v4106 = vpop.f32.mrf.mxu0
        %4107 = vmatprep.mubr.f32.mxu0 0.0
        %v4108 = vand.u32 %v2293, 4294901760
        %4109 = vmatmul.mubr.f32.gmra.mxu0 %v4108
        %v4110 = vpop.f32.mrf.mxu0
        %v4111 = vadd.f32 %v3849, %v4110
        %v4112 = vpop.f32.mrf.mxu0
        %4113 = vmatprep.mubr.f32.mxu0 0.0
        %v4114 = vand.u32 %v2295, 4294901760
        %4115 = vmatmul.mubr.f32.gmra.mxu0 %v4114
        %v4116 = vpop.f32.mrf.mxu0
        %v4117 = vadd.f32 %v3855, %v4116
        %v4118 = vpop.f32.mrf.mxu0
        %4119 = vmatprep.mubr.f32.mxu0 0.0
        %v4120 = vand.u32 %v2297, 4294901760
        %4121 = vmatmul.mubr.f32.gmra.mxu0 %v4120
        %v4122 = vpop.f32.mrf.mxu0
        %v4123 = vadd.f32 %v3861, %v4122
        %v4124 = vpop.f32.mrf.mxu0
        %4125 = vmatprep.mubr.f32.mxu0 0.0
        %v4126 = vand.u32 %v2299, 4294901760
        %4127 = vmatmul.mubr.f32.gmra.mxu0 %v4126
        %v4128 = vpop.f32.mrf.mxu0
        %v4129 = vadd.f32 %v3867, %v4128
        %v4130 = vpop.f32.mrf.mxu0
        %4131 = vmatprep.mubr.f32.mxu0 0.0
        %v4132 = vand.u32 %v2301, 4294901760
        %4133 = vmatmul.mubr.f32.gmra.mxu0 %v4132
        %v4134 = vpop.f32.mrf.mxu0
        %v4135 = vadd.f32 %v3873, %v4134
        %v4136 = vpop.f32.mrf.mxu0
        %4137 = vdwg.mxu0
        %v4138 = vsel %vm1761, %v3949, 0.0
        %v4139 = vsel %vm1761, %v3955, 0.0
        %v4140 = vadd.f32 %v4138, %v4139
        %v4141 = vsel %vm1761, %v3961, 0.0
        %v4142 = vadd.f32 %v4140, %v4141
        %v4143 = vsel %vm1761, %v3967, 0.0
        %v4144 = vadd.f32 %v4142, %v4143
        %v4145 = vsel %vm1761, %v3973, 0.0
        %v4146 = vadd.f32 %v4144, %v4145
        %v4147 = vsel %vm1761, %v3979, 0.0
        %v4148 = vadd.f32 %v4146, %v4147
        %v4149 = vsel %vm1761, %v3985, 0.0
        %v4150 = vadd.f32 %v4148, %v4149
        %v4151 = vsel %vm1761, %v3991, 0.0
        %v4152 = vadd.f32 %v4150, %v4151
        %v4153 = vsel %vm1761, %v3997, 0.0
        %v4154 = vadd.f32 %v4152, %v4153
        %v4155 = vsel %vm1761, %v4003, 0.0
        %v4156 = vadd.f32 %v4154, %v4155
        %v4157 = vsel %vm1761, %v4009, 0.0
        %v4158 = vadd.f32 %v4156, %v4157
        %v4159 = vsel %vm1761, %v4015, 0.0
        %v4160 = vadd.f32 %v4158, %v4159
        %v4161 = vsel %vm1761, %v4021, 0.0
        %v4162 = vadd.f32 %v4160, %v4161
        %v4163 = vsel %vm1761, %v4027, 0.0
        %v4164 = vadd.f32 %v4162, %v4163
        %v4165 = vsel %vm1761, %v4033, 0.0
        %v4166 = vadd.f32 %v4164, %v4165
        %v4167 = vsel %vm1761, %v4039, 0.0
        %v4168 = vadd.f32 %v4166, %v4167
        %v4169 = vsel %vm1761, %v4045, 0.0
        %v4170 = vadd.f32 %v4168, %v4169
        %v4171 = vsel %vm1761, %v4051, 0.0
        %v4172 = vadd.f32 %v4170, %v4171
        %v4173 = vsel %vm1761, %v4057, 0.0
        %v4174 = vadd.f32 %v4172, %v4173
        %v4175 = vsel %vm1761, %v4063, 0.0
        %v4176 = vadd.f32 %v4174, %v4175
        %v4177 = vsel %vm1761, %v4069, 0.0
        %v4178 = vadd.f32 %v4176, %v4177
        %v4179 = vsel %vm1761, %v4075, 0.0
        %v4180 = vadd.f32 %v4178, %v4179
        %v4181 = vsel %vm1761, %v4081, 0.0
        %v4182 = vadd.f32 %v4180, %v4181
        %v4183 = vsel %vm1761, %v4087, 0.0
        %v4184 = vadd.f32 %v4182, %v4183
        %v4185 = vsel %vm1761, %v4093, 0.0
        %v4186 = vadd.f32 %v4184, %v4185
        %v4187 = vsel %vm1761, %v4099, 0.0
        %v4188 = vadd.f32 %v4186, %v4187
        %v4189 = vsel %vm1761, %v4105, 0.0
        %v4190 = vadd.f32 %v4188, %v4189
        %v4191 = vsel %vm1761, %v4111, 0.0
        %v4192 = vadd.f32 %v4190, %v4191
        %v4193 = vsel %vm1761, %v4117, 0.0
        %v4194 = vadd.f32 %v4192, %v4193
        %v4195 = vsel %vm1761, %v4123, 0.0
        %v4196 = vadd.f32 %v4194, %v4195
        %v4197 = vsel %vm1761, %v4129, 0.0
        %v4198 = vadd.f32 %v4196, %v4197
        %v4199 = vsel %vm1761, %v4135, 0.0
        %v4200 = vadd.f32 %v4198, %v4199
        %v4201 = vrot.slane %v4200, 4
        %v4202 = vadd.f32 %v4200, %v4201
        %v4203 = vrot.slane %v4202, 2
        %v4204 = vadd.f32 %v4202, %v4203
        %v4205 = vrot.slane %v4204, 1
        %v4206 = vadd.f32 %v4204, %v4205
        %vm4207 = vcmask 57344
        %4208 = vst.msk [vmem:[%s254] sm:$0x1] %vm4207, %v4206
        %v4209 = vmul.f32 %v4206, 0.00390625
        %v4210 = vsub.f32 %v3949, %v4209
        %v4211 = vsub.f32 %v3955, %v4209
        %v4212 = vsub.f32 %v3961, %v4209
        %v4213 = vsub.f32 %v3967, %v4209
        %v4214 = vsub.f32 %v3973, %v4209
        %v4215 = vsub.f32 %v3979, %v4209
        %v4216 = vsub.f32 %v3985, %v4209
        %v4217 = vsub.f32 %v3991, %v4209
        %v4218 = vsub.f32 %v3997, %v4209
        %v4219 = vsub.f32 %v4003, %v4209
        %v4220 = vsub.f32 %v4009, %v4209
        %v4221 = vsub.f32 %v4015, %v4209
        %v4222 = vsub.f32 %v4021, %v4209
        %v4223 = vsub.f32 %v4027, %v4209
        %v4224 = vsub.f32 %v4033, %v4209
        %v4225 = vsub.f32 %v4039, %v4209
        %v4226 = vsub.f32 %v4045, %v4209
        %v4227 = vsub.f32 %v4051, %v4209
        %v4228 = vsub.f32 %v4057, %v4209
        %v4229 = vsub.f32 %v4063, %v4209
        %v4230 = vsub.f32 %v4069, %v4209
        %v4231 = vsub.f32 %v4075, %v4209
        %v4232 = vsub.f32 %v4081, %v4209
        %v4233 = vsub.f32 %v4087, %v4209
        %v4234 = vsub.f32 %v4093, %v4209
        %v4235 = vsub.f32 %v4099, %v4209
        %v4236 = vsub.f32 %v4105, %v4209
        %v4237 = vsub.f32 %v4111, %v4209
        %v4238 = vsub.f32 %v4117, %v4209
        %v4239 = vsub.f32 %v4123, %v4209
        %v4240 = vsub.f32 %v4129, %v4209
        %v4241 = vsub.f32 %v4135, %v4209
        %v4242 = vmul.f32 %v4210, %v4210
        %v4243 = vmul.f32 %v4211, %v4211
        %v4244 = vmul.f32 %v4212, %v4212
        %v4245 = vmul.f32 %v4213, %v4213
        %v4246 = vmul.f32 %v4214, %v4214
        %v4247 = vmul.f32 %v4215, %v4215
        %v4248 = vmul.f32 %v4216, %v4216
        %v4249 = vmul.f32 %v4217, %v4217
        %v4250 = vmul.f32 %v4218, %v4218
        %v4251 = vmul.f32 %v4219, %v4219
        %v4252 = vmul.f32 %v4220, %v4220
        %v4253 = vmul.f32 %v4221, %v4221
        %v4254 = vmul.f32 %v4222, %v4222
        %v4255 = vmul.f32 %v4223, %v4223
        %v4256 = vmul.f32 %v4224, %v4224
        %v4257 = vmul.f32 %v4225, %v4225
        %v4258 = vmul.f32 %v4226, %v4226
        %v4259 = vmul.f32 %v4227, %v4227
        %v4260 = vmul.f32 %v4228, %v4228
        %v4261 = vmul.f32 %v4229, %v4229
        %v4262 = vmul.f32 %v4230, %v4230
        %v4263 = vmul.f32 %v4231, %v4231
        %v4264 = vmul.f32 %v4232, %v4232
        %v4265 = vmul.f32 %v4233, %v4233
        %v4266 = vmul.f32 %v4234, %v4234
        %v4267 = vmul.f32 %v4235, %v4235
        %v4268 = vmul.f32 %v4236, %v4236
        %v4269 = vmul.f32 %v4237, %v4237
        %v4270 = vmul.f32 %v4238, %v4238
        %v4271 = vmul.f32 %v4239, %v4239
        %v4272 = vmul.f32 %v4240, %v4240
        %v4273 = vmul.f32 %v4241, %v4241
        %v4274 = vsel %vm1761, %v4242, 0.0
        %v4275 = vsel %vm1761, %v4243, 0.0
        %v4276 = vadd.f32 %v4274, %v4275
        %v4277 = vsel %vm1761, %v4244, 0.0
        %v4278 = vadd.f32 %v4276, %v4277
        %v4279 = vsel %vm1761, %v4245, 0.0
        %v4280 = vadd.f32 %v4278, %v4279
        %v4281 = vsel %vm1761, %v4246, 0.0
        %v4282 = vadd.f32 %v4280, %v4281
        %v4283 = vsel %vm1761, %v4247, 0.0
        %v4284 = vadd.f32 %v4282, %v4283
        %v4285 = vsel %vm1761, %v4248, 0.0
        %v4286 = vadd.f32 %v4284, %v4285
        %v4287 = vsel %vm1761, %v4249, 0.0
        %v4288 = vadd.f32 %v4286, %v4287
        %v4289 = vsel %vm1761, %v4250, 0.0
        %v4290 = vadd.f32 %v4288, %v4289
        %v4291 = vsel %vm1761, %v4251, 0.0
        %v4292 = vadd.f32 %v4290, %v4291
        %v4293 = vsel %vm1761, %v4252, 0.0
        %v4294 = vadd.f32 %v4292, %v4293
        %v4295 = vsel %vm1761, %v4253, 0.0
        %v4296 = vadd.f32 %v4294, %v4295
        %v4297 = vsel %vm1761, %v4254, 0.0
        %v4298 = vadd.f32 %v4296, %v4297
        %v4299 = vsel %vm1761, %v4255, 0.0
        %v4300 = vadd.f32 %v4298, %v4299
        %v4301 = vsel %vm1761, %v4256, 0.0
        %v4302 = vadd.f32 %v4300, %v4301
        %v4303 = vsel %vm1761, %v4257, 0.0
        %v4304 = vadd.f32 %v4302, %v4303
        %v4305 = vsel %vm1761, %v4258, 0.0
        %v4306 = vadd.f32 %v4304, %v4305
        %v4307 = vsel %vm1761, %v4259, 0.0
        %v4308 = vadd.f32 %v4306, %v4307
        %v4309 = vsel %vm1761, %v4260, 0.0
        %v4310 = vadd.f32 %v4308, %v4309
        %v4311 = vsel %vm1761, %v4261, 0.0
        %v4312 = vadd.f32 %v4310, %v4311
        %v4313 = vsel %vm1761, %v4262, 0.0
        %v4314 = vadd.f32 %v4312, %v4313
        %v4315 = vsel %vm1761, %v4263, 0.0
        %v4316 = vadd.f32 %v4314, %v4315
        %v4317 = vsel %vm1761, %v4264, 0.0
        %v4318 = vadd.f32 %v4316, %v4317
        %v4319 = vsel %vm1761, %v4265, 0.0
        %v4320 = vadd.f32 %v4318, %v4319
        %v4321 = vsel %vm1761, %v4266, 0.0
        %v4322 = vadd.f32 %v4320, %v4321
        %v4323 = vsel %vm1761, %v4267, 0.0
        %v4324 = vadd.f32 %v4322, %v4323
        %v4325 = vsel %vm1761, %v4268, 0.0
        %v4326 = vadd.f32 %v4324, %v4325
        %v4327 = vsel %vm1761, %v4269, 0.0
        %v4328 = vadd.f32 %v4326, %v4327
        %v4329 = vsel %vm1761, %v4270, 0.0
        %v4330 = vadd.f32 %v4328, %v4329
        %v4331 = vsel %vm1761, %v4271, 0.0
        %v4332 = vadd.f32 %v4330, %v4331
        %v4333 = vsel %vm1761, %v4272, 0.0
        %v4334 = vadd.f32 %v4332, %v4333
        %v4335 = vsel %vm1761, %v4273, 0.0
        %v4336 = vadd.f32 %v4334, %v4335
        %v4337 = vrot.slane %v4336, 4
        %v4338 = vadd.f32 %v4336, %v4337
        %v4339 = vrot.slane %v4338, 2
        %v4340 = vadd.f32 %v4338, %v4339
        %v4341 = vrot.slane %v4340, 1
        %v4342 = vadd.f32 %v4340, %v4341
        %4343 = vst.msk [vmem:[%s260] sm:$0x1] %vm4207, %v4342
        %s4344 = scalar_lea.vmem %s270, 32
        %4345 = vst.msk [vmem:[%s4344 + $0x8] sm:$0xff] %vm1761, %v3949
        %4346 = vst.msk [vmem:[%s4344 + $0x10] sm:$0xff] %vm1761, %v3955
        %4347 = vst.msk [vmem:[%s4344 + $0x28] sm:$0xff] %vm1761, %v3961
        %4348 = vst.msk [vmem:[%s4344 + $0x30] sm:$0xff] %vm1761, %v3967
        %4349 = vst.msk [vmem:[%s4344 + $0x48] sm:$0xff] %vm1761, %v3973
        %4350 = vst.msk [vmem:[%s4344 + $0x50] sm:$0xff] %vm1761, %v3979
        %4351 = vst.msk [vmem:[%s4344 + $0x68] sm:$0xff] %vm1761, %v3985
        %4352 = vst.msk [vmem:[%s4344 + $0x70] sm:$0xff] %vm1761, %v3991
        %4353 = vst.msk [vmem:[%s4344 + $0x88] sm:$0xff] %vm1761, %v3997
        %4354 = vst.msk [vmem:[%s4344 + $0x90] sm:$0xff] %vm1761, %v4003
        %4355 = vst.msk [vmem:[%s4344 + $0xa8] sm:$0xff] %vm1761, %v4009
        %4356 = vst.msk [vmem:[%s4344 + $0xb0] sm:$0xff] %vm1761, %v4015
        %4357 = vst.msk [vmem:[%s4344 + $0xc8] sm:$0xff] %vm1761, %v4021
        %4358 = vst.msk [vmem:[%s4344 + $0xd0] sm:$0xff] %vm1761, %v4027
        %4359 = vst.msk [vmem:[%s4344 + $0xe8] sm:$0xff] %vm1761, %v4033
        %4360 = vst.msk [vmem:[%s4344 + $0xf0] sm:$0xff] %vm1761, %v4039
        %4361 = vst.msk [vmem:[%s4344 + $0x108] sm:$0xff] %vm1761, %v4045
        %4362 = vst.msk [vmem:[%s4344 + $0x110] sm:$0xff] %vm1761, %v4051
        %4363 = vst.msk [vmem:[%s4344 + $0x128] sm:$0xff] %vm1761, %v4057
        %4364 = vst.msk [vmem:[%s4344 + $0x130] sm:$0xff] %vm1761, %v4063
        %4365 = vst.msk [vmem:[%s4344 + $0x148] sm:$0xff] %vm1761, %v4069
        %4366 = vst.msk [vmem:[%s4344 + $0x150] sm:$0xff] %vm1761, %v4075
        %4367 = vst.msk [vmem:[%s4344 + $0x168] sm:$0xff] %vm1761, %v4081
        %4368 = vst.msk [vmem:[%s4344 + $0x170] sm:$0xff] %vm1761, %v4087
        %4369 = vst.msk [vmem:[%s4344 + $0x188] sm:$0xff] %vm1761, %v4093
        %4370 = vst.msk [vmem:[%s4344 + $0x190] sm:$0xff] %vm1761, %v4099
        %4371 = vst.msk [vmem:[%s4344 + $0x1a8] sm:$0xff] %vm1761, %v4105
        %4372 = vst.msk [vmem:[%s4344 + $0x1b0] sm:$0xff] %vm1761, %v4111
        %4373 = vst.msk [vmem:[%s4344 + $0x1c8] sm:$0xff] %vm1761, %v4117
        %4374 = vst.msk [vmem:[%s4344 + $0x1d0] sm:$0xff] %vm1761, %v4123
        %4375 = vst.msk [vmem:[%s4344 + $0x1e8] sm:$0xff] %vm1761, %v4129
        %4376 = vst.msk [vmem:[%s4344 + $0x1f0] sm:$0xff] %vm1761, %v4135
        %4377 = vst.msk [vmem:[%s270] sm:$0xff] %vm1761, 0.0
        %4378 = vst.msk [vmem:[%s270 + $0x8] sm:$0xff] %vm1761, 0.0
        %4379 = vst.msk [vmem:[%s270 + $0x10] sm:$0xff] %vm1761, 0.0
        %4380 = vst.msk [vmem:[%s270 + $0x18] sm:$0xff] %vm1761, 0.0
        %s4381 = scalar_lea.vmem %s270, 544
        %4382 = vst.msk [vmem:[%s4381] sm:$0xff] %vm1761, 0.0
        %4383 = vst.msk [vmem:[%s4381 + $0x8] sm:$0xff] %vm1761, 0.0
        %4384 = vst.msk [vmem:[%s4381 + $0x10] sm:$0xff] %vm1761, 0.0
        %4385 = vst.msk [vmem:[%s4381 + $0x18] sm:$0xff] %vm1761, 0.0
        %4386 = vst.msk [vmem:[%s4344] sm:$0xff] %vm1761, 0.0
        %4387 = vst.msk [vmem:[%s4344 + $0x20] sm:$0xff] %vm1761, 0.0
        %4388 = vst.msk [vmem:[%s4344 + $0x40] sm:$0xff] %vm1761, 0.0
        %4389 = vst.msk [vmem:[%s4344 + $0x60] sm:$0xff] %vm1761, 0.0
        %4390 = vst.msk [vmem:[%s4344 + $0x80] sm:$0xff] %vm1761, 0.0
        %4391 = vst.msk [vmem:[%s4344 + $0xa0] sm:$0xff] %vm1761, 0.0
        %4392 = vst.msk [vmem:[%s4344 + $0xc0] sm:$0xff] %vm1761, 0.0
        %4393 = vst.msk [vmem:[%s4344 + $0xe0] sm:$0xff] %vm1761, 0.0
        %4394 = vst.msk [vmem:[%s4344 + $0x100] sm:$0xff] %vm1761, 0.0
        %4395 = vst.msk [vmem:[%s4344 + $0x120] sm:$0xff] %vm1761, 0.0
        %4396 = vst.msk [vmem:[%s4344 + $0x140] sm:$0xff] %vm1761, 0.0
        %4397 = vst.msk [vmem:[%s4344 + $0x160] sm:$0xff] %vm1761, 0.0
        %4398 = vst.msk [vmem:[%s4344 + $0x180] sm:$0xff] %vm1761, 0.0
        %4399 = vst.msk [vmem:[%s4344 + $0x1a0] sm:$0xff] %vm1761, 0.0
        %4400 = vst.msk [vmem:[%s4344 + $0x1c0] sm:$0xff] %vm1761, 0.0
        %4401 = vst.msk [vmem:[%s4344 + $0x1e0] sm:$0xff] %vm1761, 0.0
        %4402 = vst.msk [vmem:[%s4344 + $0x18] sm:$0xff] %vm1761, 0.0
        %4403 = vst.msk [vmem:[%s4344 + $0x38] sm:$0xff] %vm1761, 0.0
        %4404 = vst.msk [vmem:[%s4344 + $0x58] sm:$0xff] %vm1761, 0.0
        %4405 = vst.msk [vmem:[%s4344 + $0x78] sm:$0xff] %vm1761, 0.0
        %4406 = vst.msk [vmem:[%s4344 + $0x98] sm:$0xff] %vm1761, 0.0
        %4407 = vst.msk [vmem:[%s4344 + $0xb8] sm:$0xff] %vm1761, 0.0
        %4408 = vst.msk [vmem:[%s4344 + $0xd8] sm:$0xff] %vm1761, 0.0
        %4409 = vst.msk [vmem:[%s4344 + $0xf8] sm:$0xff] %vm1761, 0.0
        %4410 = vst.msk [vmem:[%s4344 + $0x118] sm:$0xff] %vm1761, 0.0
        %4411 = vst.msk [vmem:[%s4344 + $0x138] sm:$0xff] %vm1761, 0.0
        %4412 = vst.msk [vmem:[%s4344 + $0x158] sm:$0xff] %vm1761, 0.0
        %4413 = vst.msk [vmem:[%s4344 + $0x178] sm:$0xff] %vm1761, 0.0
        %4414 = vst.msk [vmem:[%s4344 + $0x198] sm:$0xff] %vm1761, 0.0
        %4415 = vst.msk [vmem:[%s4344 + $0x1b8] sm:$0xff] %vm1761, 0.0
        %4416 = vst.msk [vmem:[%s4344 + $0x1d8] sm:$0xff] %vm1761, 0.0
        %4417 = vst.msk [vmem:[%s4344 + $0x1f8] sm:$0xff] %vm1761, 0.0
        %p4418 = scmp.lt.s32.totalorder %s24, 1
        %s4419 = scalar_select %p4418, %s24, 1
        %s4420 = smul.addr %s4419, 72
        %s4421 = smul.addr %s4420, 8
        %s4422 = scalar_lea.vmem %s4, %s4421
        %s4423 = sand.u32 %s147, 1
        %s4424 = scalar_lea.sflag [#allocation3], %s4423
        %s4425 = sand.u32 %s147, 1
        %s4426 = scalar_lea.vmem [#allocation2], %s4425
        %s4427 = sand.u32 %s173, 1
        %s4428 = scalar_lea.sflag [#allocation5], %s4427
        %s4429 = sand.u32 %s173, 1
        %s4430 = scalar_lea.vmem [#allocation4], %s4429
        // Predicated region
        $region37: #{tpu_custom_call.1} parent=35 // pred_check
          %p4431 = pneg %p131
        $region38: #{tpu_custom_call.1} parent=35 // pred_check_branch
          %4433 = sbr.rel (%p4431) target = $region40
        $region39: #{tpu_custom_call.1} parent=35 // pred_region
          _
        $region40: #{tpu_custom_call.1} parent=35 // pred_fallthru
          _
        // Predicated region
        $region41: #{tpu_custom_call.1} parent=35 // pred_check
          %p4434 = pneg %p157
        $region42: #{tpu_custom_call.1} parent=35 // pred_check_branch
          %4436 = sbr.rel (%p4434) target = $region44
        $region43: #{tpu_custom_call.1} parent=35 // pred_region
          %s4438 = ssub.s32 16, 16
          %4439 = vsyncadd %s4424, %s4438
          %s4440 = smul.addr %s24, 16
          %s4441 = scalar_lea.hbm %s5, %s4440
          %s4443 = sshll.u32 %s4426, 4
          %s4444 = int_to_ptr.vmem [resolvable:$true] %s4443
          %4446 = dma.vmem_to_hbm [thread:$0]  %s4444, 16, %s4441, %s4424
        $region44: #{tpu_custom_call.1} parent=35 // pred_fallthru
          _
        // Predicated region
        $region45: #{tpu_custom_call.1} parent=35 // pred_check
          %p4447 = pneg %p183
        $region46: #{tpu_custom_call.1} parent=35 // pred_check_branch
          %4449 = sbr.rel (%p4447) target = $region48
        $region47: #{tpu_custom_call.1} parent=35 // pred_region
          %s4451 = ssub.s32 16, 16
          %4452 = vsyncadd %s4428, %s4451
          %s4453 = smul.addr %s24, 16
          %s4454 = scalar_lea.hbm %s6, %s4453
          %s4456 = sshll.u32 %s4430, 4
          %s4457 = int_to_ptr.vmem [resolvable:$true] %s4456
          %4459 = dma.vmem_to_hbm [thread:$0]  %s4457, 16, %s4454, %s4428
        $region48: #{tpu_custom_call.1} parent=35 // pred_fallthru
          _
      $region36: #{tpu_custom_call.1} parent=5 // pred_fallthru
        _
      %p4460 = scmp.le.s32.totalorder 2, %s19
      // Predicated region
      $region49: #{tpu_custom_call.1} parent=5 // pred_check
        %p4461 = pneg %p4460
      $region50: #{tpu_custom_call.1} parent=5 // pred_check_branch
        %4463 = sbr.rel (%p4461) target = $region52
      $region51: #{tpu_custom_call.1} parent=5 // pred_region
        %s4464 = ssub.s32 %s19, 2
        // Predicated region
        $region53: #{tpu_custom_call.1} parent=51 // pred_check
          %p4465 = pneg %p137
        $region54: #{tpu_custom_call.1} parent=51 // pred_check_branch
          %4467 = sbr.rel (%p4465) target = $region56
        $region55: #{tpu_custom_call.1} parent=51 // pred_region
          %p4468 = scmp.lt.s32.totalorder %s25, 1
          %s4469 = scalar_select %p4468, %s25, 1
          %s4470 = smul.addr %s4469, 72
          %s4471 = smul.addr %s4470, 8
          %s4472 = scalar_lea.vmem %s4, %s4471
        $region56: #{tpu_custom_call.1} parent=51 // pred_fallthru
          _
        // Predicated region
        $region57: #{tpu_custom_call.1} parent=51 // pred_check
          %p4473 = pneg %p163
        $region58: #{tpu_custom_call.1} parent=51 // pred_check_branch
          %4475 = sbr.rel (%p4473) target = $region60
        $region59: #{tpu_custom_call.1} parent=51 // pred_region
          %s4476 = sand.u32 %s148, 1
          %s4477 = scalar_lea.sflag [#allocation3], %s4476
          %s4478 = sand.u32 %s148, 1
          %s4479 = scalar_lea.vmem [#allocation2], %s4478
          %4480 = dma.done %s4477, 16
        $region60: #{tpu_custom_call.1} parent=51 // pred_fallthru
          _
        // Predicated region
        $region61: #{tpu_custom_call.1} parent=51 // pred_check
          %p4481 = pneg %p189
        $region62: #{tpu_custom_call.1} parent=51 // pred_check_branch
          %4483 = sbr.rel (%p4481) target = $region64
        $region63: #{tpu_custom_call.1} parent=51 // pred_region
          %s4484 = sand.u32 %s174, 1
          %s4485 = scalar_lea.sflag [#allocation5], %s4484
          %s4486 = sand.u32 %s174, 1
          %s4487 = scalar_lea.vmem [#allocation4], %s4486
          %4488 = dma.done %s4485, 16
        $region64: #{tpu_custom_call.1} parent=51 // pred_fallthru
          _
      $region52: #{tpu_custom_call.1} parent=5 // pred_fallthru
        _
    $region6: #{tpu_custom_call.1} parent=1 // loop_footer
      %s23 = sadd.s32 1, %s19
    $region7: #{tpu_custom_call.1} parent=1 // loop_footer_branch
      %18 = sbr.rel target = $region3
    $region8: #{tpu_custom_call.1} parent=1 // loop_exit
      _
    %4489 = vsyncpa [#allocation3], 1
    %s4490 = scalar_lea.sflag [#allocation3], 1
    %4491 = vsyncpa %s4490, 1
    %4492 = vsyncpa [#allocation5], 1
    %s4493 = scalar_lea.sflag [#allocation5], 1
    %4494 = vsyncpa %s4493, 1

</llo_original>
